<compile_context>
chip_gen: v5e
topology: v5e:2x2
jax: 0.10.0
libtpu: 0.0.40
codegen_flags: <defaults>
</compile_context>

<pallas_src>
import functools

import jax
import jax.numpy as jnp
from jax.experimental import pallas as pl
from jax.experimental.pallas import tpu as pltpu

LANE = 128
SUBLANE = 8
_VMEM_BUDGET = 12 * 1024 * 1024  # conservative: under every chip's scoped default


def _round_up(a, m):
    return (a + m - 1) // m * m


# ----------------------------------------------------------------------------
# Recurrent LSTM kernel over one (batch block, time chunk).
#   x_ref:    (tile_t, block_b, I)   raw inputs (time-major), matmul dtype
#   w_ih_ref: (I, 4*Hp)              input weights, gate order (i, f, o | g)
#   b_ref:    (1, 4*Hp)              combined bias (f32)
#   w_hh_ref: (Hp, 4*Hp)             recurrent weights, same gate order
#   out_h:    (block_b, tile_t*Hp)   lane-dense slab of hidden states
#   h_scr/c_scr: (block_b, Hp)       f32 carries, persist across time chunks
# ----------------------------------------------------------------------------
def _lstm_recurrence_kernel(x_ref, w_ih_ref, b_ref, w_hh_ref, out_h_ref,
                            h_scr, c_scr, *, hp, tile_t, n_split):
    c_idx = pl.program_id(1)          # serial time-chunk axis

    @pl.when(c_idx == 0)
    def _():                          # fresh h0 = c0 = 0 per batch block
        h_scr[...] = jnp.zeros_like(h_scr)
        c_scr[...] = jnp.zeros_like(c_scr)

    w_ih = w_ih_ref[...]              # (I, 4Hp)   matmul dtype
    w_hh = w_hh_ref[...]              # (Hp, 4Hp)  matmul dtype
    tb = h_scr.shape[0]
    sub = tb // n_split
    bias = jnp.broadcast_to(b_ref[...], (sub, 4 * hp))   # hoisted once

    # Two (or one) independent batch sub-chains -> MXU/EUP overlap.
    h = [h_scr[p * sub:(p + 1) * sub, :] for p in range(n_split)]
    c = [c_scr[p * sub:(p + 1) * sub, :] for p in range(n_split)]

    for s in range(tile_t):           # fully unrolled; all indices static
        for p in range(n_split):
            r0, r1 = p * sub, (p + 1) * sub
            # Fused input projection (no gx materialized in HBM).
            gx = jnp.dot(x_ref[s, r0:r1, :], w_ih,
                         preferred_element_type=jnp.float32)
            gr = jnp.dot(h[p].astype(w_hh.dtype), w_hh,
                         preferred_element_type=jnp.float32)
            gates = gx + bias + gr                         # (sub, 4Hp) f32
            # One wide sigmoid over (i, f, o); tanh over g.  Lane-aligned slices.
            sig = 1.0 / (1.0 + jnp.exp(-gates[:, :3 * hp]))
            i_g = sig[:, 0 * hp:1 * hp]
            f_g = sig[:, 1 * hp:2 * hp]
            o_g = sig[:, 2 * hp:3 * hp]
            g_g = jnp.tanh(gates[:, 3 * hp:])
            c[p] = f_g * c[p] + i_g * g_g                  # f32 (v5e-safe)
            h[p] = o_g * jnp.tanh(c[p])
            out_h_ref[r0:r1, s * hp:(s + 1) * hp] = h[p].astype(out_h_ref.dtype)

    for p in range(n_split):
        r0, r1 = p * sub, (p + 1) * sub
        h_scr[r0:r1, :] = h[p]
        c_scr[r0:r1, :] = c[p]


# ----------------------------------------------------------------------------
# Row-tiled dense (x @ W + b) kernel for the deferred Linear head.
# ----------------------------------------------------------------------------
def _dense_bias_kernel(x_ref, w_ref, b_ref, o_ref):
    o_ref[...] = (jnp.dot(x_ref[...], w_ref[...],
                          preferred_element_type=jnp.float32)
                  + b_ref[...]).astype(o_ref.dtype)


def _dense(x2d, w, b, *, block_rows=512, matmul_dtype=jnp.float32):
    R, K = x2d.shape
    N = w.shape[1]
    block_rows = min(block_rows, _round_up(R, SUBLANE))
    R_pad = _round_up(R, block_rows)
    if R_pad != R:
        x2d = jnp.pad(x2d, ((0, R_pad - R), (0, 0)))
    out = pl.pallas_call(
        _dense_bias_kernel,
        out_shape=jax.ShapeDtypeStruct((R_pad, N), jnp.float32),
        grid_spec=pltpu.PrefetchScalarGridSpec(
            num_scalar_prefetch=0,
            grid=(R_pad // block_rows,),
            in_specs=[
                pl.BlockSpec((block_rows, K), lambda r: (r, 0)),
                pl.BlockSpec((K, N), lambda r: (0, 0)),
                pl.BlockSpec((1, N), lambda r: (0, 0)),
            ],
            out_specs=pl.BlockSpec((block_rows, N), lambda r: (r, 0)),
        ),
        compiler_params=pltpu.CompilerParams(dimension_semantics=("parallel",)),
    )(x2d.astype(matmul_dtype), w.astype(matmul_dtype), b)
    return out[:R]


# ----------------------------------------------------------------------------
# Wrapper
# ----------------------------------------------------------------------------
def clstm_linear_forward(x, params, *, many_to_one=False, tile_t=16,
                         block_b=None, matmul_dtype=jnp.bfloat16):
    """Forward of cLSTMLinear.  x: (B, T, I) float32.  Returns (out, out_h)."""
    B, T, I = x.shape
    w_ih, w_hh, b = params["w_ih"], params["w_hh"], params["b"]
    w_out, b_out = params["w_out"], params["b_out"]
    H = w_hh.shape[0]
    O = w_out.shape[1]
    Hp = _round_up(H, LANE)          # lane-aligned hidden size
    Op = _round_up(O, LANE)          # lane-aligned head output

    # Gate reorder (i, f, g, o) -> (i, f, o, g) with per-gate zero pad H -> Hp.
    # Padded hidden columns stay exactly 0: bias 0 => i=f=o=0.5, g=0 => c=h=0.
    def regroup(w):
        gs = [w[..., k * H:(k + 1) * H] for k in range(4)]   # i, f, g, o
        gs = [gs[0], gs[1], gs[3], gs[2]]                     # i, f, o, g
        pad = [(0, 0)] * (w.ndim - 1) + [(0, Hp - H)]
        return jnp.concatenate([jnp.pad(g, pad) for g in gs], axis=-1)

    w_ih_r = regroup(w_ih).astype(matmul_dtype)                       # (I, 4Hp)
    w_hh_r = jnp.pad(regroup(w_hh),
                     ((0, Hp - H), (0, 0))).astype(matmul_dtype)      # (Hp, 4Hp)
    b_r = regroup(b).astype(jnp.float32)                              # (1, 4Hp)
    w_out_p = jnp.pad(w_out, ((0, Hp - H), (0, Op - O)))              # (Hp, Op)
    b_out_p = jnp.pad(b_out, ((0, 0), (0, Op - O)))                   # (1, Op)

    # --- block-size selection -------------------------------------------------
    B_ru = _round_up(B, SUBLANE)
    if block_b is None:
        block_b = min(256, B_ru)                      # fill MXU rows
        if B_ru >= 256:                               # >=2 blocks for v7x 2 TCs
            block_b = min(block_b, _round_up((B_ru + 1) // 2, SUBLANE))
    block_b = min(max(SUBLANE, _round_up(block_b, SUBLANE)), B_ru)

    if tile_t >= T:
        tile_t = T
    else:
        tile_t = max(SUBLANE, (tile_t // SUBLANE) * SUBLANE)

    # Crude VMEM budget so default scoped limits hold on v5e/v6e/v7x.
    mdt_sz = jnp.dtype(matmul_dtype).itemsize

    def vmem_bytes(bb, tt):
        return (2 * bb * tt * (I * mdt_sz + Hp * 4)                 # x chunk + out slab
                + 2 * ((I + Hp) * 4 * Hp * mdt_sz + 4 * Hp * 4)     # weights + bias
                + 2 * bb * Hp * 4)                                  # h/c carries

    while vmem_bytes(block_b, tile_t) > _VMEM_BUDGET and tile_t > SUBLANE:
        tile_t = max(SUBLANE, (tile_t // 2 // SUBLANE) * SUBLANE)
    while vmem_bytes(block_b, tile_t) > _VMEM_BUDGET and block_b > SUBLANE:
        block_b = max(SUBLANE, (block_b // 2 // SUBLANE) * SUBLANE)

    B_pad = _round_up(B, block_b)
    T_pad = _round_up(T, tile_t)

    xp = x
    if (B_pad, T_pad) != (B, T):
        xp = jnp.pad(xp, ((0, B_pad - B), (0, T_pad - T), (0, 0)))
    xp = jnp.transpose(xp, (1, 0, 2)).astype(matmul_dtype)   # (T_pad, B_pad, I)

    n_b = B_pad // block_b
    n_c = T_pad // tile_t
    n_split = 2 if (block_b % 16 == 0) else 1

    out_h_flat = pl.pallas_call(
        functools.partial(_lstm_recurrence_kernel,
                          hp=Hp, tile_t=tile_t, n_split=n_split),
        out_shape=jax.ShapeDtypeStruct((B_pad, T_pad * Hp), jnp.float32),
        grid_spec=pltpu.PrefetchScalarGridSpec(
            num_scalar_prefetch=0,
            grid=(n_b, n_c),
            in_specs=[
                pl.BlockSpec((tile_t, block_b, I), lambda bi, c: (c, bi, 0)),
                pl.BlockSpec((I, 4 * Hp), lambda bi, c: (0, 0)),
                pl.BlockSpec((1, 4 * Hp), lambda bi, c: (0, 0)),
                pl.BlockSpec((Hp, 4 * Hp), lambda bi, c: (0, 0)),
            ],
            out_specs=pl.BlockSpec((block_b, tile_t * Hp),
                                   lambda bi, c: (bi, c)),     # lane-dense slab
            scratch_shapes=[
                pltpu.VMEM((block_b, Hp), jnp.float32),        # h carry
                pltpu.VMEM((block_b, Hp), jnp.float32),        # c carry
            ],
        ),
        compiler_params=pltpu.CompilerParams(
            dimension_semantics=("parallel", "arbitrary")),
    )(xp, w_ih_r, b_r, w_hh_r)

    out_h = out_h_flat.reshape(B_pad, T_pad, Hp)[:B, :T, :H]

    # Deferred Linear head (lane-padded output; only the real last step for
    # many_to_one — note index T-1, not T_pad-1).
    if many_to_one:
        last_h = out_h_flat.reshape(B_pad, T_pad, Hp)[:, T - 1, :]   # (B_pad, Hp)
        out = _dense(last_h, w_out_p, b_out_p, matmul_dtype=matmul_dtype)
        out = out[:B, :O].reshape(B, 1, O)
    else:
        rows = out_h_flat.reshape(B_pad * T_pad, Hp)
        out = _dense(rows, w_out_p, b_out_p, matmul_dtype=matmul_dtype)
        out = out.reshape(B_pad, T_pad, Op)[:B, :T, :O]
    return out, out_h


# ----------------------------------------------------------------------------
# Parameters (PyTorch nn.LSTM / nn.Linear shapes, stored transposed) & reference
# ----------------------------------------------------------------------------
def init_params(key, input_size, hidden_size, output_size):
    k = jax.random.split(key, 6)
    s = 1.0 / jnp.sqrt(hidden_size)
    u = lambda kk, shape: jax.random.uniform(kk, shape, minval=-s, maxval=s,
                                             dtype=jnp.float32)
    return {
        "w_ih": u(k[0], (input_size, 4 * hidden_size)),
        "w_hh": u(k[1], (hidden_size, 4 * hidden_size)),
        "b": (u(k[2], (4 * hidden_size,))
              + u(k[3], (4 * hidden_size,))).reshape(1, 4 * hidden_size),
        "w_out": u(k[4], (hidden_size, output_size)),
        "b_out": u(k[5], (output_size,)).reshape(1, output_size),
    }


def reference_forward(x, params):
    """Pure-JAX reference (PyTorch gate order (i,f,g,o), lax.scan over time)."""
    w_ih, w_hh, b = params["w_ih"], params["w_hh"], params["b"]
    w_out, b_out = params["w_out"], params["b_out"]
    B = x.shape[0]
    H = w_hh.shape[0]
    dot = functools.partial(jnp.dot, precision=jax.lax.Precision.HIGHEST)

    def step(carry, x_t):
        h, c = carry
        gates = (dot(x_t, w_ih) + b) + dot(h, w_hh)
        i = jax.nn.sigmoid(gates[:, 0 * H:1 * H])
        f = jax.nn.sigmoid(gates[:, 1 * H:2 * H])
        g = jnp.tanh(gates[:, 2 * H:3 * H])
        o = jax.nn.sigmoid(gates[:, 3 * H:4 * H])
        c = f * c + i * g
        h = o * jnp.tanh(c)
        return (h, c), h

    h0 = jnp.zeros((B, H), jnp.float32)
    c0 = jnp.zeros((B, H), jnp.float32)
    _, hs = jax.lax.scan(step, (h0, c0), jnp.swapaxes(x, 0, 1))   # (T, B, H)
    out_h = jnp.swapaxes(hs, 0, 1)                                # (B, T, H)
    out = dot(out_h, w_out) + b_out
    return out, out_h


if __name__ == "__main__":
    # Small shapes consistent with the module (batch_first LSTM -> Linear).
    B, T, I, H, O = 8, 16, 4, 32, 4

    key = jax.random.PRNGKey(0)
    kx, kp = jax.random.split(key)
    x = jax.random.normal(kx, (B, T, I), dtype=jnp.float32)
    params = init_params(kp, I, H, O)

    ref_out, ref_out_h = reference_forward(x, params)

    # f32 matmul path: tight check against the f32 reference.
    out32, out_h32 = clstm_linear_forward(x, params, matmul_dtype=jnp.float32)
    out32 = jax.block_until_ready(out32)
    out_h32 = jax.block_until_ready(out_h32)
    assert out32.shape == (B, T, O) and out_h32.shape == (B, T, H)
    assert jnp.allclose(out_h32, ref_out_h, atol=2e-3, rtol=2e-3)
    assert jnp.allclose(out32, ref_out, atol=2e-3, rtol=2e-3)

    # Default bf16-matmul path (f32 accumulation): looser tolerance.
    out, out_h = clstm_linear_forward(x, params)
    out = jax.block_until_ready(out)
    out_h = jax.block_until_ready(out_h)
    assert out.shape == (B, T, O) and out_h.shape == (B, T, H)
    assert jnp.allclose(out_h, ref_out_h, atol=5e-2, rtol=5e-2)
    assert jnp.allclose(out, ref_out, atol=5e-2, rtol=5e-2)

    # many_to_one path: Linear head only on the (real) last timestep.
    out_last, _ = clstm_linear_forward(x, params, many_to_one=True)
    out_last = jax.block_until_ready(out_last)
    assert out_last.shape == (B, 1, O)
    assert jnp.allclose(out_last, ref_out[:, -1:, :], atol=5e-2, rtol=5e-2)

    print("KERNEL_OK")
</pallas_src>

<mosaic_0001>
module attributes {stable_mosaic.version = 11 : i64} {
  func.func @_lstm_recurrence_kernel(%arg0: i32, %arg1: i32, %arg2: memref<16x8x4xf32, #tpu.memory_space<vmem>>, %arg3: memref<4x512xf32, #tpu.memory_space<vmem>>, %arg4: memref<1x512xf32, #tpu.memory_space<vmem>>, %arg5: memref<128x512xf32, #tpu.memory_space<vmem>>, %arg6: memref<8x2048xf32, #tpu.memory_space<vmem>>, %arg7: memref<8x128xf32, #tpu.memory_space<vmem>>, %arg8: memref<8x128xf32, #tpu.memory_space<vmem>>) attributes {dimension_semantics = [#tpu.dimension_semantics<parallel>, #tpu.dimension_semantics<arbitrary>], iteration_bounds = array<i64: 1, 1>, scalar_prefetch = 0 : i64, scratch_operands = 2 : i64, tpu.core_type = #tpu.core_type<tc>, window_params = [{transform_indices = @transform_0, window_bounds = array<i64: 16, 8, 4>}, {pipeline_mode = #tpu.pipeline_mode<synchronous>, transform_indices = @transform_1, window_bounds = array<i64: 4, 512>}, {pipeline_mode = #tpu.pipeline_mode<synchronous>, transform_indices = @transform_2, window_bounds = array<i64: 1, 512>}, {pipeline_mode = #tpu.pipeline_mode<synchronous>, transform_indices = @transform_3, window_bounds = array<i64: 128, 512>}, {transform_indices = @transform_4, window_bounds = array<i64: 8, 2048>}]} {
    %c0_i32 = arith.constant 0 : i32
    %0 = arith.cmpi eq, %arg1, %c0_i32 : i32
    %1 = arith.extui %0 : i1 to i32
    %c0_i32_0 = arith.constant 0 : i32
    %2 = arith.cmpi ne, %1, %c0_i32_0 : i32
    scf.if %2 {
      %cst_143 = arith.constant 0.000000e+00 : f32
      %412 = vector.broadcast %cst_143 : f32 to vector<8x128xf32>
      %c0_144 = arith.constant 0 : index
      %c0_145 = arith.constant 0 : index
      %413 = vector.load %arg7[%c0_144, %c0_145] : memref<8x128xf32, #tpu.memory_space<vmem>>, vector<8x128xf32>
      tpu.vector_store %arg7[%c0_144, %c0_145], %412 {strides = array<i32>} : memref<8x128xf32, #tpu.memory_space<vmem>>, vector<8x128xf32>,
      %cst_146 = arith.constant 0.000000e+00 : f32
      %414 = vector.broadcast %cst_146 : f32 to vector<8x128xf32>
      %c0_147 = arith.constant 0 : index
      %c0_148 = arith.constant 0 : index
      %415 = vector.load %arg8[%c0_147, %c0_148] : memref<8x128xf32, #tpu.memory_space<vmem>>, vector<8x128xf32>
      tpu.vector_store %arg8[%c0_147, %c0_148], %414 {strides = array<i32>} : memref<8x128xf32, #tpu.memory_space<vmem>>, vector<8x128xf32>,
    } else {
    }
    %c0 = arith.constant 0 : index
    %c0_1 = arith.constant 0 : index
    %3 = vector.load %arg3[%c0, %c0_1] : memref<4x512xf32, #tpu.memory_space<vmem>>, vector<4x512xf32>
    %c0_2 = arith.constant 0 : index
    %c0_3 = arith.constant 0 : index
    %4 = vector.load %arg5[%c0_2, %c0_3] : memref<128x512xf32, #tpu.memory_space<vmem>>, vector<128x512xf32>
    %c0_4 = arith.constant 0 : index
    %c0_5 = arith.constant 0 : index
    %5 = vector.load %arg4[%c0_4, %c0_5] : memref<1x512xf32, #tpu.memory_space<vmem>>, vector<1x512xf32>
    %6 = vector.shape_cast %5 : vector<1x512xf32> to vector<1x512xf32>
    %7 = vector.broadcast %6 : vector<1x512xf32> to vector<8x512xf32>
    %c0_6 = arith.constant 0 : index
    %c0_7 = arith.constant 0 : index
    %8 = vector.load %arg7[%c0_6, %c0_7] : memref<8x128xf32, #tpu.memory_space<vmem>>, vector<8x128xf32>
    %c0_8 = arith.constant 0 : index
    %c0_9 = arith.constant 0 : index
    %9 = vector.load %arg8[%c0_8, %c0_9] : memref<8x128xf32, #tpu.memory_space<vmem>>, vector<8x128xf32>
    %c0_10 = arith.constant 0 : index
    %c0_11 = arith.constant 0 : index
    %c0_12 = arith.constant 0 : index
    %10 = vector.load %arg2[%c0_10, %c0_11, %c0_12] : memref<16x8x4xf32, #tpu.memory_space<vmem>>, vector<1x8x4xf32>
    %11 = vector.shape_cast %10 : vector<1x8x4xf32> to vector<8x4xf32>
    %cst = arith.constant dense<0.000000e+00> : vector<8x512xf32>
    %12 = tpu.matmul %11, %3, %cst {dimension_numbers = #tpu.dot_dimension_numbers<[1], [0], [0], [1], [0, 0, 1, 1], [], []>} : vector<8x4xf32>, vector<4x512xf32>, vector<8x512xf32> -> vector<8x512xf32>
    %cst_13 = arith.constant dense<0.000000e+00> : vector<8x512xf32>
    %13 = tpu.matmul %8, %4, %cst_13 {dimension_numbers = #tpu.dot_dimension_numbers<[1], [0], [0], [1], [0, 0, 1, 1], [], []>} : vector<8x128xf32>, vector<128x512xf32>, vector<8x512xf32> -> vector<8x512xf32>
    %14 = arith.addf %12, %7 : vector<8x512xf32>
    %15 = arith.addf %14, %13 : vector<8x512xf32>
    %16 = vector.extract_strided_slice %15 {offsets = [0, 0], sizes = [8, 384], strides = [1, 1]} : vector<8x512xf32> to vector<8x384xf32>
    %cst_14 = arith.constant 0.000000e+00 : f32
    %17 = vector.broadcast %cst_14 : f32 to vector<8x384xf32>
    %18 = arith.subf %17, %16 : vector<8x384xf32>
    %19 = math.exp %18 : vector<8x384xf32>
    %cst_15 = arith.constant 1.000000e+00 : f32
    %20 = vector.broadcast %cst_15 : f32 to vector<8x384xf32>
    %21 = arith.addf %20, %19 : vector<8x384xf32>
    %cst_16 = arith.constant 1.000000e+00 : f32
    %22 = vector.broadcast %cst_16 : f32 to vector<8x384xf32>
    %23 = arith.divf %22, %21 : vector<8x384xf32>
    %24 = vector.extract_strided_slice %23 {offsets = [0, 0], sizes = [8, 128], strides = [1, 1]} : vector<8x384xf32> to vector<8x128xf32>
    %25 = vector.extract_strided_slice %23 {offsets = [0, 128], sizes = [8, 128], strides = [1, 1]} : vector<8x384xf32> to vector<8x128xf32>
    %26 = vector.extract_strided_slice %23 {offsets = [0, 256], sizes = [8, 128], strides = [1, 1]} : vector<8x384xf32> to vector<8x128xf32>
    %27 = vector.extract_strided_slice %15 {offsets = [0, 384], sizes = [8, 128], strides = [1, 1]} : vector<8x512xf32> to vector<8x128xf32>
    %28 = math.tanh %27 : vector<8x128xf32>
    %29 = arith.mulf %25, %9 : vector<8x128xf32>
    %30 = arith.mulf %24, %28 : vector<8x128xf32>
    %31 = arith.addf %29, %30 : vector<8x128xf32>
    %32 = math.tanh %31 : vector<8x128xf32>
    %33 = arith.mulf %26, %32 : vector<8x128xf32>
    %c0_17 = arith.constant 0 : index
    %c0_18 = arith.constant 0 : index
    %34 = vector.load %arg6[%c0_17, %c0_18] : memref<8x2048xf32, #tpu.memory_space<vmem>>, vector<8x128xf32>
    tpu.vector_store %arg6[%c0_17, %c0_18], %33 {strides = array<i32>} : memref<8x2048xf32, #tpu.memory_space<vmem>>, vector<8x128xf32>,
    %c1 = arith.constant 1 : index
    %c0_19 = arith.constant 0 : index
    %c0_20 = arith.constant 0 : index
    %35 = vector.load %arg2[%c1, %c0_19, %c0_20] : memref<16x8x4xf32, #tpu.memory_space<vmem>>, vector<1x8x4xf32>
    %36 = vector.shape_cast %35 : vector<1x8x4xf32> to vector<8x4xf32>
    %cst_21 = arith.constant dense<0.000000e+00> : vector<8x512xf32>
    %37 = tpu.matmul %36, %3, %cst_21 {dimension_numbers = #tpu.dot_dimension_numbers<[1], [0], [0], [1], [0, 0, 1, 1], [], []>} : vector<8x4xf32>, vector<4x512xf32>, vector<8x512xf32> -> vector<8x512xf32>
    %cst_22 = arith.constant dense<0.000000e+00> : vector<8x512xf32>
    %38 = tpu.matmul %33, %4, %cst_22 {dimension_numbers = #tpu.dot_dimension_numbers<[1], [0], [0], [1], [0, 0, 1, 1], [], []>} : vector<8x128xf32>, vector<128x512xf32>, vector<8x512xf32> -> vector<8x512xf32>
    %39 = arith.addf %37, %7 : vector<8x512xf32>
    %40 = arith.addf %39, %38 : vector<8x512xf32>
    %41 = vector.extract_strided_slice %40 {offsets = [0, 0], sizes = [8, 384], strides = [1, 1]} : vector<8x512xf32> to vector<8x384xf32>
    %cst_23 = arith.constant 0.000000e+00 : f32
    %42 = vector.broadcast %cst_23 : f32 to vector<8x384xf32>
    %43 = arith.subf %42, %41 : vector<8x384xf32>
    %44 = math.exp %43 : vector<8x384xf32>
    %cst_24 = arith.constant 1.000000e+00 : f32
    %45 = vector.broadcast %cst_24 : f32 to vector<8x384xf32>
    %46 = arith.addf %45, %44 : vector<8x384xf32>
    %cst_25 = arith.constant 1.000000e+00 : f32
    %47 = vector.broadcast %cst_25 : f32 to vector<8x384xf32>
    %48 = arith.divf %47, %46 : vector<8x384xf32>
    %49 = vector.extract_strided_slice %48 {offsets = [0, 0], sizes = [8, 128], strides = [1, 1]} : vector<8x384xf32> to vector<8x128xf32>
    %50 = vector.extract_strided_slice %48 {offsets = [0, 128], sizes = [8, 128], strides = [1, 1]} : vector<8x384xf32> to vector<8x128xf32>
    %51 = vector.extract_strided_slice %48 {offsets = [0, 256], sizes = [8, 128], strides = [1, 1]} : vector<8x384xf32> to vector<8x128xf32>
    %52 = vector.extract_strided_slice %40 {offsets = [0, 384], sizes = [8, 128], strides = [1, 1]} : vector<8x512xf32> to vector<8x128xf32>
    %53 = math.tanh %52 : vector<8x128xf32>
    %54 = arith.mulf %50, %31 : vector<8x128xf32>
    %55 = arith.mulf %49, %53 : vector<8x128xf32>
    %56 = arith.addf %54, %55 : vector<8x128xf32>
    %57 = math.tanh %56 : vector<8x128xf32>
    %58 = arith.mulf %51, %57 : vector<8x128xf32>
    %c0_26 = arith.constant 0 : index
    %c128 = arith.constant 128 : index
    %59 = vector.load %arg6[%c0_26, %c128] : memref<8x2048xf32, #tpu.memory_space<vmem>>, vector<8x128xf32>
    tpu.vector_store %arg6[%c0_26, %c128], %58 {strides = array<i32>} : memref<8x2048xf32, #tpu.memory_space<vmem>>, vector<8x128xf32>,
    %c2 = arith.constant 2 : index
    %c0_27 = arith.constant 0 : index
    %c0_28 = arith.constant 0 : index
    %60 = vector.load %arg2[%c2, %c0_27, %c0_28] : memref<16x8x4xf32, #tpu.memory_space<vmem>>, vector<1x8x4xf32>
    %61 = vector.shape_cast %60 : vector<1x8x4xf32> to vector<8x4xf32>
    %cst_29 = arith.constant dense<0.000000e+00> : vector<8x512xf32>
    %62 = tpu.matmul %61, %3, %cst_29 {dimension_numbers = #tpu.dot_dimension_numbers<[1], [0], [0], [1], [0, 0, 1, 1], [], []>} : vector<8x4xf32>, vector<4x512xf32>, vector<8x512xf32> -> vector<8x512xf32>
    %cst_30 = arith.constant dense<0.000000e+00> : vector<8x512xf32>
    %63 = tpu.matmul %58, %4, %cst_30 {dimension_numbers = #tpu.dot_dimension_numbers<[1], [0], [0], [1], [0, 0, 1, 1], [], []>} : vector<8x128xf32>, vector<128x512xf32>, vector<8x512xf32> -> vector<8x512xf32>
    %64 = arith.addf %62, %7 : vector<8x512xf32>
    %65 = arith.addf %64, %63 : vector<8x512xf32>
    %66 = vector.extract_strided_slice %65 {offsets = [0, 0], sizes = [8, 384], strides = [1, 1]} : vector<8x512xf32> to vector<8x384xf32>
    %cst_31 = arith.constant 0.000000e+00 : f32
    %67 = vector.broadcast %cst_31 : f32 to vector<8x384xf32>
    %68 = arith.subf %67, %66 : vector<8x384xf32>
    %69 = math.exp %68 : vector<8x384xf32>
    %cst_32 = arith.constant 1.000000e+00 : f32
    %70 = vector.broadcast %cst_32 : f32 to vector<8x384xf32>
    %71 = arith.addf %70, %69 : vector<8x384xf32>
    %cst_33 = arith.constant 1.000000e+00 : f32
    %72 = vector.broadcast %cst_33 : f32 to vector<8x384xf32>
    %73 = arith.divf %72, %71 : vector<8x384xf32>
    %74 = vector.extract_strided_slice %73 {offsets = [0, 0], sizes = [8, 128], strides = [1, 1]} : vector<8x384xf32> to vector<8x128xf32>
    %75 = vector.extract_strided_slice %73 {offsets = [0, 128], sizes = [8, 128], strides = [1, 1]} : vector<8x384xf32> to vector<8x128xf32>
    %76 = vector.extract_strided_slice %73 {offsets = [0, 256], sizes = [8, 128], strides = [1, 1]} : vector<8x384xf32> to vector<8x128xf32>
    %77 = vector.extract_strided_slice %65 {offsets = [0, 384], sizes = [8, 128], strides = [1, 1]} : vector<8x512xf32> to vector<8x128xf32>
    %78 = math.tanh %77 : vector<8x128xf32>
    %79 = arith.mulf %75, %56 : vector<8x128xf32>
    %80 = arith.mulf %74, %78 : vector<8x128xf32>
    %81 = arith.addf %79, %80 : vector<8x128xf32>
    %82 = math.tanh %81 : vector<8x128xf32>
    %83 = arith.mulf %76, %82 : vector<8x128xf32>
    %c0_34 = arith.constant 0 : index
    %c256 = arith.constant 256 : index
    %84 = vector.load %arg6[%c0_34, %c256] : memref<8x2048xf32, #tpu.memory_space<vmem>>, vector<8x128xf32>
    tpu.vector_store %arg6[%c0_34, %c256], %83 {strides = array<i32>} : memref<8x2048xf32, #tpu.memory_space<vmem>>, vector<8x128xf32>,
    %c3 = arith.constant 3 : index
    %c0_35 = arith.constant 0 : index
    %c0_36 = arith.constant 0 : index
    %85 = vector.load %arg2[%c3, %c0_35, %c0_36] : memref<16x8x4xf32, #tpu.memory_space<vmem>>, vector<1x8x4xf32>
    %86 = vector.shape_cast %85 : vector<1x8x4xf32> to vector<8x4xf32>
    %cst_37 = arith.constant dense<0.000000e+00> : vector<8x512xf32>
    %87 = tpu.matmul %86, %3, %cst_37 {dimension_numbers = #tpu.dot_dimension_numbers<[1], [0], [0], [1], [0, 0, 1, 1], [], []>} : vector<8x4xf32>, vector<4x512xf32>, vector<8x512xf32> -> vector<8x512xf32>
    %cst_38 = arith.constant dense<0.000000e+00> : vector<8x512xf32>
    %88 = tpu.matmul %83, %4, %cst_38 {dimension_numbers = #tpu.dot_dimension_numbers<[1], [0], [0], [1], [0, 0, 1, 1], [], []>} : vector<8x128xf32>, vector<128x512xf32>, vector<8x512xf32> -> vector<8x512xf32>
    %89 = arith.addf %87, %7 : vector<8x512xf32>
    %90 = arith.addf %89, %88 : vector<8x512xf32>
    %91 = vector.extract_strided_slice %90 {offsets = [0, 0], sizes = [8, 384], strides = [1, 1]} : vector<8x512xf32> to vector<8x384xf32>
    %cst_39 = arith.constant 0.000000e+00 : f32
    %92 = vector.broadcast %cst_39 : f32 to vector<8x384xf32>
    %93 = arith.subf %92, %91 : vector<8x384xf32>
    %94 = math.exp %93 : vector<8x384xf32>
    %cst_40 = arith.constant 1.000000e+00 : f32
    %95 = vector.broadcast %cst_40 : f32 to vector<8x384xf32>
    %96 = arith.addf %95, %94 : vector<8x384xf32>
    %cst_41 = arith.constant 1.000000e+00 : f32
    %97 = vector.broadcast %cst_41 : f32 to vector<8x384xf32>
    %98 = arith.divf %97, %96 : vector<8x384xf32>
    %99 = vector.extract_strided_slice %98 {offsets = [0, 0], sizes = [8, 128], strides = [1, 1]} : vector<8x384xf32> to vector<8x128xf32>
    %100 = vector.extract_strided_slice %98 {offsets = [0, 128], sizes = [8, 128], strides = [1, 1]} : vector<8x384xf32> to vector<8x128xf32>
    %101 = vector.extract_strided_slice %98 {offsets = [0, 256], sizes = [8, 128], strides = [1, 1]} : vector<8x384xf32> to vector<8x128xf32>
    %102 = vector.extract_strided_slice %90 {offsets = [0, 384], sizes = [8, 128], strides = [1, 1]} : vector<8x512xf32> to vector<8x128xf32>
    %103 = math.tanh %102 : vector<8x128xf32>
    %104 = arith.mulf %100, %81 : vector<8x128xf32>
    %105 = arith.mulf %99, %103 : vector<8x128xf32>
    %106 = arith.addf %104, %105 : vector<8x128xf32>
    %107 = math.tanh %106 : vector<8x128xf32>
    %108 = arith.mulf %101, %107 : vector<8x128xf32>
    %c0_42 = arith.constant 0 : index
    %c384 = arith.constant 384 : index
    %109 = vector.load %arg6[%c0_42, %c384] : memref<8x2048xf32, #tpu.memory_space<vmem>>, vector<8x128xf32>
    tpu.vector_store %arg6[%c0_42, %c384], %108 {strides = array<i32>} : memref<8x2048xf32, #tpu.memory_space<vmem>>, vector<8x128xf32>,
    %c4 = arith.constant 4 : index
    %c0_43 = arith.constant 0 : index
    %c0_44 = arith.constant 0 : index
    %110 = vector.load %arg2[%c4, %c0_43, %c0_44] : memref<16x8x4xf32, #tpu.memory_space<vmem>>, vector<1x8x4xf32>
    %111 = vector.shape_cast %110 : vector<1x8x4xf32> to vector<8x4xf32>
    %cst_45 = arith.constant dense<0.000000e+00> : vector<8x512xf32>
    %112 = tpu.matmul %111, %3, %cst_45 {dimension_numbers = #tpu.dot_dimension_numbers<[1], [0], [0], [1], [0, 0, 1, 1], [], []>} : vector<8x4xf32>, vector<4x512xf32>, vector<8x512xf32> -> vector<8x512xf32>
    %cst_46 = arith.constant dense<0.000000e+00> : vector<8x512xf32>
    %113 = tpu.matmul %108, %4, %cst_46 {dimension_numbers = #tpu.dot_dimension_numbers<[1], [0], [0], [1], [0, 0, 1, 1], [], []>} : vector<8x128xf32>, vector<128x512xf32>, vector<8x512xf32> -> vector<8x512xf32>
    %114 = arith.addf %112, %7 : vector<8x512xf32>
    %115 = arith.addf %114, %113 : vector<8x512xf32>
    %116 = vector.extract_strided_slice %115 {offsets = [0, 0], sizes = [8, 384], strides = [1, 1]} : vector<8x512xf32> to vector<8x384xf32>
    %cst_47 = arith.constant 0.000000e+00 : f32
    %117 = vector.broadcast %cst_47 : f32 to vector<8x384xf32>
    %118 = arith.subf %117, %116 : vector<8x384xf32>
    %119 = math.exp %118 : vector<8x384xf32>
    %cst_48 = arith.constant 1.000000e+00 : f32
    %120 = vector.broadcast %cst_48 : f32 to vector<8x384xf32>
    %121 = arith.addf %120, %119 : vector<8x384xf32>
    %cst_49 = arith.constant 1.000000e+00 : f32
    %122 = vector.broadcast %cst_49 : f32 to vector<8x384xf32>
    %123 = arith.divf %122, %121 : vector<8x384xf32>
    %124 = vector.extract_strided_slice %123 {offsets = [0, 0], sizes = [8, 128], strides = [1, 1]} : vector<8x384xf32> to vector<8x128xf32>
    %125 = vector.extract_strided_slice %123 {offsets = [0, 128], sizes = [8, 128], strides = [1, 1]} : vector<8x384xf32> to vector<8x128xf32>
    %126 = vector.extract_strided_slice %123 {offsets = [0, 256], sizes = [8, 128], strides = [1, 1]} : vector<8x384xf32> to vector<8x128xf32>
    %127 = vector.extract_strided_slice %115 {offsets = [0, 384], sizes = [8, 128], strides = [1, 1]} : vector<8x512xf32> to vector<8x128xf32>
    %128 = math.tanh %127 : vector<8x128xf32>
    %129 = arith.mulf %125, %106 : vector<8x128xf32>
    %130 = arith.mulf %124, %128 : vector<8x128xf32>
    %131 = arith.addf %129, %130 : vector<8x128xf32>
    %132 = math.tanh %131 : vector<8x128xf32>
    %133 = arith.mulf %126, %132 : vector<8x128xf32>
    %c0_50 = arith.constant 0 : index
    %c512 = arith.constant 512 : index
    %134 = vector.load %arg6[%c0_50, %c512] : memref<8x2048xf32, #tpu.memory_space<vmem>>, vector<8x128xf32>
    tpu.vector_store %arg6[%c0_50, %c512], %133 {strides = array<i32>} : memref<8x2048xf32, #tpu.memory_space<vmem>>, vector<8x128xf32>,
    %c5 = arith.constant 5 : index
    %c0_51 = arith.constant 0 : index
    %c0_52 = arith.constant 0 : index
    %135 = vector.load %arg2[%c5, %c0_51, %c0_52] : memref<16x8x4xf32, #tpu.memory_space<vmem>>, vector<1x8x4xf32>
    %136 = vector.shape_cast %135 : vector<1x8x4xf32> to vector<8x4xf32>
    %cst_53 = arith.constant dense<0.000000e+00> : vector<8x512xf32>
    %137 = tpu.matmul %136, %3, %cst_53 {dimension_numbers = #tpu.dot_dimension_numbers<[1], [0], [0], [1], [0, 0, 1, 1], [], []>} : vector<8x4xf32>, vector<4x512xf32>, vector<8x512xf32> -> vector<8x512xf32>
    %cst_54 = arith.constant dense<0.000000e+00> : vector<8x512xf32>
    %138 = tpu.matmul %133, %4, %cst_54 {dimension_numbers = #tpu.dot_dimension_numbers<[1], [0], [0], [1], [0, 0, 1, 1], [], []>} : vector<8x128xf32>, vector<128x512xf32>, vector<8x512xf32> -> vector<8x512xf32>
    %139 = arith.addf %137, %7 : vector<8x512xf32>
    %140 = arith.addf %139, %138 : vector<8x512xf32>
    %141 = vector.extract_strided_slice %140 {offsets = [0, 0], sizes = [8, 384], strides = [1, 1]} : vector<8x512xf32> to vector<8x384xf32>
    %cst_55 = arith.constant 0.000000e+00 : f32
    %142 = vector.broadcast %cst_55 : f32 to vector<8x384xf32>
    %143 = arith.subf %142, %141 : vector<8x384xf32>
    %144 = math.exp %143 : vector<8x384xf32>
    %cst_56 = arith.constant 1.000000e+00 : f32
    %145 = vector.broadcast %cst_56 : f32 to vector<8x384xf32>
    %146 = arith.addf %145, %144 : vector<8x384xf32>
    %cst_57 = arith.constant 1.000000e+00 : f32
    %147 = vector.broadcast %cst_57 : f32 to vector<8x384xf32>
    %148 = arith.divf %147, %146 : vector<8x384xf32>
    %149 = vector.extract_strided_slice %148 {offsets = [0, 0], sizes = [8, 128], strides = [1, 1]} : vector<8x384xf32> to vector<8x128xf32>
    %150 = vector.extract_strided_slice %148 {offsets = [0, 128], sizes = [8, 128], strides = [1, 1]} : vector<8x384xf32> to vector<8x128xf32>
    %151 = vector.extract_strided_slice %148 {offsets = [0, 256], sizes = [8, 128], strides = [1, 1]} : vector<8x384xf32> to vector<8x128xf32>
    %152 = vector.extract_strided_slice %140 {offsets = [0, 384], sizes = [8, 128], strides = [1, 1]} : vector<8x512xf32> to vector<8x128xf32>
    %153 = math.tanh %152 : vector<8x128xf32>
    %154 = arith.mulf %150, %131 : vector<8x128xf32>
    %155 = arith.mulf %149, %153 : vector<8x128xf32>
    %156 = arith.addf %154, %155 : vector<8x128xf32>
    %157 = math.tanh %156 : vector<8x128xf32>
    %158 = arith.mulf %151, %157 : vector<8x128xf32>
    %c0_58 = arith.constant 0 : index
    %c640 = arith.constant 640 : index
    %159 = vector.load %arg6[%c0_58, %c640] : memref<8x2048xf32, #tpu.memory_space<vmem>>, vector<8x128xf32>
    tpu.vector_store %arg6[%c0_58, %c640], %158 {strides = array<i32>} : memref<8x2048xf32, #tpu.memory_space<vmem>>, vector<8x128xf32>,
    %c6 = arith.constant 6 : index
    %c0_59 = arith.constant 0 : index
    %c0_60 = arith.constant 0 : index
    %160 = vector.load %arg2[%c6, %c0_59, %c0_60] : memref<16x8x4xf32, #tpu.memory_space<vmem>>, vector<1x8x4xf32>
    %161 = vector.shape_cast %160 : vector<1x8x4xf32> to vector<8x4xf32>
    %cst_61 = arith.constant dense<0.000000e+00> : vector<8x512xf32>
    %162 = tpu.matmul %161, %3, %cst_61 {dimension_numbers = #tpu.dot_dimension_numbers<[1], [0], [0], [1], [0, 0, 1, 1], [], []>} : vector<8x4xf32>, vector<4x512xf32>, vector<8x512xf32> -> vector<8x512xf32>
    %cst_62 = arith.constant dense<0.000000e+00> : vector<8x512xf32>
    %163 = tpu.matmul %158, %4, %cst_62 {dimension_numbers = #tpu.dot_dimension_numbers<[1], [0], [0], [1], [0, 0, 1, 1], [], []>} : vector<8x128xf32>, vector<128x512xf32>, vector<8x512xf32> -> vector<8x512xf32>
    %164 = arith.addf %162, %7 : vector<8x512xf32>
    %165 = arith.addf %164, %163 : vector<8x512xf32>
    %166 = vector.extract_strided_slice %165 {offsets = [0, 0], sizes = [8, 384], strides = [1, 1]} : vector<8x512xf32> to vector<8x384xf32>
    %cst_63 = arith.constant 0.000000e+00 : f32
    %167 = vector.broadcast %cst_63 : f32 to vector<8x384xf32>
    %168 = arith.subf %167, %166 : vector<8x384xf32>
    %169 = math.exp %168 : vector<8x384xf32>
    %cst_64 = arith.constant 1.000000e+00 : f32
    %170 = vector.broadcast %cst_64 : f32 to vector<8x384xf32>
    %171 = arith.addf %170, %169 : vector<8x384xf32>
    %cst_65 = arith.constant 1.000000e+00 : f32
    %172 = vector.broadcast %cst_65 : f32 to vector<8x384xf32>
    %173 = arith.divf %172, %171 : vector<8x384xf32>
    %174 = vector.extract_strided_slice %173 {offsets = [0, 0], sizes = [8, 128], strides = [1, 1]} : vector<8x384xf32> to vector<8x128xf32>
    %175 = vector.extract_strided_slice %173 {offsets = [0, 128], sizes = [8, 128], strides = [1, 1]} : vector<8x384xf32> to vector<8x128xf32>
    %176 = vector.extract_strided_slice %173 {offsets = [0, 256], sizes = [8, 128], strides = [1, 1]} : vector<8x384xf32> to vector<8x128xf32>
    %177 = vector.extract_strided_slice %165 {offsets = [0, 384], sizes = [8, 128], strides = [1, 1]} : vector<8x512xf32> to vector<8x128xf32>
    %178 = math.tanh %177 : vector<8x128xf32>
    %179 = arith.mulf %175, %156 : vector<8x128xf32>
    %180 = arith.mulf %174, %178 : vector<8x128xf32>
    %181 = arith.addf %179, %180 : vector<8x128xf32>
    %182 = math.tanh %181 : vector<8x128xf32>
    %183 = arith.mulf %176, %182 : vector<8x128xf32>
    %c0_66 = arith.constant 0 : index
    %c768 = arith.constant 768 : index
    %184 = vector.load %arg6[%c0_66, %c768] : memref<8x2048xf32, #tpu.memory_space<vmem>>, vector<8x128xf32>
    tpu.vector_store %arg6[%c0_66, %c768], %183 {strides = array<i32>} : memref<8x2048xf32, #tpu.memory_space<vmem>>, vector<8x128xf32>,
    %c7 = arith.constant 7 : index
    %c0_67 = arith.constant 0 : index
    %c0_68 = arith.constant 0 : index
    %185 = vector.load %arg2[%c7, %c0_67, %c0_68] : memref<16x8x4xf32, #tpu.memory_space<vmem>>, vector<1x8x4xf32>
    %186 = vector.shape_cast %185 : vector<1x8x4xf32> to vector<8x4xf32>
    %cst_69 = arith.constant dense<0.000000e+00> : vector<8x512xf32>
    %187 = tpu.matmul %186, %3, %cst_69 {dimension_numbers = #tpu.dot_dimension_numbers<[1], [0], [0], [1], [0, 0, 1, 1], [], []>} : vector<8x4xf32>, vector<4x512xf32>, vector<8x512xf32> -> vector<8x512xf32>
    %cst_70 = arith.constant dense<0.000000e+00> : vector<8x512xf32>
    %188 = tpu.matmul %183, %4, %cst_70 {dimension_numbers = #tpu.dot_dimension_numbers<[1], [0], [0], [1], [0, 0, 1, 1], [], []>} : vector<8x128xf32>, vector<128x512xf32>, vector<8x512xf32> -> vector<8x512xf32>
    %189 = arith.addf %187, %7 : vector<8x512xf32>
    %190 = arith.addf %189, %188 : vector<8x512xf32>
    %191 = vector.extract_strided_slice %190 {offsets = [0, 0], sizes = [8, 384], strides = [1, 1]} : vector<8x512xf32> to vector<8x384xf32>
    %cst_71 = arith.constant 0.000000e+00 : f32
    %192 = vector.broadcast %cst_71 : f32 to vector<8x384xf32>
    %193 = arith.subf %192, %191 : vector<8x384xf32>
    %194 = math.exp %193 : vector<8x384xf32>
    %cst_72 = arith.constant 1.000000e+00 : f32
    %195 = vector.broadcast %cst_72 : f32 to vector<8x384xf32>
    %196 = arith.addf %195, %194 : vector<8x384xf32>
    %cst_73 = arith.constant 1.000000e+00 : f32
    %197 = vector.broadcast %cst_73 : f32 to vector<8x384xf32>
    %198 = arith.divf %197, %196 : vector<8x384xf32>
    %199 = vector.extract_strided_slice %198 {offsets = [0, 0], sizes = [8, 128], strides = [1, 1]} : vector<8x384xf32> to vector<8x128xf32>
    %200 = vector.extract_strided_slice %198 {offsets = [0, 128], sizes = [8, 128], strides = [1, 1]} : vector<8x384xf32> to vector<8x128xf32>
    %201 = vector.extract_strided_slice %198 {offsets = [0, 256], sizes = [8, 128], strides = [1, 1]} : vector<8x384xf32> to vector<8x128xf32>
    %202 = vector.extract_strided_slice %190 {offsets = [0, 384], sizes = [8, 128], strides = [1, 1]} : vector<8x512xf32> to vector<8x128xf32>
    %203 = math.tanh %202 : vector<8x128xf32>
    %204 = arith.mulf %200, %181 : vector<8x128xf32>
    %205 = arith.mulf %199, %203 : vector<8x128xf32>
    %206 = arith.addf %204, %205 : vector<8x128xf32>
    %207 = math.tanh %206 : vector<8x128xf32>
    %208 = arith.mulf %201, %207 : vector<8x128xf32>
    %c0_74 = arith.constant 0 : index
    %c896 = arith.constant 896 : index
    %209 = vector.load %arg6[%c0_74, %c896] : memref<8x2048xf32, #tpu.memory_space<vmem>>, vector<8x128xf32>
    tpu.vector_store %arg6[%c0_74, %c896], %208 {strides = array<i32>} : memref<8x2048xf32, #tpu.memory_space<vmem>>, vector<8x128xf32>,
    %c8 = arith.constant 8 : index
    %c0_75 = arith.constant 0 : index
    %c0_76 = arith.constant 0 : index
    %210 = vector.load %arg2[%c8, %c0_75, %c0_76] : memref<16x8x4xf32, #tpu.memory_space<vmem>>, vector<1x8x4xf32>
    %211 = vector.shape_cast %210 : vector<1x8x4xf32> to vector<8x4xf32>
    %cst_77 = arith.constant dense<0.000000e+00> : vector<8x512xf32>
    %212 = tpu.matmul %211, %3, %cst_77 {dimension_numbers = #tpu.dot_dimension_numbers<[1], [0], [0], [1], [0, 0, 1, 1], [], []>} : vector<8x4xf32>, vector<4x512xf32>, vector<8x512xf32> -> vector<8x512xf32>
    %cst_78 = arith.constant dense<0.000000e+00> : vector<8x512xf32>
    %213 = tpu.matmul %208, %4, %cst_78 {dimension_numbers = #tpu.dot_dimension_numbers<[1], [0], [0], [1], [0, 0, 1, 1], [], []>} : vector<8x128xf32>, vector<128x512xf32>, vector<8x512xf32> -> vector<8x512xf32>
    %214 = arith.addf %212, %7 : vector<8x512xf32>
    %215 = arith.addf %214, %213 : vector<8x512xf32>
    %216 = vector.extract_strided_slice %215 {offsets = [0, 0], sizes = [8, 384], strides = [1, 1]} : vector<8x512xf32> to vector<8x384xf32>
    %cst_79 = arith.constant 0.000000e+00 : f32
    %217 = vector.broadcast %cst_79 : f32 to vector<8x384xf32>
    %218 = arith.subf %217, %216 : vector<8x384xf32>
    %219 = math.exp %218 : vector<8x384xf32>
    %cst_80 = arith.constant 1.000000e+00 : f32
    %220 = vector.broadcast %cst_80 : f32 to vector<8x384xf32>
    %221 = arith.addf %220, %219 : vector<8x384xf32>
    %cst_81 = arith.constant 1.000000e+00 : f32
    %222 = vector.broadcast %cst_81 : f32 to vector<8x384xf32>
    %223 = arith.divf %222, %221 : vector<8x384xf32>
    %224 = vector.extract_strided_slice %223 {offsets = [0, 0], sizes = [8, 128], strides = [1, 1]} : vector<8x384xf32> to vector<8x128xf32>
    %225 = vector.extract_strided_slice %223 {offsets = [0, 128], sizes = [8, 128], strides = [1, 1]} : vector<8x384xf32> to vector<8x128xf32>
    %226 = vector.extract_strided_slice %223 {offsets = [0, 256], sizes = [8, 128], strides = [1, 1]} : vector<8x384xf32> to vector<8x128xf32>
    %227 = vector.extract_strided_slice %215 {offsets = [0, 384], sizes = [8, 128], strides = [1, 1]} : vector<8x512xf32> to vector<8x128xf32>
    %228 = math.tanh %227 : vector<8x128xf32>
    %229 = arith.mulf %225, %206 : vector<8x128xf32>
    %230 = arith.mulf %224, %228 : vector<8x128xf32>
    %231 = arith.addf %229, %230 : vector<8x128xf32>
    %232 = math.tanh %231 : vector<8x128xf32>
    %233 = arith.mulf %226, %232 : vector<8x128xf32>
    %c0_82 = arith.constant 0 : index
    %c1024 = arith.constant 1024 : index
    %234 = vector.load %arg6[%c0_82, %c1024] : memref<8x2048xf32, #tpu.memory_space<vmem>>, vector<8x128xf32>
    tpu.vector_store %arg6[%c0_82, %c1024], %233 {strides = array<i32>} : memref<8x2048xf32, #tpu.memory_space<vmem>>, vector<8x128xf32>,
    %c9 = arith.constant 9 : index
    %c0_83 = arith.constant 0 : index
    %c0_84 = arith.constant 0 : index
    %235 = vector.load %arg2[%c9, %c0_83, %c0_84] : memref<16x8x4xf32, #tpu.memory_space<vmem>>, vector<1x8x4xf32>
    %236 = vector.shape_cast %235 : vector<1x8x4xf32> to vector<8x4xf32>
    %cst_85 = arith.constant dense<0.000000e+00> : vector<8x512xf32>
    %237 = tpu.matmul %236, %3, %cst_85 {dimension_numbers = #tpu.dot_dimension_numbers<[1], [0], [0], [1], [0, 0, 1, 1], [], []>} : vector<8x4xf32>, vector<4x512xf32>, vector<8x512xf32> -> vector<8x512xf32>
    %cst_86 = arith.constant dense<0.000000e+00> : vector<8x512xf32>
    %238 = tpu.matmul %233, %4, %cst_86 {dimension_numbers = #tpu.dot_dimension_numbers<[1], [0], [0], [1], [0, 0, 1, 1], [], []>} : vector<8x128xf32>, vector<128x512xf32>, vector<8x512xf32> -> vector<8x512xf32>
    %239 = arith.addf %237, %7 : vector<8x512xf32>
    %240 = arith.addf %239, %238 : vector<8x512xf32>
    %241 = vector.extract_strided_slice %240 {offsets = [0, 0], sizes = [8, 384], strides = [1, 1]} : vector<8x512xf32> to vector<8x384xf32>
    %cst_87 = arith.constant 0.000000e+00 : f32
    %242 = vector.broadcast %cst_87 : f32 to vector<8x384xf32>
    %243 = arith.subf %242, %241 : vector<8x384xf32>
    %244 = math.exp %243 : vector<8x384xf32>
    %cst_88 = arith.constant 1.000000e+00 : f32
    %245 = vector.broadcast %cst_88 : f32 to vector<8x384xf32>
    %246 = arith.addf %245, %244 : vector<8x384xf32>
    %cst_89 = arith.constant 1.000000e+00 : f32
    %247 = vector.broadcast %cst_89 : f32 to vector<8x384xf32>
    %248 = arith.divf %247, %246 : vector<8x384xf32>
    %249 = vector.extract_strided_slice %248 {offsets = [0, 0], sizes = [8, 128], strides = [1, 1]} : vector<8x384xf32> to vector<8x128xf32>
    %250 = vector.extract_strided_slice %248 {offsets = [0, 128], sizes = [8, 128], strides = [1, 1]} : vector<8x384xf32> to vector<8x128xf32>
    %251 = vector.extract_strided_slice %248 {offsets = [0, 256], sizes = [8, 128], strides = [1, 1]} : vector<8x384xf32> to vector<8x128xf32>
    %252 = vector.extract_strided_slice %240 {offsets = [0, 384], sizes = [8, 128], strides = [1, 1]} : vector<8x512xf32> to vector<8x128xf32>
    %253 = math.tanh %252 : vector<8x128xf32>
    %254 = arith.mulf %250, %231 : vector<8x128xf32>
    %255 = arith.mulf %249, %253 : vector<8x128xf32>
    %256 = arith.addf %254, %255 : vector<8x128xf32>
    %257 = math.tanh %256 : vector<8x128xf32>
    %258 = arith.mulf %251, %257 : vector<8x128xf32>
    %c0_90 = arith.constant 0 : index
    %c1152 = arith.constant 1152 : index
    %259 = vector.load %arg6[%c0_90, %c1152] : memref<8x2048xf32, #tpu.memory_space<vmem>>, vector<8x128xf32>
    tpu.vector_store %arg6[%c0_90, %c1152], %258 {strides = array<i32>} : memref<8x2048xf32, #tpu.memory_space<vmem>>, vector<8x128xf32>,
    %c10 = arith.constant 10 : index
    %c0_91 = arith.constant 0 : index
    %c0_92 = arith.constant 0 : index
    %260 = vector.load %arg2[%c10, %c0_91, %c0_92] : memref<16x8x4xf32, #tpu.memory_space<vmem>>, vector<1x8x4xf32>
    %261 = vector.shape_cast %260 : vector<1x8x4xf32> to vector<8x4xf32>
    %cst_93 = arith.constant dense<0.000000e+00> : vector<8x512xf32>
    %262 = tpu.matmul %261, %3, %cst_93 {dimension_numbers = #tpu.dot_dimension_numbers<[1], [0], [0], [1], [0, 0, 1, 1], [], []>} : vector<8x4xf32>, vector<4x512xf32>, vector<8x512xf32> -> vector<8x512xf32>
    %cst_94 = arith.constant dense<0.000000e+00> : vector<8x512xf32>
    %263 = tpu.matmul %258, %4, %cst_94 {dimension_numbers = #tpu.dot_dimension_numbers<[1], [0], [0], [1], [0, 0, 1, 1], [], []>} : vector<8x128xf32>, vector<128x512xf32>, vector<8x512xf32> -> vector<8x512xf32>
    %264 = arith.addf %262, %7 : vector<8x512xf32>
    %265 = arith.addf %264, %263 : vector<8x512xf32>
    %266 = vector.extract_strided_slice %265 {offsets = [0, 0], sizes = [8, 384], strides = [1, 1]} : vector<8x512xf32> to vector<8x384xf32>
    %cst_95 = arith.constant 0.000000e+00 : f32
    %267 = vector.broadcast %cst_95 : f32 to vector<8x384xf32>
    %268 = arith.subf %267, %266 : vector<8x384xf32>
    %269 = math.exp %268 : vector<8x384xf32>
    %cst_96 = arith.constant 1.000000e+00 : f32
    %270 = vector.broadcast %cst_96 : f32 to vector<8x384xf32>
    %271 = arith.addf %270, %269 : vector<8x384xf32>
    %cst_97 = arith.constant 1.000000e+00 : f32
    %272 = vector.broadcast %cst_97 : f32 to vector<8x384xf32>
    %273 = arith.divf %272, %271 : vector<8x384xf32>
    %274 = vector.extract_strided_slice %273 {offsets = [0, 0], sizes = [8, 128], strides = [1, 1]} : vector<8x384xf32> to vector<8x128xf32>
    %275 = vector.extract_strided_slice %273 {offsets = [0, 128], sizes = [8, 128], strides = [1, 1]} : vector<8x384xf32> to vector<8x128xf32>
    %276 = vector.extract_strided_slice %273 {offsets = [0, 256], sizes = [8, 128], strides = [1, 1]} : vector<8x384xf32> to vector<8x128xf32>
    %277 = vector.extract_strided_slice %265 {offsets = [0, 384], sizes = [8, 128], strides = [1, 1]} : vector<8x512xf32> to vector<8x128xf32>
    %278 = math.tanh %277 : vector<8x128xf32>
    %279 = arith.mulf %275, %256 : vector<8x128xf32>
    %280 = arith.mulf %274, %278 : vector<8x128xf32>
    %281 = arith.addf %279, %280 : vector<8x128xf32>
    %282 = math.tanh %281 : vector<8x128xf32>
    %283 = arith.mulf %276, %282 : vector<8x128xf32>
    %c0_98 = arith.constant 0 : index
    %c1280 = arith.constant 1280 : index
    %284 = vector.load %arg6[%c0_98, %c1280] : memref<8x2048xf32, #tpu.memory_space<vmem>>, vector<8x128xf32>
    tpu.vector_store %arg6[%c0_98, %c1280], %283 {strides = array<i32>} : memref<8x2048xf32, #tpu.memory_space<vmem>>, vector<8x128xf32>,
    %c11 = arith.constant 11 : index
    %c0_99 = arith.constant 0 : index
    %c0_100 = arith.constant 0 : index
    %285 = vector.load %arg2[%c11, %c0_99, %c0_100] : memref<16x8x4xf32, #tpu.memory_space<vmem>>, vector<1x8x4xf32>
    %286 = vector.shape_cast %285 : vector<1x8x4xf32> to vector<8x4xf32>
    %cst_101 = arith.constant dense<0.000000e+00> : vector<8x512xf32>
    %287 = tpu.matmul %286, %3, %cst_101 {dimension_numbers = #tpu.dot_dimension_numbers<[1], [0], [0], [1], [0, 0, 1, 1], [], []>} : vector<8x4xf32>, vector<4x512xf32>, vector<8x512xf32> -> vector<8x512xf32>
    %cst_102 = arith.constant dense<0.000000e+00> : vector<8x512xf32>
    %288 = tpu.matmul %283, %4, %cst_102 {dimension_numbers = #tpu.dot_dimension_numbers<[1], [0], [0], [1], [0, 0, 1, 1], [], []>} : vector<8x128xf32>, vector<128x512xf32>, vector<8x512xf32> -> vector<8x512xf32>
    %289 = arith.addf %287, %7 : vector<8x512xf32>
    %290 = arith.addf %289, %288 : vector<8x512xf32>
    %291 = vector.extract_strided_slice %290 {offsets = [0, 0], sizes = [8, 384], strides = [1, 1]} : vector<8x512xf32> to vector<8x384xf32>
    %cst_103 = arith.constant 0.000000e+00 : f32
    %292 = vector.broadcast %cst_103 : f32 to vector<8x384xf32>
    %293 = arith.subf %292, %291 : vector<8x384xf32>
    %294 = math.exp %293 : vector<8x384xf32>
    %cst_104 = arith.constant 1.000000e+00 : f32
    %295 = vector.broadcast %cst_104 : f32 to vector<8x384xf32>
    %296 = arith.addf %295, %294 : vector<8x384xf32>
    %cst_105 = arith.constant 1.000000e+00 : f32
    %297 = vector.broadcast %cst_105 : f32 to vector<8x384xf32>
    %298 = arith.divf %297, %296 : vector<8x384xf32>
    %299 = vector.extract_strided_slice %298 {offsets = [0, 0], sizes = [8, 128], strides = [1, 1]} : vector<8x384xf32> to vector<8x128xf32>
    %300 = vector.extract_strided_slice %298 {offsets = [0, 128], sizes = [8, 128], strides = [1, 1]} : vector<8x384xf32> to vector<8x128xf32>
    %301 = vector.extract_strided_slice %298 {offsets = [0, 256], sizes = [8, 128], strides = [1, 1]} : vector<8x384xf32> to vector<8x128xf32>
    %302 = vector.extract_strided_slice %290 {offsets = [0, 384], sizes = [8, 128], strides = [1, 1]} : vector<8x512xf32> to vector<8x128xf32>
    %303 = math.tanh %302 : vector<8x128xf32>
    %304 = arith.mulf %300, %281 : vector<8x128xf32>
    %305 = arith.mulf %299, %303 : vector<8x128xf32>
    %306 = arith.addf %304, %305 : vector<8x128xf32>
    %307 = math.tanh %306 : vector<8x128xf32>
    %308 = arith.mulf %301, %307 : vector<8x128xf32>
    %c0_106 = arith.constant 0 : index
    %c1408 = arith.constant 1408 : index
    %309 = vector.load %arg6[%c0_106, %c1408] : memref<8x2048xf32, #tpu.memory_space<vmem>>, vector<8x128xf32>
    tpu.vector_store %arg6[%c0_106, %c1408], %308 {strides = array<i32>} : memref<8x2048xf32, #tpu.memory_space<vmem>>, vector<8x128xf32>,
    %c12 = arith.constant 12 : index
    %c0_107 = arith.constant 0 : index
    %c0_108 = arith.constant 0 : index
    %310 = vector.load %arg2[%c12, %c0_107, %c0_108] : memref<16x8x4xf32, #tpu.memory_space<vmem>>, vector<1x8x4xf32>
    %311 = vector.shape_cast %310 : vector<1x8x4xf32> to vector<8x4xf32>
    %cst_109 = arith.constant dense<0.000000e+00> : vector<8x512xf32>
    %312 = tpu.matmul %311, %3, %cst_109 {dimension_numbers = #tpu.dot_dimension_numbers<[1], [0], [0], [1], [0, 0, 1, 1], [], []>} : vector<8x4xf32>, vector<4x512xf32>, vector<8x512xf32> -> vector<8x512xf32>
    %cst_110 = arith.constant dense<0.000000e+00> : vector<8x512xf32>
    %313 = tpu.matmul %308, %4, %cst_110 {dimension_numbers = #tpu.dot_dimension_numbers<[1], [0], [0], [1], [0, 0, 1, 1], [], []>} : vector<8x128xf32>, vector<128x512xf32>, vector<8x512xf32> -> vector<8x512xf32>
    %314 = arith.addf %312, %7 : vector<8x512xf32>
    %315 = arith.addf %314, %313 : vector<8x512xf32>
    %316 = vector.extract_strided_slice %315 {offsets = [0, 0], sizes = [8, 384], strides = [1, 1]} : vector<8x512xf32> to vector<8x384xf32>
    %cst_111 = arith.constant 0.000000e+00 : f32
    %317 = vector.broadcast %cst_111 : f32 to vector<8x384xf32>
    %318 = arith.subf %317, %316 : vector<8x384xf32>
    %319 = math.exp %318 : vector<8x384xf32>
    %cst_112 = arith.constant 1.000000e+00 : f32
    %320 = vector.broadcast %cst_112 : f32 to vector<8x384xf32>
    %321 = arith.addf %320, %319 : vector<8x384xf32>
    %cst_113 = arith.constant 1.000000e+00 : f32
    %322 = vector.broadcast %cst_113 : f32 to vector<8x384xf32>
    %323 = arith.divf %322, %321 : vector<8x384xf32>
    %324 = vector.extract_strided_slice %323 {offsets = [0, 0], sizes = [8, 128], strides = [1, 1]} : vector<8x384xf32> to vector<8x128xf32>
    %325 = vector.extract_strided_slice %323 {offsets = [0, 128], sizes = [8, 128], strides = [1, 1]} : vector<8x384xf32> to vector<8x128xf32>
    %326 = vector.extract_strided_slice %323 {offsets = [0, 256], sizes = [8, 128], strides = [1, 1]} : vector<8x384xf32> to vector<8x128xf32>
    %327 = vector.extract_strided_slice %315 {offsets = [0, 384], sizes = [8, 128], strides = [1, 1]} : vector<8x512xf32> to vector<8x128xf32>
    %328 = math.tanh %327 : vector<8x128xf32>
    %329 = arith.mulf %325, %306 : vector<8x128xf32>
    %330 = arith.mulf %324, %328 : vector<8x128xf32>
    %331 = arith.addf %329, %330 : vector<8x128xf32>
    %332 = math.tanh %331 : vector<8x128xf32>
    %333 = arith.mulf %326, %332 : vector<8x128xf32>
    %c0_114 = arith.constant 0 : index
    %c1536 = arith.constant 1536 : index
    %334 = vector.load %arg6[%c0_114, %c1536] : memref<8x2048xf32, #tpu.memory_space<vmem>>, vector<8x128xf32>
    tpu.vector_store %arg6[%c0_114, %c1536], %333 {strides = array<i32>} : memref<8x2048xf32, #tpu.memory_space<vmem>>, vector<8x128xf32>,
    %c13 = arith.constant 13 : index
    %c0_115 = arith.constant 0 : index
    %c0_116 = arith.constant 0 : index
    %335 = vector.load %arg2[%c13, %c0_115, %c0_116] : memref<16x8x4xf32, #tpu.memory_space<vmem>>, vector<1x8x4xf32>
    %336 = vector.shape_cast %335 : vector<1x8x4xf32> to vector<8x4xf32>
    %cst_117 = arith.constant dense<0.000000e+00> : vector<8x512xf32>
    %337 = tpu.matmul %336, %3, %cst_117 {dimension_numbers = #tpu.dot_dimension_numbers<[1], [0], [0], [1], [0, 0, 1, 1], [], []>} : vector<8x4xf32>, vector<4x512xf32>, vector<8x512xf32> -> vector<8x512xf32>
    %cst_118 = arith.constant dense<0.000000e+00> : vector<8x512xf32>
    %338 = tpu.matmul %333, %4, %cst_118 {dimension_numbers = #tpu.dot_dimension_numbers<[1], [0], [0], [1], [0, 0, 1, 1], [], []>} : vector<8x128xf32>, vector<128x512xf32>, vector<8x512xf32> -> vector<8x512xf32>
    %339 = arith.addf %337, %7 : vector<8x512xf32>
    %340 = arith.addf %339, %338 : vector<8x512xf32>
    %341 = vector.extract_strided_slice %340 {offsets = [0, 0], sizes = [8, 384], strides = [1, 1]} : vector<8x512xf32> to vector<8x384xf32>
    %cst_119 = arith.constant 0.000000e+00 : f32
    %342 = vector.broadcast %cst_119 : f32 to vector<8x384xf32>
    %343 = arith.subf %342, %341 : vector<8x384xf32>
    %344 = math.exp %343 : vector<8x384xf32>
    %cst_120 = arith.constant 1.000000e+00 : f32
    %345 = vector.broadcast %cst_120 : f32 to vector<8x384xf32>
    %346 = arith.addf %345, %344 : vector<8x384xf32>
    %cst_121 = arith.constant 1.000000e+00 : f32
    %347 = vector.broadcast %cst_121 : f32 to vector<8x384xf32>
    %348 = arith.divf %347, %346 : vector<8x384xf32>
    %349 = vector.extract_strided_slice %348 {offsets = [0, 0], sizes = [8, 128], strides = [1, 1]} : vector<8x384xf32> to vector<8x128xf32>
    %350 = vector.extract_strided_slice %348 {offsets = [0, 128], sizes = [8, 128], strides = [1, 1]} : vector<8x384xf32> to vector<8x128xf32>
    %351 = vector.extract_strided_slice %348 {offsets = [0, 256], sizes = [8, 128], strides = [1, 1]} : vector<8x384xf32> to vector<8x128xf32>
    %352 = vector.extract_strided_slice %340 {offsets = [0, 384], sizes = [8, 128], strides = [1, 1]} : vector<8x512xf32> to vector<8x128xf32>
    %353 = math.tanh %352 : vector<8x128xf32>
    %354 = arith.mulf %350, %331 : vector<8x128xf32>
    %355 = arith.mulf %349, %353 : vector<8x128xf32>
    %356 = arith.addf %354, %355 : vector<8x128xf32>
    %357 = math.tanh %356 : vector<8x128xf32>
    %358 = arith.mulf %351, %357 : vector<8x128xf32>
    %c0_122 = arith.constant 0 : index
    %c1664 = arith.constant 1664 : index
    %359 = vector.load %arg6[%c0_122, %c1664] : memref<8x2048xf32, #tpu.memory_space<vmem>>, vector<8x128xf32>
    tpu.vector_store %arg6[%c0_122, %c1664], %358 {strides = array<i32>} : memref<8x2048xf32, #tpu.memory_space<vmem>>, vector<8x128xf32>,
    %c14 = arith.constant 14 : index
    %c0_123 = arith.constant 0 : index
    %c0_124 = arith.constant 0 : index
    %360 = vector.load %arg2[%c14, %c0_123, %c0_124] : memref<16x8x4xf32, #tpu.memory_space<vmem>>, vector<1x8x4xf32>
    %361 = vector.shape_cast %360 : vector<1x8x4xf32> to vector<8x4xf32>
    %cst_125 = arith.constant dense<0.000000e+00> : vector<8x512xf32>
    %362 = tpu.matmul %361, %3, %cst_125 {dimension_numbers = #tpu.dot_dimension_numbers<[1], [0], [0], [1], [0, 0, 1, 1], [], []>} : vector<8x4xf32>, vector<4x512xf32>, vector<8x512xf32> -> vector<8x512xf32>
    %cst_126 = arith.constant dense<0.000000e+00> : vector<8x512xf32>
    %363 = tpu.matmul %358, %4, %cst_126 {dimension_numbers = #tpu.dot_dimension_numbers<[1], [0], [0], [1], [0, 0, 1, 1], [], []>} : vector<8x128xf32>, vector<128x512xf32>, vector<8x512xf32> -> vector<8x512xf32>
    %364 = arith.addf %362, %7 : vector<8x512xf32>
    %365 = arith.addf %364, %363 : vector<8x512xf32>
    %366 = vector.extract_strided_slice %365 {offsets = [0, 0], sizes = [8, 384], strides = [1, 1]} : vector<8x512xf32> to vector<8x384xf32>
    %cst_127 = arith.constant 0.000000e+00 : f32
    %367 = vector.broadcast %cst_127 : f32 to vector<8x384xf32>
    %368 = arith.subf %367, %366 : vector<8x384xf32>
    %369 = math.exp %368 : vector<8x384xf32>
    %cst_128 = arith.constant 1.000000e+00 : f32
    %370 = vector.broadcast %cst_128 : f32 to vector<8x384xf32>
    %371 = arith.addf %370, %369 : vector<8x384xf32>
    %cst_129 = arith.constant 1.000000e+00 : f32
    %372 = vector.broadcast %cst_129 : f32 to vector<8x384xf32>
    %373 = arith.divf %372, %371 : vector<8x384xf32>
    %374 = vector.extract_strided_slice %373 {offsets = [0, 0], sizes = [8, 128], strides = [1, 1]} : vector<8x384xf32> to vector<8x128xf32>
    %375 = vector.extract_strided_slice %373 {offsets = [0, 128], sizes = [8, 128], strides = [1, 1]} : vector<8x384xf32> to vector<8x128xf32>
    %376 = vector.extract_strided_slice %373 {offsets = [0, 256], sizes = [8, 128], strides = [1, 1]} : vector<8x384xf32> to vector<8x128xf32>
    %377 = vector.extract_strided_slice %365 {offsets = [0, 384], sizes = [8, 128], strides = [1, 1]} : vector<8x512xf32> to vector<8x128xf32>
    %378 = math.tanh %377 : vector<8x128xf32>
    %379 = arith.mulf %375, %356 : vector<8x128xf32>
    %380 = arith.mulf %374, %378 : vector<8x128xf32>
    %381 = arith.addf %379, %380 : vector<8x128xf32>
    %382 = math.tanh %381 : vector<8x128xf32>
    %383 = arith.mulf %376, %382 : vector<8x128xf32>
    %c0_130 = arith.constant 0 : index
    %c1792 = arith.constant 1792 : index
    %384 = vector.load %arg6[%c0_130, %c1792] : memref<8x2048xf32, #tpu.memory_space<vmem>>, vector<8x128xf32>
    tpu.vector_store %arg6[%c0_130, %c1792], %383 {strides = array<i32>} : memref<8x2048xf32, #tpu.memory_space<vmem>>, vector<8x128xf32>,
    %c15 = arith.constant 15 : index
    %c0_131 = arith.constant 0 : index
    %c0_132 = arith.constant 0 : index
    %385 = vector.load %arg2[%c15, %c0_131, %c0_132] : memref<16x8x4xf32, #tpu.memory_space<vmem>>, vector<1x8x4xf32>
    %386 = vector.shape_cast %385 : vector<1x8x4xf32> to vector<8x4xf32>
    %cst_133 = arith.constant dense<0.000000e+00> : vector<8x512xf32>
    %387 = tpu.matmul %386, %3, %cst_133 {dimension_numbers = #tpu.dot_dimension_numbers<[1], [0], [0], [1], [0, 0, 1, 1], [], []>} : vector<8x4xf32>, vector<4x512xf32>, vector<8x512xf32> -> vector<8x512xf32>
    %cst_134 = arith.constant dense<0.000000e+00> : vector<8x512xf32>
    %388 = tpu.matmul %383, %4, %cst_134 {dimension_numbers = #tpu.dot_dimension_numbers<[1], [0], [0], [1], [0, 0, 1, 1], [], []>} : vector<8x128xf32>, vector<128x512xf32>, vector<8x512xf32> -> vector<8x512xf32>
    %389 = arith.addf %387, %7 : vector<8x512xf32>
    %390 = arith.addf %389, %388 : vector<8x512xf32>
    %391 = vector.extract_strided_slice %390 {offsets = [0, 0], sizes = [8, 384], strides = [1, 1]} : vector<8x512xf32> to vector<8x384xf32>
    %cst_135 = arith.constant 0.000000e+00 : f32
    %392 = vector.broadcast %cst_135 : f32 to vector<8x384xf32>
    %393 = arith.subf %392, %391 : vector<8x384xf32>
    %394 = math.exp %393 : vector<8x384xf32>
    %cst_136 = arith.constant 1.000000e+00 : f32
    %395 = vector.broadcast %cst_136 : f32 to vector<8x384xf32>
    %396 = arith.addf %395, %394 : vector<8x384xf32>
    %cst_137 = arith.constant 1.000000e+00 : f32
    %397 = vector.broadcast %cst_137 : f32 to vector<8x384xf32>
    %398 = arith.divf %397, %396 : vector<8x384xf32>
    %399 = vector.extract_strided_slice %398 {offsets = [0, 0], sizes = [8, 128], strides = [1, 1]} : vector<8x384xf32> to vector<8x128xf32>
    %400 = vector.extract_strided_slice %398 {offsets = [0, 128], sizes = [8, 128], strides = [1, 1]} : vector<8x384xf32> to vector<8x128xf32>
    %401 = vector.extract_strided_slice %398 {offsets = [0, 256], sizes = [8, 128], strides = [1, 1]} : vector<8x384xf32> to vector<8x128xf32>
    %402 = vector.extract_strided_slice %390 {offsets = [0, 384], sizes = [8, 128], strides = [1, 1]} : vector<8x512xf32> to vector<8x128xf32>
    %403 = math.tanh %402 : vector<8x128xf32>
    %404 = arith.mulf %400, %381 : vector<8x128xf32>
    %405 = arith.mulf %399, %403 : vector<8x128xf32>
    %406 = arith.addf %404, %405 : vector<8x128xf32>
    %407 = math.tanh %406 : vector<8x128xf32>
    %408 = arith.mulf %401, %407 : vector<8x128xf32>
    %c0_138 = arith.constant 0 : index
    %c1920 = arith.constant 1920 : index
    %409 = vector.load %arg6[%c0_138, %c1920] : memref<8x2048xf32, #tpu.memory_space<vmem>>, vector<8x128xf32>
    tpu.vector_store %arg6[%c0_138, %c1920], %408 {strides = array<i32>} : memref<8x2048xf32, #tpu.memory_space<vmem>>, vector<8x128xf32>,
    %c0_139 = arith.constant 0 : index
    %c0_140 = arith.constant 0 : index
    %410 = vector.load %arg7[%c0_139, %c0_140] : memref<8x128xf32, #tpu.memory_space<vmem>>, vector<8x128xf32>
    tpu.vector_store %arg7[%c0_139, %c0_140], %408 {strides = array<i32>} : memref<8x128xf32, #tpu.memory_space<vmem>>, vector<8x128xf32>,
    %c0_141 = arith.constant 0 : index
    %c0_142 = arith.constant 0 : index
    %411 = vector.load %arg8[%c0_141, %c0_142] : memref<8x128xf32, #tpu.memory_space<vmem>>, vector<8x128xf32>
    tpu.vector_store %arg8[%c0_141, %c0_142], %406 {strides = array<i32>} : memref<8x128xf32, #tpu.memory_space<vmem>>, vector<8x128xf32>,
    return
  }
  func.func @transform_0(%arg0: i32, %arg1: i32) -> (i32, i32, i32) {
    %c0_i32 = arith.constant 0 : i32
    %c0_i32_0 = arith.constant 0 : i32
    return %arg1, %arg0, %c0_i32 : i32, i32, i32
  }
  func.func @transform_1(%arg0: i32, %arg1: i32) -> (i32, i32) {
    %c0_i32 = arith.constant 0 : i32
    %c0_i32_0 = arith.constant 0 : i32
    %c0_i32_1 = arith.constant 0 : i32
    return %c0_i32, %c0_i32_0 : i32, i32
  }
  func.func @transform_2(%arg0: i32, %arg1: i32) -> (i32, i32) {
    %c0_i32 = arith.constant 0 : i32
    %c0_i32_0 = arith.constant 0 : i32
    %c0_i32_1 = arith.constant 0 : i32
    return %c0_i32, %c0_i32_0 : i32, i32
  }
  func.func @transform_3(%arg0: i32, %arg1: i32) -> (i32, i32) {
    %c0_i32 = arith.constant 0 : i32
    %c0_i32_0 = arith.constant 0 : i32
    %c0_i32_1 = arith.constant 0 : i32
    return %c0_i32, %c0_i32_0 : i32, i32
  }
  func.func @transform_4(%arg0: i32, %arg1: i32) -> (i32, i32) {
    %c0_i32 = arith.constant 0 : i32
    return %arg0, %arg1 : i32, i32
  }
}

</mosaic_0001>

<llo_original>
// kernel: tpu_custom_call.1
$region0: #{tpu_custom_call.1}
  #allocation0 [shape = 'u32[]', space=smem, size = 0x4, offset = 0x4, fixed_abs, tag = 'smem constant byte address 0x4 - core index']
  #allocation1 [shape = 'u32[72,128]{1,0:T(1,128)}', space=vmem, size = 0x9000, scoped, tag = 'internal scratch']
  #allocation2 [shape = 'f32[8,128]{1,0:T(8,128)}', space=vmem, size = 0x1000, scoped, tag = 'scratch operand']
  #allocation3 [shape = 'f32[8,128]{1,0:T(8,128)}', space=vmem, size = 0x1000, scoped, tag = 'scratch operand']
  %s0 = inlined_call_operand.vmem [shape: f32[16,8,4], index: 0, kind: input, shape index: {}]
  %s1 = inlined_call_operand.vmem [shape: f32[4,512], index: 1, kind: input, shape index: {}]
  %s2 = inlined_call_operand.vmem [shape: f32[1,512], index: 2, kind: input, shape index: {}]
  %s3 = inlined_call_operand.hbm [shape: f32[128,512], index: 3, kind: input, shape index: {}]
  %s4 = inlined_call_operand.hbm [shape: f32[8,2048], index: 4, kind: output, shape index: {}]
  %s5 = sld [smem:[#allocation0]]
  $region34: #{tpu_custom_call.1} parent=0
    _
  %s7 = ssub.s32 1, %s5
  %s8 = scalar_select 0, %s7, %s5
  $region1: #{tpu_custom_call.1} parent=0
    #allocation4 [shape = 'u8[262144]{0}', space=vmem, size = 0x40000, scoped, tag = 'input window, operand 3, single buffered']
    #allocation5 [shape = 's32[1]{0}', space=sflag, size = 0x4, scoped, tag = 'scoped memory for tpu_custom_call.1']
    #allocation6 [shape = 's32[1]{0}', space=sflag, size = 0x4, scoped, tag = 'scoped memory for tpu_custom_call.1']
    #allocation7 [shape = 'u8[65536]{0}', space=vmem, size = 0x10000, scoped, tag = 'output window, operand 0, single buffered']
    %9 = vsyncpa [#allocation5], 0
    %10 = vsyncpa [#allocation6], 0
    // Predicated region
    $region2: #{tpu_custom_call.1} parent=1 // pred_check
      _
    $region3: #{tpu_custom_call.1} parent=1 // pred_check_branch
      %12 = sbr.rel (0) target = $region5
    $region4: #{tpu_custom_call.1} parent=1 // pred_region
      _
    $region5: #{tpu_custom_call.1} parent=1 // pred_fallthru
      _
    // Predicated region
    $region6: #{tpu_custom_call.1} parent=1 // pred_check
      _
    $region7: #{tpu_custom_call.1} parent=1 // pred_check_branch
      %14 = sbr.rel (0) target = $region9
    $region8: #{tpu_custom_call.1} parent=1 // pred_region
      _
    $region9: #{tpu_custom_call.1} parent=1 // pred_fallthru
      _
    // Predicated region
    $region10: #{tpu_custom_call.1} parent=1 // pred_check
      _
    $region11: #{tpu_custom_call.1} parent=1 // pred_check_branch
      %16 = sbr.rel (0) target = $region13
    $region12: #{tpu_custom_call.1} parent=1 // pred_region
      _
    $region13: #{tpu_custom_call.1} parent=1 // pred_fallthru
      _
    // Predicated region
    $region14: #{tpu_custom_call.1} parent=1 // pred_check
      _
    $region15: #{tpu_custom_call.1} parent=1 // pred_check_branch
      %18 = sbr.rel (0) target = $region17
    $region16: #{tpu_custom_call.1} parent=1 // pred_region
      %20 = vsyncadd [#allocation5], 0
      %s21 = sshll.u32 %s3, 4
      %s22 = int_to_ptr.hbm [resolvable:$true] %s21
      %s23 = sshll.u32 [#allocation4], 4
      %s24 = int_to_ptr.vmem [resolvable:$true] %s23
      %29 = dma.hbm_to_vmem [thread:$0]  %s22, 8192, %s24, [#allocation5], 512, 512, 32
    $region17: #{tpu_custom_call.1} parent=1 // pred_fallthru
      _
    // Predicated region
    $region18: #{tpu_custom_call.1} parent=1 // pred_check
      _
    $region19: #{tpu_custom_call.1} parent=1 // pred_check_branch
      %31 = sbr.rel (0) target = $region21
    $region20: #{tpu_custom_call.1} parent=1 // pred_region
      %33 = dma.done [#allocation5], 8192
    $region21: #{tpu_custom_call.1} parent=1 // pred_fallthru
      _
    %p34 = scmp.eq.s32.totalorder 0, 0
    // Predicated region
    $region22: #{tpu_custom_call.1} parent=1 // pred_check
      %p35 = pneg %p34
    $region23: #{tpu_custom_call.1} parent=1 // pred_check_branch
      %37 = sbr.rel (%p35) target = $region25
    $region24: #{tpu_custom_call.1} parent=1 // pred_region
      %38 = vst [vmem:[#allocation2] sm:$0xff] 0.0
      %39 = vst [vmem:[#allocation3] sm:$0xff] 0.0
    $region25: #{tpu_custom_call.1} parent=1 // pred_fallthru
      _
    %v40 = vld [vmem:[%s1] sm:$0xff]
    %v41 = vld [vmem:[%s1 + $0x8] sm:$0xff]
    %v42 = vld [vmem:[#allocation4] sm:$0xff]
    %v43 = vld [vmem:[#allocation4 + $0x8] sm:$0xff]
    %v44 = vld [vmem:[#allocation4 + $0x10] sm:$0xff]
    %v45 = vld [vmem:[#allocation4 + $0x18] sm:$0xff]
    %v46 = vld [vmem:[#allocation4 + $0x20] sm:$0xff]
    %v47 = vld [vmem:[#allocation4 + $0x28] sm:$0xff]
    %v48 = vld [vmem:[#allocation4 + $0x30] sm:$0xff]
    %v49 = vld [vmem:[#allocation4 + $0x38] sm:$0xff]
    %v50 = vld [vmem:[#allocation4 + $0x40] sm:$0xff]
    %v51 = vld [vmem:[#allocation4 + $0x48] sm:$0xff]
    %v52 = vld [vmem:[#allocation4 + $0x50] sm:$0xff]
    %v53 = vld [vmem:[#allocation4 + $0x58] sm:$0xff]
    %v54 = vld [vmem:[#allocation4 + $0x60] sm:$0xff]
    %v55 = vld [vmem:[#allocation4 + $0x68] sm:$0xff]
    %v56 = vld [vmem:[#allocation4 + $0x70] sm:$0xff]
    %v57 = vld [vmem:[#allocation4 + $0x78] sm:$0xff]
    %v58 = vld [vmem:[#allocation4 + $0x80] sm:$0xff]
    %v59 = vld [vmem:[#allocation4 + $0x88] sm:$0xff]
    %v60 = vld [vmem:[#allocation4 + $0x90] sm:$0xff]
    %v61 = vld [vmem:[#allocation4 + $0x98] sm:$0xff]
    %v62 = vld [vmem:[#allocation4 + $0xa0] sm:$0xff]
    %v63 = vld [vmem:[#allocation4 + $0xa8] sm:$0xff]
    %v64 = vld [vmem:[#allocation4 + $0xb0] sm:$0xff]
    %v65 = vld [vmem:[#allocation4 + $0xb8] sm:$0xff]
    %v66 = vld [vmem:[#allocation4 + $0xc0] sm:$0xff]
    %v67 = vld [vmem:[#allocation4 + $0xc8] sm:$0xff]
    %v68 = vld [vmem:[#allocation4 + $0xd0] sm:$0xff]
    %v69 = vld [vmem:[#allocation4 + $0xd8] sm:$0xff]
    %v70 = vld [vmem:[#allocation4 + $0xe0] sm:$0xff]
    %v71 = vld [vmem:[#allocation4 + $0xe8] sm:$0xff]
    %v72 = vld [vmem:[#allocation4 + $0xf0] sm:$0xff]
    %v73 = vld [vmem:[#allocation4 + $0xf8] sm:$0xff]
    %v74 = vld [vmem:[#allocation4 + $0x100] sm:$0xff]
    %v75 = vld [vmem:[#allocation4 + $0x108] sm:$0xff]
    %v76 = vld [vmem:[#allocation4 + $0x110] sm:$0xff]
    %v77 = vld [vmem:[#allocation4 + $0x118] sm:$0xff]
    %v78 = vld [vmem:[#allocation4 + $0x120] sm:$0xff]
    %v79 = vld [vmem:[#allocation4 + $0x128] sm:$0xff]
    %v80 = vld [vmem:[#allocation4 + $0x130] sm:$0xff]
    %v81 = vld [vmem:[#allocation4 + $0x138] sm:$0xff]
    %v82 = vld [vmem:[#allocation4 + $0x140] sm:$0xff]
    %v83 = vld [vmem:[#allocation4 + $0x148] sm:$0xff]
    %v84 = vld [vmem:[#allocation4 + $0x150] sm:$0xff]
    %v85 = vld [vmem:[#allocation4 + $0x158] sm:$0xff]
    %v86 = vld [vmem:[#allocation4 + $0x160] sm:$0xff]
    %v87 = vld [vmem:[#allocation4 + $0x168] sm:$0xff]
    %v88 = vld [vmem:[#allocation4 + $0x170] sm:$0xff]
    %v89 = vld [vmem:[#allocation4 + $0x178] sm:$0xff]
    %v90 = vld [vmem:[#allocation4 + $0x180] sm:$0xff]
    %v91 = vld [vmem:[#allocation4 + $0x188] sm:$0xff]
    %v92 = vld [vmem:[#allocation4 + $0x190] sm:$0xff]
    %v93 = vld [vmem:[#allocation4 + $0x198] sm:$0xff]
    %v94 = vld [vmem:[#allocation4 + $0x1a0] sm:$0xff]
    %v95 = vld [vmem:[#allocation4 + $0x1a8] sm:$0xff]
    %v96 = vld [vmem:[#allocation4 + $0x1b0] sm:$0xff]
    %v97 = vld [vmem:[#allocation4 + $0x1b8] sm:$0xff]
    %v98 = vld [vmem:[#allocation4 + $0x1c0] sm:$0xff]
    %v99 = vld [vmem:[#allocation4 + $0x1c8] sm:$0xff]
    %v100 = vld [vmem:[#allocation4 + $0x1d0] sm:$0xff]
    %v101 = vld [vmem:[#allocation4 + $0x1d8] sm:$0xff]
    %v102 = vld [vmem:[#allocation4 + $0x1e0] sm:$0xff]
    %v103 = vld [vmem:[#allocation4 + $0x1e8] sm:$0xff]
    %v104 = vld [vmem:[#allocation4 + $0x1f0] sm:$0xff]
    %v105 = vld [vmem:[#allocation4 + $0x1f8] sm:$0xff]
    %v106 = vld [vmem:[%s2] sm:$0xf]
    %v108 = vperm.slane %v106, 0
    %v109 = vperm.slane %v106, 1
    %v110 = vperm.slane %v106, 2
    %v111 = vperm.slane %v106, 3
    %v116 = vld [vmem:[#allocation2] sm:$0xff]
    %v117 = vld [vmem:[#allocation3] sm:$0xff]
    %v118 = vld [vmem:[%s0] sm:$0xff]
    %119 = vmatpush.msra.mxu0 %v102
    %120 = vmatpush.msra.mxu0 %v98
    %121 = vmatpush.msra.mxu0 %v94
    %122 = vmatpush.msra.mxu0 %v90
    %123 = vmatpush.msra.mxu0 %v86
    %124 = vmatpush.msra.mxu0 %v82
    %125 = vmatpush.msra.mxu0 %v78
    %126 = vmatpush.msra.mxu0 %v74
    %127 = vmatpush.msra.mxu0 %v70
    %128 = vmatpush.msra.mxu0 %v66
    %129 = vmatpush.msra.mxu0 %v62
    %130 = vmatpush.msra.mxu0 %v58
    %131 = vmatpush.msra.mxu0 %v54
    %132 = vmatpush.msra.mxu0 %v50
    %133 = vmatpush.msra.mxu0 %v46
    %134 = vmatpush.msra.mxu0 %v42
    %135 = vmatmul.f32.gmra.mxu0 %v116
    %v136 = vpop.f32.mrf.mxu0
    %v137 = vadd.f32 0.0, %v136
    %138 = vdwg.mxu0
    %139 = vmatpush.msra.mxu0 %v103
    %140 = vmatpush.msra.mxu0 %v99
    %141 = vmatpush.msra.mxu0 %v95
    %142 = vmatpush.msra.mxu0 %v91
    %143 = vmatpush.msra.mxu0 %v87
    %144 = vmatpush.msra.mxu0 %v83
    %145 = vmatpush.msra.mxu0 %v79
    %146 = vmatpush.msra.mxu0 %v75
    %147 = vmatpush.msra.mxu0 %v71
    %148 = vmatpush.msra.mxu0 %v67
    %149 = vmatpush.msra.mxu0 %v63
    %150 = vmatpush.msra.mxu0 %v59
    %151 = vmatpush.msra.mxu0 %v55
    %152 = vmatpush.msra.mxu0 %v51
    %153 = vmatpush.msra.mxu0 %v47
    %154 = vmatpush.msra.mxu0 %v43
    %155 = vmatmul.f32.gmra.mxu0 %v116
    %v156 = vpop.f32.mrf.mxu0
    %v157 = vadd.f32 0.0, %v156
    %158 = vdwg.mxu0
    %159 = vmatpush.msra.mxu0 %v104
    %160 = vmatpush.msra.mxu0 %v100
    %161 = vmatpush.msra.mxu0 %v96
    %162 = vmatpush.msra.mxu0 %v92
    %163 = vmatpush.msra.mxu0 %v88
    %164 = vmatpush.msra.mxu0 %v84
    %165 = vmatpush.msra.mxu0 %v80
    %166 = vmatpush.msra.mxu0 %v76
    %167 = vmatpush.msra.mxu0 %v72
    %168 = vmatpush.msra.mxu0 %v68
    %169 = vmatpush.msra.mxu0 %v64
    %170 = vmatpush.msra.mxu0 %v60
    %171 = vmatpush.msra.mxu0 %v56
    %172 = vmatpush.msra.mxu0 %v52
    %173 = vmatpush.msra.mxu0 %v48
    %174 = vmatpush.msra.mxu0 %v44
    %175 = vmatmul.f32.gmra.mxu0 %v116
    %v176 = vpop.f32.mrf.mxu0
    %v177 = vadd.f32 0.0, %v176
    %178 = vdwg.mxu0
    %179 = vmatpush.msra.mxu0 %v105
    %180 = vmatpush.msra.mxu0 %v101
    %181 = vmatpush.msra.mxu0 %v97
    %182 = vmatpush.msra.mxu0 %v93
    %183 = vmatpush.msra.mxu0 %v89
    %184 = vmatpush.msra.mxu0 %v85
    %185 = vmatpush.msra.mxu0 %v81
    %186 = vmatpush.msra.mxu0 %v77
    %187 = vmatpush.msra.mxu0 %v73
    %188 = vmatpush.msra.mxu0 %v69
    %189 = vmatpush.msra.mxu0 %v65
    %190 = vmatpush.msra.mxu0 %v61
    %191 = vmatpush.msra.mxu0 %v57
    %192 = vmatpush.msra.mxu0 %v53
    %193 = vmatpush.msra.mxu0 %v49
    %194 = vmatpush.msra.mxu0 %v45
    %195 = vmatmul.f32.gmra.mxu0 %v116
    %v196 = vpop.f32.mrf.mxu0
    %v197 = vadd.f32 0.0, %v196
    %198 = vdwg.mxu0
    %201 = vst [vmem:[#allocation1] ss:$2 sm:$0xff] %v40
    %s202 = scalar_lea.vmem [#allocation1], 16
    %203 = vst [vmem:[%s202] ss:$2 sm:$0xff] %v41
    %v204 = vld.sshfl [vmem:[#allocation1] sm:$0xff pattern:$0x75316420]
    %v205 = vld.sshfl [vmem:[#allocation1 + $0x8] sm:$0xff pattern:$0x75316420]
    %v206 = vld.sshfl [vmem:[#allocation1 + $0x10] sm:$0xff pattern:$0x75316420]
    %v207 = vld.sshfl [vmem:[#allocation1 + $0x18] sm:$0xff pattern:$0x75316420]
    %vm208 = vcmask 31744
    %v210 = vsel %vm208, %v118, 0
    %vm212 = vcmask 1043456
    %v213 = vsel %vm212, %v204, 0
    %v215 = vsel %vm212, %v205, 0
    %v217 = vsel %vm212, %v206, 0
    %v219 = vsel %vm212, %v207, 0
    %221 = vmatpush.msra.mxu0 0.0
    %222 = vmatpush.msra.mxu0 0.0
    %223 = vmatpush.msra.mxu0 0.0
    %224 = vmatpush.msra.mxu0 0.0
    %225 = vmatpush.msra.mxu0 0.0
    %226 = vmatpush.msra.mxu0 0.0
    %227 = vmatpush.msra.mxu0 0.0
    %228 = vmatpush.msra.mxu0 0.0
    %229 = vmatpush.msra.mxu0 0.0
    %230 = vmatpush.msra.mxu0 0.0
    %231 = vmatpush.msra.mxu0 0.0
    %232 = vmatpush.msra.mxu0 0.0
    %233 = vmatpush.msra.mxu0 0.0
    %234 = vmatpush.msra.mxu0 0.0
    %235 = vmatpush.msra.mxu0 0.0
    %236 = vmatpush.msra.mxu0 %v213
    %237 = vmatmul.f32.gmra.mxu0 %v210
    %v238 = vpop.f32.mrf.mxu0
    %v239 = vadd.f32 %v108, %v238
    %240 = vdwg.mxu0
    %241 = vmatpush.msra.mxu0 0.0
    %242 = vmatpush.msra.mxu0 0.0
    %243 = vmatpush.msra.mxu0 0.0
    %244 = vmatpush.msra.mxu0 0.0
    %245 = vmatpush.msra.mxu0 0.0
    %246 = vmatpush.msra.mxu0 0.0
    %247 = vmatpush.msra.mxu0 0.0
    %248 = vmatpush.msra.mxu0 0.0
    %249 = vmatpush.msra.mxu0 0.0
    %250 = vmatpush.msra.mxu0 0.0
    %251 = vmatpush.msra.mxu0 0.0
    %252 = vmatpush.msra.mxu0 0.0
    %253 = vmatpush.msra.mxu0 0.0
    %254 = vmatpush.msra.mxu0 0.0
    %255 = vmatpush.msra.mxu0 0.0
    %256 = vmatpush.msra.mxu0 %v215
    %257 = vmatmul.f32.gmra.mxu0 %v210
    %v258 = vpop.f32.mrf.mxu0
    %v259 = vadd.f32 %v109, %v258
    %260 = vdwg.mxu0
    %261 = vmatpush.msra.mxu0 0.0
    %262 = vmatpush.msra.mxu0 0.0
    %263 = vmatpush.msra.mxu0 0.0
    %264 = vmatpush.msra.mxu0 0.0
    %265 = vmatpush.msra.mxu0 0.0
    %266 = vmatpush.msra.mxu0 0.0
    %267 = vmatpush.msra.mxu0 0.0
    %268 = vmatpush.msra.mxu0 0.0
    %269 = vmatpush.msra.mxu0 0.0
    %270 = vmatpush.msra.mxu0 0.0
    %271 = vmatpush.msra.mxu0 0.0
    %272 = vmatpush.msra.mxu0 0.0
    %273 = vmatpush.msra.mxu0 0.0
    %274 = vmatpush.msra.mxu0 0.0
    %275 = vmatpush.msra.mxu0 0.0
    %276 = vmatpush.msra.mxu0 %v217
    %277 = vmatmul.f32.gmra.mxu0 %v210
    %v278 = vpop.f32.mrf.mxu0
    %v279 = vadd.f32 %v110, %v278
    %280 = vdwg.mxu0
    %281 = vmatpush.msra.mxu0 0.0
    %282 = vmatpush.msra.mxu0 0.0
    %283 = vmatpush.msra.mxu0 0.0
    %284 = vmatpush.msra.mxu0 0.0
    %285 = vmatpush.msra.mxu0 0.0
    %286 = vmatpush.msra.mxu0 0.0
    %287 = vmatpush.msra.mxu0 0.0
    %288 = vmatpush.msra.mxu0 0.0
    %289 = vmatpush.msra.mxu0 0.0
    %290 = vmatpush.msra.mxu0 0.0
    %291 = vmatpush.msra.mxu0 0.0
    %292 = vmatpush.msra.mxu0 0.0
    %293 = vmatpush.msra.mxu0 0.0
    %294 = vmatpush.msra.mxu0 0.0
    %295 = vmatpush.msra.mxu0 0.0
    %296 = vmatpush.msra.mxu0 %v219
    %297 = vmatmul.f32.gmra.mxu0 %v210
    %v298 = vpop.f32.mrf.mxu0
    %v299 = vadd.f32 %v111, %v298
    %300 = vdwg.mxu0
    %v301 = vadd.f32 %v239, %v137
    %v302 = vadd.f32 %v259, %v157
    %v303 = vadd.f32 %v279, %v177
    %v304 = vadd.f32 %v299, %v197
    %v305 = vsub.f32 0.0, %v301
    %v306 = vsub.f32 0.0, %v302
    %v307 = vsub.f32 0.0, %v303
    %v308 = vmul.f32 %v305, 1.442695
    %v309 = vpow.pop %v308
    %v310 = vmul.f32 %v306, 1.442695
    %v311 = vpow.pop %v310
    %v312 = vmul.f32 %v307, 1.442695
    %v313 = vpow.pop %v312
    %v314 = vadd.f32 %v309, 1.0
    %v315 = vadd.f32 %v311, 1.0
    %v316 = vadd.f32 %v313, 1.0
    %v317 = vrcp.pop %v314
    %v318 = vmul.f32 %v314, %v317
    %v319 = vsub.f32 1.0, %v318
    %v320 = vmul.f32 %v317, %v319
    %v321 = vadd.f32 %v317, %v320
    %vm322 = vweird.f32 %v314
    %vm323 = vweird.f32 %v317
    %vm324 = vmor %vm322, %vm323
    %v325 = vsel %vm324, %v317, %v321
    %v326 = vand.u32 2147483647, %v314
    %vm327 = vcmp.eq.f32.partialorder %v326, 8.507059e+37
    %v328 = vand.u32 %v314, 2147483648
    %v329 = vor.u32 1.1754944e-38, %v328
    %v330 = vsel %vm327, %v329, %v325
    %v331 = vmul.f32 1.0, %v330
    %v332 = vrcp.pop %v315
    %v333 = vmul.f32 %v315, %v332
    %v334 = vsub.f32 1.0, %v333
    %v335 = vmul.f32 %v332, %v334
    %v336 = vadd.f32 %v332, %v335
    %vm337 = vweird.f32 %v315
    %vm338 = vweird.f32 %v332
    %vm339 = vmor %vm337, %vm338
    %v340 = vsel %vm339, %v332, %v336
    %v341 = vand.u32 2147483647, %v315
    %vm342 = vcmp.eq.f32.partialorder %v341, 8.507059e+37
    %v343 = vand.u32 %v315, 2147483648
    %v344 = vor.u32 1.1754944e-38, %v343
    %v345 = vsel %vm342, %v344, %v340
    %v346 = vmul.f32 1.0, %v345
    %v347 = vrcp.pop %v316
    %v348 = vmul.f32 %v316, %v347
    %v349 = vsub.f32 1.0, %v348
    %v350 = vmul.f32 %v347, %v349
    %v351 = vadd.f32 %v347, %v350
    %vm352 = vweird.f32 %v316
    %vm353 = vweird.f32 %v347
    %vm354 = vmor %vm352, %vm353
    %v355 = vsel %vm354, %v347, %v351
    %v356 = vand.u32 2147483647, %v316
    %vm357 = vcmp.eq.f32.partialorder %v356, 8.507059e+37
    %v358 = vand.u32 %v316, 2147483648
    %v359 = vor.u32 1.1754944e-38, %v358
    %v360 = vsel %vm357, %v359, %v355
    %v361 = vmul.f32 1.0, %v360
    %v362 = vtanh.pop %v304
    %v363 = vmul.f32 %v346, %v117
    %v364 = vmul.f32 %v331, %v362
    %v365 = vadd.f32 %v363, %v364
    %v366 = vtanh.pop %v365
    %v367 = vmul.f32 %v361, %v366
    %368 = vst [vmem:[#allocation7] sm:$0xff] %v367
    %s369 = scalar_lea.vmem %s0, 8
    %v370 = vld [vmem:[%s369] sm:$0xff]
    %371 = vmatpush.msra.mxu0 %v102
    %372 = vmatpush.msra.mxu0 %v98
    %373 = vmatpush.msra.mxu0 %v94
    %374 = vmatpush.msra.mxu0 %v90
    %375 = vmatpush.msra.mxu0 %v86
    %376 = vmatpush.msra.mxu0 %v82
    %377 = vmatpush.msra.mxu0 %v78
    %378 = vmatpush.msra.mxu0 %v74
    %379 = vmatpush.msra.mxu0 %v70
    %380 = vmatpush.msra.mxu0 %v66
    %381 = vmatpush.msra.mxu0 %v62
    %382 = vmatpush.msra.mxu0 %v58
    %383 = vmatpush.msra.mxu0 %v54
    %384 = vmatpush.msra.mxu0 %v50
    %385 = vmatpush.msra.mxu0 %v46
    %386 = vmatpush.msra.mxu0 %v42
    %387 = vmatmul.f32.gmra.mxu0 %v367
    %v388 = vpop.f32.mrf.mxu0
    %v389 = vadd.f32 0.0, %v388
    %390 = vdwg.mxu0
    %391 = vmatpush.msra.mxu0 %v103
    %392 = vmatpush.msra.mxu0 %v99
    %393 = vmatpush.msra.mxu0 %v95
    %394 = vmatpush.msra.mxu0 %v91
    %395 = vmatpush.msra.mxu0 %v87
    %396 = vmatpush.msra.mxu0 %v83
    %397 = vmatpush.msra.mxu0 %v79
    %398 = vmatpush.msra.mxu0 %v75
    %399 = vmatpush.msra.mxu0 %v71
    %400 = vmatpush.msra.mxu0 %v67
    %401 = vmatpush.msra.mxu0 %v63
    %402 = vmatpush.msra.mxu0 %v59
    %403 = vmatpush.msra.mxu0 %v55
    %404 = vmatpush.msra.mxu0 %v51
    %405 = vmatpush.msra.mxu0 %v47
    %406 = vmatpush.msra.mxu0 %v43
    %407 = vmatmul.f32.gmra.mxu0 %v367
    %v408 = vpop.f32.mrf.mxu0
    %v409 = vadd.f32 0.0, %v408
    %410 = vdwg.mxu0
    %411 = vmatpush.msra.mxu0 %v104
    %412 = vmatpush.msra.mxu0 %v100
    %413 = vmatpush.msra.mxu0 %v96
    %414 = vmatpush.msra.mxu0 %v92
    %415 = vmatpush.msra.mxu0 %v88
    %416 = vmatpush.msra.mxu0 %v84
    %417 = vmatpush.msra.mxu0 %v80
    %418 = vmatpush.msra.mxu0 %v76
    %419 = vmatpush.msra.mxu0 %v72
    %420 = vmatpush.msra.mxu0 %v68
    %421 = vmatpush.msra.mxu0 %v64
    %422 = vmatpush.msra.mxu0 %v60
    %423 = vmatpush.msra.mxu0 %v56
    %424 = vmatpush.msra.mxu0 %v52
    %425 = vmatpush.msra.mxu0 %v48
    %426 = vmatpush.msra.mxu0 %v44
    %427 = vmatmul.f32.gmra.mxu0 %v367
    %v428 = vpop.f32.mrf.mxu0
    %v429 = vadd.f32 0.0, %v428
    %430 = vdwg.mxu0
    %431 = vmatpush.msra.mxu0 %v105
    %432 = vmatpush.msra.mxu0 %v101
    %433 = vmatpush.msra.mxu0 %v97
    %434 = vmatpush.msra.mxu0 %v93
    %435 = vmatpush.msra.mxu0 %v89
    %436 = vmatpush.msra.mxu0 %v85
    %437 = vmatpush.msra.mxu0 %v81
    %438 = vmatpush.msra.mxu0 %v77
    %439 = vmatpush.msra.mxu0 %v73
    %440 = vmatpush.msra.mxu0 %v69
    %441 = vmatpush.msra.mxu0 %v65
    %442 = vmatpush.msra.mxu0 %v61
    %443 = vmatpush.msra.mxu0 %v57
    %444 = vmatpush.msra.mxu0 %v53
    %445 = vmatpush.msra.mxu0 %v49
    %446 = vmatpush.msra.mxu0 %v45
    %447 = vmatmul.f32.gmra.mxu0 %v367
    %v448 = vpop.f32.mrf.mxu0
    %v449 = vadd.f32 0.0, %v448
    %450 = vdwg.mxu0
    %451 = vst [vmem:[#allocation1] ss:$2 sm:$0xff] %v40
    %s452 = scalar_lea.vmem [#allocation1], 16
    %453 = vst [vmem:[%s452] ss:$2 sm:$0xff] %v41
    %v454 = vld.sshfl [vmem:[#allocation1] sm:$0xff pattern:$0x75316420]
    %v455 = vld.sshfl [vmem:[#allocation1 + $0x8] sm:$0xff pattern:$0x75316420]
    %v456 = vld.sshfl [vmem:[#allocation1 + $0x10] sm:$0xff pattern:$0x75316420]
    %v457 = vld.sshfl [vmem:[#allocation1 + $0x18] sm:$0xff pattern:$0x75316420]
    %v459 = vsel %vm208, %v370, 0
    %v461 = vsel %vm212, %v454, 0
    %v463 = vsel %vm212, %v455, 0
    %v465 = vsel %vm212, %v456, 0
    %v467 = vsel %vm212, %v457, 0
    %469 = vmatpush.msra.mxu0 0.0
    %470 = vmatpush.msra.mxu0 0.0
    %471 = vmatpush.msra.mxu0 0.0
    %472 = vmatpush.msra.mxu0 0.0
    %473 = vmatpush.msra.mxu0 0.0
    %474 = vmatpush.msra.mxu0 0.0
    %475 = vmatpush.msra.mxu0 0.0
    %476 = vmatpush.msra.mxu0 0.0
    %477 = vmatpush.msra.mxu0 0.0
    %478 = vmatpush.msra.mxu0 0.0
    %479 = vmatpush.msra.mxu0 0.0
    %480 = vmatpush.msra.mxu0 0.0
    %481 = vmatpush.msra.mxu0 0.0
    %482 = vmatpush.msra.mxu0 0.0
    %483 = vmatpush.msra.mxu0 0.0
    %484 = vmatpush.msra.mxu0 %v461
    %485 = vmatmul.f32.gmra.mxu0 %v459
    %v486 = vpop.f32.mrf.mxu0
    %v487 = vadd.f32 %v108, %v486
    %488 = vdwg.mxu0
    %489 = vmatpush.msra.mxu0 0.0
    %490 = vmatpush.msra.mxu0 0.0
    %491 = vmatpush.msra.mxu0 0.0
    %492 = vmatpush.msra.mxu0 0.0
    %493 = vmatpush.msra.mxu0 0.0
    %494 = vmatpush.msra.mxu0 0.0
    %495 = vmatpush.msra.mxu0 0.0
    %496 = vmatpush.msra.mxu0 0.0
    %497 = vmatpush.msra.mxu0 0.0
    %498 = vmatpush.msra.mxu0 0.0
    %499 = vmatpush.msra.mxu0 0.0
    %500 = vmatpush.msra.mxu0 0.0
    %501 = vmatpush.msra.mxu0 0.0
    %502 = vmatpush.msra.mxu0 0.0
    %503 = vmatpush.msra.mxu0 0.0
    %504 = vmatpush.msra.mxu0 %v463
    %505 = vmatmul.f32.gmra.mxu0 %v459
    %v506 = vpop.f32.mrf.mxu0
    %v507 = vadd.f32 %v109, %v506
    %508 = vdwg.mxu0
    %509 = vmatpush.msra.mxu0 0.0
    %510 = vmatpush.msra.mxu0 0.0
    %511 = vmatpush.msra.mxu0 0.0
    %512 = vmatpush.msra.mxu0 0.0
    %513 = vmatpush.msra.mxu0 0.0
    %514 = vmatpush.msra.mxu0 0.0
    %515 = vmatpush.msra.mxu0 0.0
    %516 = vmatpush.msra.mxu0 0.0
    %517 = vmatpush.msra.mxu0 0.0
    %518 = vmatpush.msra.mxu0 0.0
    %519 = vmatpush.msra.mxu0 0.0
    %520 = vmatpush.msra.mxu0 0.0
    %521 = vmatpush.msra.mxu0 0.0
    %522 = vmatpush.msra.mxu0 0.0
    %523 = vmatpush.msra.mxu0 0.0
    %524 = vmatpush.msra.mxu0 %v465
    %525 = vmatmul.f32.gmra.mxu0 %v459
    %v526 = vpop.f32.mrf.mxu0
    %v527 = vadd.f32 %v110, %v526
    %528 = vdwg.mxu0
    %529 = vmatpush.msra.mxu0 0.0
    %530 = vmatpush.msra.mxu0 0.0
    %531 = vmatpush.msra.mxu0 0.0
    %532 = vmatpush.msra.mxu0 0.0
    %533 = vmatpush.msra.mxu0 0.0
    %534 = vmatpush.msra.mxu0 0.0
    %535 = vmatpush.msra.mxu0 0.0
    %536 = vmatpush.msra.mxu0 0.0
    %537 = vmatpush.msra.mxu0 0.0
    %538 = vmatpush.msra.mxu0 0.0
    %539 = vmatpush.msra.mxu0 0.0
    %540 = vmatpush.msra.mxu0 0.0
    %541 = vmatpush.msra.mxu0 0.0
    %542 = vmatpush.msra.mxu0 0.0
    %543 = vmatpush.msra.mxu0 0.0
    %544 = vmatpush.msra.mxu0 %v467
    %545 = vmatmul.f32.gmra.mxu0 %v459
    %v546 = vpop.f32.mrf.mxu0
    %v547 = vadd.f32 %v111, %v546
    %548 = vdwg.mxu0
    %v549 = vadd.f32 %v487, %v389
    %v550 = vadd.f32 %v507, %v409
    %v551 = vadd.f32 %v527, %v429
    %v552 = vadd.f32 %v547, %v449
    %v553 = vsub.f32 0.0, %v549
    %v554 = vsub.f32 0.0, %v550
    %v555 = vsub.f32 0.0, %v551
    %v556 = vmul.f32 %v553, 1.442695
    %v557 = vpow.pop %v556
    %v558 = vmul.f32 %v554, 1.442695
    %v559 = vpow.pop %v558
    %v560 = vmul.f32 %v555, 1.442695
    %v561 = vpow.pop %v560
    %v562 = vadd.f32 %v557, 1.0
    %v563 = vadd.f32 %v559, 1.0
    %v564 = vadd.f32 %v561, 1.0
    %v565 = vrcp.pop %v562
    %v566 = vmul.f32 %v562, %v565
    %v567 = vsub.f32 1.0, %v566
    %v568 = vmul.f32 %v565, %v567
    %v569 = vadd.f32 %v565, %v568
    %vm570 = vweird.f32 %v562
    %vm571 = vweird.f32 %v565
    %vm572 = vmor %vm570, %vm571
    %v573 = vsel %vm572, %v565, %v569
    %v574 = vand.u32 2147483647, %v562
    %vm575 = vcmp.eq.f32.partialorder %v574, 8.507059e+37
    %v576 = vand.u32 %v562, 2147483648
    %v577 = vor.u32 1.1754944e-38, %v576
    %v578 = vsel %vm575, %v577, %v573
    %v579 = vmul.f32 1.0, %v578
    %v580 = vrcp.pop %v563
    %v581 = vmul.f32 %v563, %v580
    %v582 = vsub.f32 1.0, %v581
    %v583 = vmul.f32 %v580, %v582
    %v584 = vadd.f32 %v580, %v583
    %vm585 = vweird.f32 %v563
    %vm586 = vweird.f32 %v580
    %vm587 = vmor %vm585, %vm586
    %v588 = vsel %vm587, %v580, %v584
    %v589 = vand.u32 2147483647, %v563
    %vm590 = vcmp.eq.f32.partialorder %v589, 8.507059e+37
    %v591 = vand.u32 %v563, 2147483648
    %v592 = vor.u32 1.1754944e-38, %v591
    %v593 = vsel %vm590, %v592, %v588
    %v594 = vmul.f32 1.0, %v593
    %v595 = vrcp.pop %v564
    %v596 = vmul.f32 %v564, %v595
    %v597 = vsub.f32 1.0, %v596
    %v598 = vmul.f32 %v595, %v597
    %v599 = vadd.f32 %v595, %v598
    %vm600 = vweird.f32 %v564
    %vm601 = vweird.f32 %v595
    %vm602 = vmor %vm600, %vm601
    %v603 = vsel %vm602, %v595, %v599
    %v604 = vand.u32 2147483647, %v564
    %vm605 = vcmp.eq.f32.partialorder %v604, 8.507059e+37
    %v606 = vand.u32 %v564, 2147483648
    %v607 = vor.u32 1.1754944e-38, %v606
    %v608 = vsel %vm605, %v607, %v603
    %v609 = vmul.f32 1.0, %v608
    %v610 = vtanh.pop %v552
    %v611 = vmul.f32 %v594, %v365
    %v612 = vmul.f32 %v579, %v610
    %v613 = vadd.f32 %v611, %v612
    %v614 = vtanh.pop %v613
    %v615 = vmul.f32 %v609, %v614
    %616 = vst [vmem:[#allocation7 + $0x8] sm:$0xff] %v615
    %s617 = scalar_lea.vmem %s0, 16
    %v618 = vld [vmem:[%s617] sm:$0xff]
    %619 = vmatpush.msra.mxu0 %v102
    %620 = vmatpush.msra.mxu0 %v98
    %621 = vmatpush.msra.mxu0 %v94
    %622 = vmatpush.msra.mxu0 %v90
    %623 = vmatpush.msra.mxu0 %v86
    %624 = vmatpush.msra.mxu0 %v82
    %625 = vmatpush.msra.mxu0 %v78
    %626 = vmatpush.msra.mxu0 %v74
    %627 = vmatpush.msra.mxu0 %v70
    %628 = vmatpush.msra.mxu0 %v66
    %629 = vmatpush.msra.mxu0 %v62
    %630 = vmatpush.msra.mxu0 %v58
    %631 = vmatpush.msra.mxu0 %v54
    %632 = vmatpush.msra.mxu0 %v50
    %633 = vmatpush.msra.mxu0 %v46
    %634 = vmatpush.msra.mxu0 %v42
    %635 = vmatmul.f32.gmra.mxu0 %v615
    %v636 = vpop.f32.mrf.mxu0
    %v637 = vadd.f32 0.0, %v636
    %638 = vdwg.mxu0
    %639 = vmatpush.msra.mxu0 %v103
    %640 = vmatpush.msra.mxu0 %v99
    %641 = vmatpush.msra.mxu0 %v95
    %642 = vmatpush.msra.mxu0 %v91
    %643 = vmatpush.msra.mxu0 %v87
    %644 = vmatpush.msra.mxu0 %v83
    %645 = vmatpush.msra.mxu0 %v79
    %646 = vmatpush.msra.mxu0 %v75
    %647 = vmatpush.msra.mxu0 %v71
    %648 = vmatpush.msra.mxu0 %v67
    %649 = vmatpush.msra.mxu0 %v63
    %650 = vmatpush.msra.mxu0 %v59
    %651 = vmatpush.msra.mxu0 %v55
    %652 = vmatpush.msra.mxu0 %v51
    %653 = vmatpush.msra.mxu0 %v47
    %654 = vmatpush.msra.mxu0 %v43
    %655 = vmatmul.f32.gmra.mxu0 %v615
    %v656 = vpop.f32.mrf.mxu0
    %v657 = vadd.f32 0.0, %v656
    %658 = vdwg.mxu0
    %659 = vmatpush.msra.mxu0 %v104
    %660 = vmatpush.msra.mxu0 %v100
    %661 = vmatpush.msra.mxu0 %v96
    %662 = vmatpush.msra.mxu0 %v92
    %663 = vmatpush.msra.mxu0 %v88
    %664 = vmatpush.msra.mxu0 %v84
    %665 = vmatpush.msra.mxu0 %v80
    %666 = vmatpush.msra.mxu0 %v76
    %667 = vmatpush.msra.mxu0 %v72
    %668 = vmatpush.msra.mxu0 %v68
    %669 = vmatpush.msra.mxu0 %v64
    %670 = vmatpush.msra.mxu0 %v60
    %671 = vmatpush.msra.mxu0 %v56
    %672 = vmatpush.msra.mxu0 %v52
    %673 = vmatpush.msra.mxu0 %v48
    %674 = vmatpush.msra.mxu0 %v44
    %675 = vmatmul.f32.gmra.mxu0 %v615
    %v676 = vpop.f32.mrf.mxu0
    %v677 = vadd.f32 0.0, %v676
    %678 = vdwg.mxu0
    %679 = vmatpush.msra.mxu0 %v105
    %680 = vmatpush.msra.mxu0 %v101
    %681 = vmatpush.msra.mxu0 %v97
    %682 = vmatpush.msra.mxu0 %v93
    %683 = vmatpush.msra.mxu0 %v89
    %684 = vmatpush.msra.mxu0 %v85
    %685 = vmatpush.msra.mxu0 %v81
    %686 = vmatpush.msra.mxu0 %v77
    %687 = vmatpush.msra.mxu0 %v73
    %688 = vmatpush.msra.mxu0 %v69
    %689 = vmatpush.msra.mxu0 %v65
    %690 = vmatpush.msra.mxu0 %v61
    %691 = vmatpush.msra.mxu0 %v57
    %692 = vmatpush.msra.mxu0 %v53
    %693 = vmatpush.msra.mxu0 %v49
    %694 = vmatpush.msra.mxu0 %v45
    %695 = vmatmul.f32.gmra.mxu0 %v615
    %v696 = vpop.f32.mrf.mxu0
    %v697 = vadd.f32 0.0, %v696
    %698 = vdwg.mxu0
    %699 = vst [vmem:[#allocation1] ss:$2 sm:$0xff] %v40
    %s700 = scalar_lea.vmem [#allocation1], 16
    %701 = vst [vmem:[%s700] ss:$2 sm:$0xff] %v41
    %v702 = vld.sshfl [vmem:[#allocation1] sm:$0xff pattern:$0x75316420]
    %v703 = vld.sshfl [vmem:[#allocation1 + $0x8] sm:$0xff pattern:$0x75316420]
    %v704 = vld.sshfl [vmem:[#allocation1 + $0x10] sm:$0xff pattern:$0x75316420]
    %v705 = vld.sshfl [vmem:[#allocation1 + $0x18] sm:$0xff pattern:$0x75316420]
    %v707 = vsel %vm208, %v618, 0
    %v709 = vsel %vm212, %v702, 0
    %v711 = vsel %vm212, %v703, 0
    %v713 = vsel %vm212, %v704, 0
    %v715 = vsel %vm212, %v705, 0
    %717 = vmatpush.msra.mxu0 0.0
    %718 = vmatpush.msra.mxu0 0.0
    %719 = vmatpush.msra.mxu0 0.0
    %720 = vmatpush.msra.mxu0 0.0
    %721 = vmatpush.msra.mxu0 0.0
    %722 = vmatpush.msra.mxu0 0.0
    %723 = vmatpush.msra.mxu0 0.0
    %724 = vmatpush.msra.mxu0 0.0
    %725 = vmatpush.msra.mxu0 0.0
    %726 = vmatpush.msra.mxu0 0.0
    %727 = vmatpush.msra.mxu0 0.0
    %728 = vmatpush.msra.mxu0 0.0
    %729 = vmatpush.msra.mxu0 0.0
    %730 = vmatpush.msra.mxu0 0.0
    %731 = vmatpush.msra.mxu0 0.0
    %732 = vmatpush.msra.mxu0 %v709
    %733 = vmatmul.f32.gmra.mxu0 %v707
    %v734 = vpop.f32.mrf.mxu0
    %v735 = vadd.f32 %v108, %v734
    %736 = vdwg.mxu0
    %737 = vmatpush.msra.mxu0 0.0
    %738 = vmatpush.msra.mxu0 0.0
    %739 = vmatpush.msra.mxu0 0.0
    %740 = vmatpush.msra.mxu0 0.0
    %741 = vmatpush.msra.mxu0 0.0
    %742 = vmatpush.msra.mxu0 0.0
    %743 = vmatpush.msra.mxu0 0.0
    %744 = vmatpush.msra.mxu0 0.0
    %745 = vmatpush.msra.mxu0 0.0
    %746 = vmatpush.msra.mxu0 0.0
    %747 = vmatpush.msra.mxu0 0.0
    %748 = vmatpush.msra.mxu0 0.0
    %749 = vmatpush.msra.mxu0 0.0
    %750 = vmatpush.msra.mxu0 0.0
    %751 = vmatpush.msra.mxu0 0.0
    %752 = vmatpush.msra.mxu0 %v711
    %753 = vmatmul.f32.gmra.mxu0 %v707
    %v754 = vpop.f32.mrf.mxu0
    %v755 = vadd.f32 %v109, %v754
    %756 = vdwg.mxu0
    %757 = vmatpush.msra.mxu0 0.0
    %758 = vmatpush.msra.mxu0 0.0
    %759 = vmatpush.msra.mxu0 0.0
    %760 = vmatpush.msra.mxu0 0.0
    %761 = vmatpush.msra.mxu0 0.0
    %762 = vmatpush.msra.mxu0 0.0
    %763 = vmatpush.msra.mxu0 0.0
    %764 = vmatpush.msra.mxu0 0.0
    %765 = vmatpush.msra.mxu0 0.0
    %766 = vmatpush.msra.mxu0 0.0
    %767 = vmatpush.msra.mxu0 0.0
    %768 = vmatpush.msra.mxu0 0.0
    %769 = vmatpush.msra.mxu0 0.0
    %770 = vmatpush.msra.mxu0 0.0
    %771 = vmatpush.msra.mxu0 0.0
    %772 = vmatpush.msra.mxu0 %v713
    %773 = vmatmul.f32.gmra.mxu0 %v707
    %v774 = vpop.f32.mrf.mxu0
    %v775 = vadd.f32 %v110, %v774
    %776 = vdwg.mxu0
    %777 = vmatpush.msra.mxu0 0.0
    %778 = vmatpush.msra.mxu0 0.0
    %779 = vmatpush.msra.mxu0 0.0
    %780 = vmatpush.msra.mxu0 0.0
    %781 = vmatpush.msra.mxu0 0.0
    %782 = vmatpush.msra.mxu0 0.0
    %783 = vmatpush.msra.mxu0 0.0
    %784 = vmatpush.msra.mxu0 0.0
    %785 = vmatpush.msra.mxu0 0.0
    %786 = vmatpush.msra.mxu0 0.0
    %787 = vmatpush.msra.mxu0 0.0
    %788 = vmatpush.msra.mxu0 0.0
    %789 = vmatpush.msra.mxu0 0.0
    %790 = vmatpush.msra.mxu0 0.0
    %791 = vmatpush.msra.mxu0 0.0
    %792 = vmatpush.msra.mxu0 %v715
    %793 = vmatmul.f32.gmra.mxu0 %v707
    %v794 = vpop.f32.mrf.mxu0
    %v795 = vadd.f32 %v111, %v794
    %796 = vdwg.mxu0
    %v797 = vadd.f32 %v735, %v637
    %v798 = vadd.f32 %v755, %v657
    %v799 = vadd.f32 %v775, %v677
    %v800 = vadd.f32 %v795, %v697
    %v801 = vsub.f32 0.0, %v797
    %v802 = vsub.f32 0.0, %v798
    %v803 = vsub.f32 0.0, %v799
    %v804 = vmul.f32 %v801, 1.442695
    %v805 = vpow.pop %v804
    %v806 = vmul.f32 %v802, 1.442695
    %v807 = vpow.pop %v806
    %v808 = vmul.f32 %v803, 1.442695
    %v809 = vpow.pop %v808
    %v810 = vadd.f32 %v805, 1.0
    %v811 = vadd.f32 %v807, 1.0
    %v812 = vadd.f32 %v809, 1.0
    %v813 = vrcp.pop %v810
    %v814 = vmul.f32 %v810, %v813
    %v815 = vsub.f32 1.0, %v814
    %v816 = vmul.f32 %v813, %v815
    %v817 = vadd.f32 %v813, %v816
    %vm818 = vweird.f32 %v810
    %vm819 = vweird.f32 %v813
    %vm820 = vmor %vm818, %vm819
    %v821 = vsel %vm820, %v813, %v817
    %v822 = vand.u32 2147483647, %v810
    %vm823 = vcmp.eq.f32.partialorder %v822, 8.507059e+37
    %v824 = vand.u32 %v810, 2147483648
    %v825 = vor.u32 1.1754944e-38, %v824
    %v826 = vsel %vm823, %v825, %v821
    %v827 = vmul.f32 1.0, %v826
    %v828 = vrcp.pop %v811
    %v829 = vmul.f32 %v811, %v828
    %v830 = vsub.f32 1.0, %v829
    %v831 = vmul.f32 %v828, %v830
    %v832 = vadd.f32 %v828, %v831
    %vm833 = vweird.f32 %v811
    %vm834 = vweird.f32 %v828
    %vm835 = vmor %vm833, %vm834
    %v836 = vsel %vm835, %v828, %v832
    %v837 = vand.u32 2147483647, %v811
    %vm838 = vcmp.eq.f32.partialorder %v837, 8.507059e+37
    %v839 = vand.u32 %v811, 2147483648
    %v840 = vor.u32 1.1754944e-38, %v839
    %v841 = vsel %vm838, %v840, %v836
    %v842 = vmul.f32 1.0, %v841
    %v843 = vrcp.pop %v812
    %v844 = vmul.f32 %v812, %v843
    %v845 = vsub.f32 1.0, %v844
    %v846 = vmul.f32 %v843, %v845
    %v847 = vadd.f32 %v843, %v846
    %vm848 = vweird.f32 %v812
    %vm849 = vweird.f32 %v843
    %vm850 = vmor %vm848, %vm849
    %v851 = vsel %vm850, %v843, %v847
    %v852 = vand.u32 2147483647, %v812
    %vm853 = vcmp.eq.f32.partialorder %v852, 8.507059e+37
    %v854 = vand.u32 %v812, 2147483648
    %v855 = vor.u32 1.1754944e-38, %v854
    %v856 = vsel %vm853, %v855, %v851
    %v857 = vmul.f32 1.0, %v856
    %v858 = vtanh.pop %v800
    %v859 = vmul.f32 %v842, %v613
    %v860 = vmul.f32 %v827, %v858
    %v861 = vadd.f32 %v859, %v860
    %v862 = vtanh.pop %v861
    %v863 = vmul.f32 %v857, %v862
    %864 = vst [vmem:[#allocation7 + $0x10] sm:$0xff] %v863
    %s865 = scalar_lea.vmem %s0, 24
    %v866 = vld [vmem:[%s865] sm:$0xff]
    %867 = vmatpush.msra.mxu0 %v102
    %868 = vmatpush.msra.mxu0 %v98
    %869 = vmatpush.msra.mxu0 %v94
    %870 = vmatpush.msra.mxu0 %v90
    %871 = vmatpush.msra.mxu0 %v86
    %872 = vmatpush.msra.mxu0 %v82
    %873 = vmatpush.msra.mxu0 %v78
    %874 = vmatpush.msra.mxu0 %v74
    %875 = vmatpush.msra.mxu0 %v70
    %876 = vmatpush.msra.mxu0 %v66
    %877 = vmatpush.msra.mxu0 %v62
    %878 = vmatpush.msra.mxu0 %v58
    %879 = vmatpush.msra.mxu0 %v54
    %880 = vmatpush.msra.mxu0 %v50
    %881 = vmatpush.msra.mxu0 %v46
    %882 = vmatpush.msra.mxu0 %v42
    %883 = vmatmul.f32.gmra.mxu0 %v863
    %v884 = vpop.f32.mrf.mxu0
    %v885 = vadd.f32 0.0, %v884
    %886 = vdwg.mxu0
    %887 = vmatpush.msra.mxu0 %v103
    %888 = vmatpush.msra.mxu0 %v99
    %889 = vmatpush.msra.mxu0 %v95
    %890 = vmatpush.msra.mxu0 %v91
    %891 = vmatpush.msra.mxu0 %v87
    %892 = vmatpush.msra.mxu0 %v83
    %893 = vmatpush.msra.mxu0 %v79
    %894 = vmatpush.msra.mxu0 %v75
    %895 = vmatpush.msra.mxu0 %v71
    %896 = vmatpush.msra.mxu0 %v67
    %897 = vmatpush.msra.mxu0 %v63
    %898 = vmatpush.msra.mxu0 %v59
    %899 = vmatpush.msra.mxu0 %v55
    %900 = vmatpush.msra.mxu0 %v51
    %901 = vmatpush.msra.mxu0 %v47
    %902 = vmatpush.msra.mxu0 %v43
    %903 = vmatmul.f32.gmra.mxu0 %v863
    %v904 = vpop.f32.mrf.mxu0
    %v905 = vadd.f32 0.0, %v904
    %906 = vdwg.mxu0
    %907 = vmatpush.msra.mxu0 %v104
    %908 = vmatpush.msra.mxu0 %v100
    %909 = vmatpush.msra.mxu0 %v96
    %910 = vmatpush.msra.mxu0 %v92
    %911 = vmatpush.msra.mxu0 %v88
    %912 = vmatpush.msra.mxu0 %v84
    %913 = vmatpush.msra.mxu0 %v80
    %914 = vmatpush.msra.mxu0 %v76
    %915 = vmatpush.msra.mxu0 %v72
    %916 = vmatpush.msra.mxu0 %v68
    %917 = vmatpush.msra.mxu0 %v64
    %918 = vmatpush.msra.mxu0 %v60
    %919 = vmatpush.msra.mxu0 %v56
    %920 = vmatpush.msra.mxu0 %v52
    %921 = vmatpush.msra.mxu0 %v48
    %922 = vmatpush.msra.mxu0 %v44
    %923 = vmatmul.f32.gmra.mxu0 %v863
    %v924 = vpop.f32.mrf.mxu0
    %v925 = vadd.f32 0.0, %v924
    %926 = vdwg.mxu0
    %927 = vmatpush.msra.mxu0 %v105
    %928 = vmatpush.msra.mxu0 %v101
    %929 = vmatpush.msra.mxu0 %v97
    %930 = vmatpush.msra.mxu0 %v93
    %931 = vmatpush.msra.mxu0 %v89
    %932 = vmatpush.msra.mxu0 %v85
    %933 = vmatpush.msra.mxu0 %v81
    %934 = vmatpush.msra.mxu0 %v77
    %935 = vmatpush.msra.mxu0 %v73
    %936 = vmatpush.msra.mxu0 %v69
    %937 = vmatpush.msra.mxu0 %v65
    %938 = vmatpush.msra.mxu0 %v61
    %939 = vmatpush.msra.mxu0 %v57
    %940 = vmatpush.msra.mxu0 %v53
    %941 = vmatpush.msra.mxu0 %v49
    %942 = vmatpush.msra.mxu0 %v45
    %943 = vmatmul.f32.gmra.mxu0 %v863
    %v944 = vpop.f32.mrf.mxu0
    %v945 = vadd.f32 0.0, %v944
    %946 = vdwg.mxu0
    %947 = vst [vmem:[#allocation1] ss:$2 sm:$0xff] %v40
    %s948 = scalar_lea.vmem [#allocation1], 16
    %949 = vst [vmem:[%s948] ss:$2 sm:$0xff] %v41
    %v950 = vld.sshfl [vmem:[#allocation1] sm:$0xff pattern:$0x75316420]
    %v951 = vld.sshfl [vmem:[#allocation1 + $0x8] sm:$0xff pattern:$0x75316420]
    %v952 = vld.sshfl [vmem:[#allocation1 + $0x10] sm:$0xff pattern:$0x75316420]
    %v953 = vld.sshfl [vmem:[#allocation1 + $0x18] sm:$0xff pattern:$0x75316420]
    %v955 = vsel %vm208, %v866, 0
    %v957 = vsel %vm212, %v950, 0
    %v959 = vsel %vm212, %v951, 0
    %v961 = vsel %vm212, %v952, 0
    %v963 = vsel %vm212, %v953, 0
    %965 = vmatpush.msra.mxu0 0.0
    %966 = vmatpush.msra.mxu0 0.0
    %967 = vmatpush.msra.mxu0 0.0
    %968 = vmatpush.msra.mxu0 0.0
    %969 = vmatpush.msra.mxu0 0.0
    %970 = vmatpush.msra.mxu0 0.0
    %971 = vmatpush.msra.mxu0 0.0
    %972 = vmatpush.msra.mxu0 0.0
    %973 = vmatpush.msra.mxu0 0.0
    %974 = vmatpush.msra.mxu0 0.0
    %975 = vmatpush.msra.mxu0 0.0
    %976 = vmatpush.msra.mxu0 0.0
    %977 = vmatpush.msra.mxu0 0.0
    %978 = vmatpush.msra.mxu0 0.0
    %979 = vmatpush.msra.mxu0 0.0
    %980 = vmatpush.msra.mxu0 %v957
    %981 = vmatmul.f32.gmra.mxu0 %v955
    %v982 = vpop.f32.mrf.mxu0
    %v983 = vadd.f32 %v108, %v982
    %984 = vdwg.mxu0
    %985 = vmatpush.msra.mxu0 0.0
    %986 = vmatpush.msra.mxu0 0.0
    %987 = vmatpush.msra.mxu0 0.0
    %988 = vmatpush.msra.mxu0 0.0
    %989 = vmatpush.msra.mxu0 0.0
    %990 = vmatpush.msra.mxu0 0.0
    %991 = vmatpush.msra.mxu0 0.0
    %992 = vmatpush.msra.mxu0 0.0
    %993 = vmatpush.msra.mxu0 0.0
    %994 = vmatpush.msra.mxu0 0.0
    %995 = vmatpush.msra.mxu0 0.0
    %996 = vmatpush.msra.mxu0 0.0
    %997 = vmatpush.msra.mxu0 0.0
    %998 = vmatpush.msra.mxu0 0.0
    %999 = vmatpush.msra.mxu0 0.0
    %1000 = vmatpush.msra.mxu0 %v959
    %1001 = vmatmul.f32.gmra.mxu0 %v955
    %v1002 = vpop.f32.mrf.mxu0
    %v1003 = vadd.f32 %v109, %v1002
    %1004 = vdwg.mxu0
    %1005 = vmatpush.msra.mxu0 0.0
    %1006 = vmatpush.msra.mxu0 0.0
    %1007 = vmatpush.msra.mxu0 0.0
    %1008 = vmatpush.msra.mxu0 0.0
    %1009 = vmatpush.msra.mxu0 0.0
    %1010 = vmatpush.msra.mxu0 0.0
    %1011 = vmatpush.msra.mxu0 0.0
    %1012 = vmatpush.msra.mxu0 0.0
    %1013 = vmatpush.msra.mxu0 0.0
    %1014 = vmatpush.msra.mxu0 0.0
    %1015 = vmatpush.msra.mxu0 0.0
    %1016 = vmatpush.msra.mxu0 0.0
    %1017 = vmatpush.msra.mxu0 0.0
    %1018 = vmatpush.msra.mxu0 0.0
    %1019 = vmatpush.msra.mxu0 0.0
    %1020 = vmatpush.msra.mxu0 %v961
    %1021 = vmatmul.f32.gmra.mxu0 %v955
    %v1022 = vpop.f32.mrf.mxu0
    %v1023 = vadd.f32 %v110, %v1022
    %1024 = vdwg.mxu0
    %1025 = vmatpush.msra.mxu0 0.0
    %1026 = vmatpush.msra.mxu0 0.0
    %1027 = vmatpush.msra.mxu0 0.0
    %1028 = vmatpush.msra.mxu0 0.0
    %1029 = vmatpush.msra.mxu0 0.0
    %1030 = vmatpush.msra.mxu0 0.0
    %1031 = vmatpush.msra.mxu0 0.0
    %1032 = vmatpush.msra.mxu0 0.0
    %1033 = vmatpush.msra.mxu0 0.0
    %1034 = vmatpush.msra.mxu0 0.0
    %1035 = vmatpush.msra.mxu0 0.0
    %1036 = vmatpush.msra.mxu0 0.0
    %1037 = vmatpush.msra.mxu0 0.0
    %1038 = vmatpush.msra.mxu0 0.0
    %1039 = vmatpush.msra.mxu0 0.0
    %1040 = vmatpush.msra.mxu0 %v963
    %1041 = vmatmul.f32.gmra.mxu0 %v955
    %v1042 = vpop.f32.mrf.mxu0
    %v1043 = vadd.f32 %v111, %v1042
    %1044 = vdwg.mxu0
    %v1045 = vadd.f32 %v983, %v885
    %v1046 = vadd.f32 %v1003, %v905
    %v1047 = vadd.f32 %v1023, %v925
    %v1048 = vadd.f32 %v1043, %v945
    %v1049 = vsub.f32 0.0, %v1045
    %v1050 = vsub.f32 0.0, %v1046
    %v1051 = vsub.f32 0.0, %v1047
    %v1052 = vmul.f32 %v1049, 1.442695
    %v1053 = vpow.pop %v1052
    %v1054 = vmul.f32 %v1050, 1.442695
    %v1055 = vpow.pop %v1054
    %v1056 = vmul.f32 %v1051, 1.442695
    %v1057 = vpow.pop %v1056
    %v1058 = vadd.f32 %v1053, 1.0
    %v1059 = vadd.f32 %v1055, 1.0
    %v1060 = vadd.f32 %v1057, 1.0
    %v1061 = vrcp.pop %v1058
    %v1062 = vmul.f32 %v1058, %v1061
    %v1063 = vsub.f32 1.0, %v1062
    %v1064 = vmul.f32 %v1061, %v1063
    %v1065 = vadd.f32 %v1061, %v1064
    %vm1066 = vweird.f32 %v1058
    %vm1067 = vweird.f32 %v1061
    %vm1068 = vmor %vm1066, %vm1067
    %v1069 = vsel %vm1068, %v1061, %v1065
    %v1070 = vand.u32 2147483647, %v1058
    %vm1071 = vcmp.eq.f32.partialorder %v1070, 8.507059e+37
    %v1072 = vand.u32 %v1058, 2147483648
    %v1073 = vor.u32 1.1754944e-38, %v1072
    %v1074 = vsel %vm1071, %v1073, %v1069
    %v1075 = vmul.f32 1.0, %v1074
    %v1076 = vrcp.pop %v1059
    %v1077 = vmul.f32 %v1059, %v1076
    %v1078 = vsub.f32 1.0, %v1077
    %v1079 = vmul.f32 %v1076, %v1078
    %v1080 = vadd.f32 %v1076, %v1079
    %vm1081 = vweird.f32 %v1059
    %vm1082 = vweird.f32 %v1076
    %vm1083 = vmor %vm1081, %vm1082
    %v1084 = vsel %vm1083, %v1076, %v1080
    %v1085 = vand.u32 2147483647, %v1059
    %vm1086 = vcmp.eq.f32.partialorder %v1085, 8.507059e+37
    %v1087 = vand.u32 %v1059, 2147483648
    %v1088 = vor.u32 1.1754944e-38, %v1087
    %v1089 = vsel %vm1086, %v1088, %v1084
    %v1090 = vmul.f32 1.0, %v1089
    %v1091 = vrcp.pop %v1060
    %v1092 = vmul.f32 %v1060, %v1091
    %v1093 = vsub.f32 1.0, %v1092
    %v1094 = vmul.f32 %v1091, %v1093
    %v1095 = vadd.f32 %v1091, %v1094
    %vm1096 = vweird.f32 %v1060
    %vm1097 = vweird.f32 %v1091
    %vm1098 = vmor %vm1096, %vm1097
    %v1099 = vsel %vm1098, %v1091, %v1095
    %v1100 = vand.u32 2147483647, %v1060
    %vm1101 = vcmp.eq.f32.partialorder %v1100, 8.507059e+37
    %v1102 = vand.u32 %v1060, 2147483648
    %v1103 = vor.u32 1.1754944e-38, %v1102
    %v1104 = vsel %vm1101, %v1103, %v1099
    %v1105 = vmul.f32 1.0, %v1104
    %v1106 = vtanh.pop %v1048
    %v1107 = vmul.f32 %v1090, %v861
    %v1108 = vmul.f32 %v1075, %v1106
    %v1109 = vadd.f32 %v1107, %v1108
    %v1110 = vtanh.pop %v1109
    %v1111 = vmul.f32 %v1105, %v1110
    %1112 = vst [vmem:[#allocation7 + $0x18] sm:$0xff] %v1111
    %s1113 = scalar_lea.vmem %s0, 32
    %v1114 = vld [vmem:[%s1113] sm:$0xff]
    %1115 = vmatpush.msra.mxu0 %v102
    %1116 = vmatpush.msra.mxu0 %v98
    %1117 = vmatpush.msra.mxu0 %v94
    %1118 = vmatpush.msra.mxu0 %v90
    %1119 = vmatpush.msra.mxu0 %v86
    %1120 = vmatpush.msra.mxu0 %v82
    %1121 = vmatpush.msra.mxu0 %v78
    %1122 = vmatpush.msra.mxu0 %v74
    %1123 = vmatpush.msra.mxu0 %v70
    %1124 = vmatpush.msra.mxu0 %v66
    %1125 = vmatpush.msra.mxu0 %v62
    %1126 = vmatpush.msra.mxu0 %v58
    %1127 = vmatpush.msra.mxu0 %v54
    %1128 = vmatpush.msra.mxu0 %v50
    %1129 = vmatpush.msra.mxu0 %v46
    %1130 = vmatpush.msra.mxu0 %v42
    %1131 = vmatmul.f32.gmra.mxu0 %v1111
    %v1132 = vpop.f32.mrf.mxu0
    %v1133 = vadd.f32 0.0, %v1132
    %1134 = vdwg.mxu0
    %1135 = vmatpush.msra.mxu0 %v103
    %1136 = vmatpush.msra.mxu0 %v99
    %1137 = vmatpush.msra.mxu0 %v95
    %1138 = vmatpush.msra.mxu0 %v91
    %1139 = vmatpush.msra.mxu0 %v87
    %1140 = vmatpush.msra.mxu0 %v83
    %1141 = vmatpush.msra.mxu0 %v79
    %1142 = vmatpush.msra.mxu0 %v75
    %1143 = vmatpush.msra.mxu0 %v71
    %1144 = vmatpush.msra.mxu0 %v67
    %1145 = vmatpush.msra.mxu0 %v63
    %1146 = vmatpush.msra.mxu0 %v59
    %1147 = vmatpush.msra.mxu0 %v55
    %1148 = vmatpush.msra.mxu0 %v51
    %1149 = vmatpush.msra.mxu0 %v47
    %1150 = vmatpush.msra.mxu0 %v43
    %1151 = vmatmul.f32.gmra.mxu0 %v1111
    %v1152 = vpop.f32.mrf.mxu0
    %v1153 = vadd.f32 0.0, %v1152
    %1154 = vdwg.mxu0
    %1155 = vmatpush.msra.mxu0 %v104
    %1156 = vmatpush.msra.mxu0 %v100
    %1157 = vmatpush.msra.mxu0 %v96
    %1158 = vmatpush.msra.mxu0 %v92
    %1159 = vmatpush.msra.mxu0 %v88
    %1160 = vmatpush.msra.mxu0 %v84
    %1161 = vmatpush.msra.mxu0 %v80
    %1162 = vmatpush.msra.mxu0 %v76
    %1163 = vmatpush.msra.mxu0 %v72
    %1164 = vmatpush.msra.mxu0 %v68
    %1165 = vmatpush.msra.mxu0 %v64
    %1166 = vmatpush.msra.mxu0 %v60
    %1167 = vmatpush.msra.mxu0 %v56
    %1168 = vmatpush.msra.mxu0 %v52
    %1169 = vmatpush.msra.mxu0 %v48
    %1170 = vmatpush.msra.mxu0 %v44
    %1171 = vmatmul.f32.gmra.mxu0 %v1111
    %v1172 = vpop.f32.mrf.mxu0
    %v1173 = vadd.f32 0.0, %v1172
    %1174 = vdwg.mxu0
    %1175 = vmatpush.msra.mxu0 %v105
    %1176 = vmatpush.msra.mxu0 %v101
    %1177 = vmatpush.msra.mxu0 %v97
    %1178 = vmatpush.msra.mxu0 %v93
    %1179 = vmatpush.msra.mxu0 %v89
    %1180 = vmatpush.msra.mxu0 %v85
    %1181 = vmatpush.msra.mxu0 %v81
    %1182 = vmatpush.msra.mxu0 %v77
    %1183 = vmatpush.msra.mxu0 %v73
    %1184 = vmatpush.msra.mxu0 %v69
    %1185 = vmatpush.msra.mxu0 %v65
    %1186 = vmatpush.msra.mxu0 %v61
    %1187 = vmatpush.msra.mxu0 %v57
    %1188 = vmatpush.msra.mxu0 %v53
    %1189 = vmatpush.msra.mxu0 %v49
    %1190 = vmatpush.msra.mxu0 %v45
    %1191 = vmatmul.f32.gmra.mxu0 %v1111
    %v1192 = vpop.f32.mrf.mxu0
    %v1193 = vadd.f32 0.0, %v1192
    %1194 = vdwg.mxu0
    %1195 = vst [vmem:[#allocation1] ss:$2 sm:$0xff] %v40
    %s1196 = scalar_lea.vmem [#allocation1], 16
    %1197 = vst [vmem:[%s1196] ss:$2 sm:$0xff] %v41
    %v1198 = vld.sshfl [vmem:[#allocation1] sm:$0xff pattern:$0x75316420]
    %v1199 = vld.sshfl [vmem:[#allocation1 + $0x8] sm:$0xff pattern:$0x75316420]
    %v1200 = vld.sshfl [vmem:[#allocation1 + $0x10] sm:$0xff pattern:$0x75316420]
    %v1201 = vld.sshfl [vmem:[#allocation1 + $0x18] sm:$0xff pattern:$0x75316420]
    %v1203 = vsel %vm208, %v1114, 0
    %v1205 = vsel %vm212, %v1198, 0
    %v1207 = vsel %vm212, %v1199, 0
    %v1209 = vsel %vm212, %v1200, 0
    %v1211 = vsel %vm212, %v1201, 0
    %1213 = vmatpush.msra.mxu0 0.0
    %1214 = vmatpush.msra.mxu0 0.0
    %1215 = vmatpush.msra.mxu0 0.0
    %1216 = vmatpush.msra.mxu0 0.0
    %1217 = vmatpush.msra.mxu0 0.0
    %1218 = vmatpush.msra.mxu0 0.0
    %1219 = vmatpush.msra.mxu0 0.0
    %1220 = vmatpush.msra.mxu0 0.0
    %1221 = vmatpush.msra.mxu0 0.0
    %1222 = vmatpush.msra.mxu0 0.0
    %1223 = vmatpush.msra.mxu0 0.0
    %1224 = vmatpush.msra.mxu0 0.0
    %1225 = vmatpush.msra.mxu0 0.0
    %1226 = vmatpush.msra.mxu0 0.0
    %1227 = vmatpush.msra.mxu0 0.0
    %1228 = vmatpush.msra.mxu0 %v1205
    %1229 = vmatmul.f32.gmra.mxu0 %v1203
    %v1230 = vpop.f32.mrf.mxu0
    %v1231 = vadd.f32 %v108, %v1230
    %1232 = vdwg.mxu0
    %1233 = vmatpush.msra.mxu0 0.0
    %1234 = vmatpush.msra.mxu0 0.0
    %1235 = vmatpush.msra.mxu0 0.0
    %1236 = vmatpush.msra.mxu0 0.0
    %1237 = vmatpush.msra.mxu0 0.0
    %1238 = vmatpush.msra.mxu0 0.0
    %1239 = vmatpush.msra.mxu0 0.0
    %1240 = vmatpush.msra.mxu0 0.0
    %1241 = vmatpush.msra.mxu0 0.0
    %1242 = vmatpush.msra.mxu0 0.0
    %1243 = vmatpush.msra.mxu0 0.0
    %1244 = vmatpush.msra.mxu0 0.0
    %1245 = vmatpush.msra.mxu0 0.0
    %1246 = vmatpush.msra.mxu0 0.0
    %1247 = vmatpush.msra.mxu0 0.0
    %1248 = vmatpush.msra.mxu0 %v1207
    %1249 = vmatmul.f32.gmra.mxu0 %v1203
    %v1250 = vpop.f32.mrf.mxu0
    %v1251 = vadd.f32 %v109, %v1250
    %1252 = vdwg.mxu0
    %1253 = vmatpush.msra.mxu0 0.0
    %1254 = vmatpush.msra.mxu0 0.0
    %1255 = vmatpush.msra.mxu0 0.0
    %1256 = vmatpush.msra.mxu0 0.0
    %1257 = vmatpush.msra.mxu0 0.0
    %1258 = vmatpush.msra.mxu0 0.0
    %1259 = vmatpush.msra.mxu0 0.0
    %1260 = vmatpush.msra.mxu0 0.0
    %1261 = vmatpush.msra.mxu0 0.0
    %1262 = vmatpush.msra.mxu0 0.0
    %1263 = vmatpush.msra.mxu0 0.0
    %1264 = vmatpush.msra.mxu0 0.0
    %1265 = vmatpush.msra.mxu0 0.0
    %1266 = vmatpush.msra.mxu0 0.0
    %1267 = vmatpush.msra.mxu0 0.0
    %1268 = vmatpush.msra.mxu0 %v1209
    %1269 = vmatmul.f32.gmra.mxu0 %v1203
    %v1270 = vpop.f32.mrf.mxu0
    %v1271 = vadd.f32 %v110, %v1270
    %1272 = vdwg.mxu0
    %1273 = vmatpush.msra.mxu0 0.0
    %1274 = vmatpush.msra.mxu0 0.0
    %1275 = vmatpush.msra.mxu0 0.0
    %1276 = vmatpush.msra.mxu0 0.0
    %1277 = vmatpush.msra.mxu0 0.0
    %1278 = vmatpush.msra.mxu0 0.0
    %1279 = vmatpush.msra.mxu0 0.0
    %1280 = vmatpush.msra.mxu0 0.0
    %1281 = vmatpush.msra.mxu0 0.0
    %1282 = vmatpush.msra.mxu0 0.0
    %1283 = vmatpush.msra.mxu0 0.0
    %1284 = vmatpush.msra.mxu0 0.0
    %1285 = vmatpush.msra.mxu0 0.0
    %1286 = vmatpush.msra.mxu0 0.0
    %1287 = vmatpush.msra.mxu0 0.0
    %1288 = vmatpush.msra.mxu0 %v1211
    %1289 = vmatmul.f32.gmra.mxu0 %v1203
    %v1290 = vpop.f32.mrf.mxu0
    %v1291 = vadd.f32 %v111, %v1290
    %1292 = vdwg.mxu0
    %v1293 = vadd.f32 %v1231, %v1133
    %v1294 = vadd.f32 %v1251, %v1153
    %v1295 = vadd.f32 %v1271, %v1173
    %v1296 = vadd.f32 %v1291, %v1193
    %v1297 = vsub.f32 0.0, %v1293
    %v1298 = vsub.f32 0.0, %v1294
    %v1299 = vsub.f32 0.0, %v1295
    %v1300 = vmul.f32 %v1297, 1.442695
    %v1301 = vpow.pop %v1300
    %v1302 = vmul.f32 %v1298, 1.442695
    %v1303 = vpow.pop %v1302
    %v1304 = vmul.f32 %v1299, 1.442695
    %v1305 = vpow.pop %v1304
    %v1306 = vadd.f32 %v1301, 1.0
    %v1307 = vadd.f32 %v1303, 1.0
    %v1308 = vadd.f32 %v1305, 1.0
    %v1309 = vrcp.pop %v1306
    %v1310 = vmul.f32 %v1306, %v1309
    %v1311 = vsub.f32 1.0, %v1310
    %v1312 = vmul.f32 %v1309, %v1311
    %v1313 = vadd.f32 %v1309, %v1312
    %vm1314 = vweird.f32 %v1306
    %vm1315 = vweird.f32 %v1309
    %vm1316 = vmor %vm1314, %vm1315
    %v1317 = vsel %vm1316, %v1309, %v1313
    %v1318 = vand.u32 2147483647, %v1306
    %vm1319 = vcmp.eq.f32.partialorder %v1318, 8.507059e+37
    %v1320 = vand.u32 %v1306, 2147483648
    %v1321 = vor.u32 1.1754944e-38, %v1320
    %v1322 = vsel %vm1319, %v1321, %v1317
    %v1323 = vmul.f32 1.0, %v1322
    %v1324 = vrcp.pop %v1307
    %v1325 = vmul.f32 %v1307, %v1324
    %v1326 = vsub.f32 1.0, %v1325
    %v1327 = vmul.f32 %v1324, %v1326
    %v1328 = vadd.f32 %v1324, %v1327
    %vm1329 = vweird.f32 %v1307
    %vm1330 = vweird.f32 %v1324
    %vm1331 = vmor %vm1329, %vm1330
    %v1332 = vsel %vm1331, %v1324, %v1328
    %v1333 = vand.u32 2147483647, %v1307
    %vm1334 = vcmp.eq.f32.partialorder %v1333, 8.507059e+37
    %v1335 = vand.u32 %v1307, 2147483648
    %v1336 = vor.u32 1.1754944e-38, %v1335
    %v1337 = vsel %vm1334, %v1336, %v1332
    %v1338 = vmul.f32 1.0, %v1337
    %v1339 = vrcp.pop %v1308
    %v1340 = vmul.f32 %v1308, %v1339
    %v1341 = vsub.f32 1.0, %v1340
    %v1342 = vmul.f32 %v1339, %v1341
    %v1343 = vadd.f32 %v1339, %v1342
    %vm1344 = vweird.f32 %v1308
    %vm1345 = vweird.f32 %v1339
    %vm1346 = vmor %vm1344, %vm1345
    %v1347 = vsel %vm1346, %v1339, %v1343
    %v1348 = vand.u32 2147483647, %v1308
    %vm1349 = vcmp.eq.f32.partialorder %v1348, 8.507059e+37
    %v1350 = vand.u32 %v1308, 2147483648
    %v1351 = vor.u32 1.1754944e-38, %v1350
    %v1352 = vsel %vm1349, %v1351, %v1347
    %v1353 = vmul.f32 1.0, %v1352
    %v1354 = vtanh.pop %v1296
    %v1355 = vmul.f32 %v1338, %v1109
    %v1356 = vmul.f32 %v1323, %v1354
    %v1357 = vadd.f32 %v1355, %v1356
    %v1358 = vtanh.pop %v1357
    %v1359 = vmul.f32 %v1353, %v1358
    %1360 = vst [vmem:[#allocation7 + $0x20] sm:$0xff] %v1359
    %s1361 = scalar_lea.vmem %s0, 40
    %v1362 = vld [vmem:[%s1361] sm:$0xff]
    %1363 = vmatpush.msra.mxu0 %v102
    %1364 = vmatpush.msra.mxu0 %v98
    %1365 = vmatpush.msra.mxu0 %v94
    %1366 = vmatpush.msra.mxu0 %v90
    %1367 = vmatpush.msra.mxu0 %v86
    %1368 = vmatpush.msra.mxu0 %v82
    %1369 = vmatpush.msra.mxu0 %v78
    %1370 = vmatpush.msra.mxu0 %v74
    %1371 = vmatpush.msra.mxu0 %v70
    %1372 = vmatpush.msra.mxu0 %v66
    %1373 = vmatpush.msra.mxu0 %v62
    %1374 = vmatpush.msra.mxu0 %v58
    %1375 = vmatpush.msra.mxu0 %v54
    %1376 = vmatpush.msra.mxu0 %v50
    %1377 = vmatpush.msra.mxu0 %v46
    %1378 = vmatpush.msra.mxu0 %v42
    %1379 = vmatmul.f32.gmra.mxu0 %v1359
    %v1380 = vpop.f32.mrf.mxu0
    %v1381 = vadd.f32 0.0, %v1380
    %1382 = vdwg.mxu0
    %1383 = vmatpush.msra.mxu0 %v103
    %1384 = vmatpush.msra.mxu0 %v99
    %1385 = vmatpush.msra.mxu0 %v95
    %1386 = vmatpush.msra.mxu0 %v91
    %1387 = vmatpush.msra.mxu0 %v87
    %1388 = vmatpush.msra.mxu0 %v83
    %1389 = vmatpush.msra.mxu0 %v79
    %1390 = vmatpush.msra.mxu0 %v75
    %1391 = vmatpush.msra.mxu0 %v71
    %1392 = vmatpush.msra.mxu0 %v67
    %1393 = vmatpush.msra.mxu0 %v63
    %1394 = vmatpush.msra.mxu0 %v59
    %1395 = vmatpush.msra.mxu0 %v55
    %1396 = vmatpush.msra.mxu0 %v51
    %1397 = vmatpush.msra.mxu0 %v47
    %1398 = vmatpush.msra.mxu0 %v43
    %1399 = vmatmul.f32.gmra.mxu0 %v1359
    %v1400 = vpop.f32.mrf.mxu0
    %v1401 = vadd.f32 0.0, %v1400
    %1402 = vdwg.mxu0
    %1403 = vmatpush.msra.mxu0 %v104
    %1404 = vmatpush.msra.mxu0 %v100
    %1405 = vmatpush.msra.mxu0 %v96
    %1406 = vmatpush.msra.mxu0 %v92
    %1407 = vmatpush.msra.mxu0 %v88
    %1408 = vmatpush.msra.mxu0 %v84
    %1409 = vmatpush.msra.mxu0 %v80
    %1410 = vmatpush.msra.mxu0 %v76
    %1411 = vmatpush.msra.mxu0 %v72
    %1412 = vmatpush.msra.mxu0 %v68
    %1413 = vmatpush.msra.mxu0 %v64
    %1414 = vmatpush.msra.mxu0 %v60
    %1415 = vmatpush.msra.mxu0 %v56
    %1416 = vmatpush.msra.mxu0 %v52
    %1417 = vmatpush.msra.mxu0 %v48
    %1418 = vmatpush.msra.mxu0 %v44
    %1419 = vmatmul.f32.gmra.mxu0 %v1359
    %v1420 = vpop.f32.mrf.mxu0
    %v1421 = vadd.f32 0.0, %v1420
    %1422 = vdwg.mxu0
    %1423 = vmatpush.msra.mxu0 %v105
    %1424 = vmatpush.msra.mxu0 %v101
    %1425 = vmatpush.msra.mxu0 %v97
    %1426 = vmatpush.msra.mxu0 %v93
    %1427 = vmatpush.msra.mxu0 %v89
    %1428 = vmatpush.msra.mxu0 %v85
    %1429 = vmatpush.msra.mxu0 %v81
    %1430 = vmatpush.msra.mxu0 %v77
    %1431 = vmatpush.msra.mxu0 %v73
    %1432 = vmatpush.msra.mxu0 %v69
    %1433 = vmatpush.msra.mxu0 %v65
    %1434 = vmatpush.msra.mxu0 %v61
    %1435 = vmatpush.msra.mxu0 %v57
    %1436 = vmatpush.msra.mxu0 %v53
    %1437 = vmatpush.msra.mxu0 %v49
    %1438 = vmatpush.msra.mxu0 %v45
    %1439 = vmatmul.f32.gmra.mxu0 %v1359
    %v1440 = vpop.f32.mrf.mxu0
    %v1441 = vadd.f32 0.0, %v1440
    %1442 = vdwg.mxu0
    %1443 = vst [vmem:[#allocation1] ss:$2 sm:$0xff] %v40
    %s1444 = scalar_lea.vmem [#allocation1], 16
    %1445 = vst [vmem:[%s1444] ss:$2 sm:$0xff] %v41
    %v1446 = vld.sshfl [vmem:[#allocation1] sm:$0xff pattern:$0x75316420]
    %v1447 = vld.sshfl [vmem:[#allocation1 + $0x8] sm:$0xff pattern:$0x75316420]
    %v1448 = vld.sshfl [vmem:[#allocation1 + $0x10] sm:$0xff pattern:$0x75316420]
    %v1449 = vld.sshfl [vmem:[#allocation1 + $0x18] sm:$0xff pattern:$0x75316420]
    %v1451 = vsel %vm208, %v1362, 0
    %v1453 = vsel %vm212, %v1446, 0
    %v1455 = vsel %vm212, %v1447, 0
    %v1457 = vsel %vm212, %v1448, 0
    %v1459 = vsel %vm212, %v1449, 0
    %1461 = vmatpush.msra.mxu0 0.0
    %1462 = vmatpush.msra.mxu0 0.0
    %1463 = vmatpush.msra.mxu0 0.0
    %1464 = vmatpush.msra.mxu0 0.0
    %1465 = vmatpush.msra.mxu0 0.0
    %1466 = vmatpush.msra.mxu0 0.0
    %1467 = vmatpush.msra.mxu0 0.0
    %1468 = vmatpush.msra.mxu0 0.0
    %1469 = vmatpush.msra.mxu0 0.0
    %1470 = vmatpush.msra.mxu0 0.0
    %1471 = vmatpush.msra.mxu0 0.0
    %1472 = vmatpush.msra.mxu0 0.0
    %1473 = vmatpush.msra.mxu0 0.0
    %1474 = vmatpush.msra.mxu0 0.0
    %1475 = vmatpush.msra.mxu0 0.0
    %1476 = vmatpush.msra.mxu0 %v1453
    %1477 = vmatmul.f32.gmra.mxu0 %v1451
    %v1478 = vpop.f32.mrf.mxu0
    %v1479 = vadd.f32 %v108, %v1478
    %1480 = vdwg.mxu0
    %1481 = vmatpush.msra.mxu0 0.0
    %1482 = vmatpush.msra.mxu0 0.0
    %1483 = vmatpush.msra.mxu0 0.0
    %1484 = vmatpush.msra.mxu0 0.0
    %1485 = vmatpush.msra.mxu0 0.0
    %1486 = vmatpush.msra.mxu0 0.0
    %1487 = vmatpush.msra.mxu0 0.0
    %1488 = vmatpush.msra.mxu0 0.0
    %1489 = vmatpush.msra.mxu0 0.0
    %1490 = vmatpush.msra.mxu0 0.0
    %1491 = vmatpush.msra.mxu0 0.0
    %1492 = vmatpush.msra.mxu0 0.0
    %1493 = vmatpush.msra.mxu0 0.0
    %1494 = vmatpush.msra.mxu0 0.0
    %1495 = vmatpush.msra.mxu0 0.0
    %1496 = vmatpush.msra.mxu0 %v1455
    %1497 = vmatmul.f32.gmra.mxu0 %v1451
    %v1498 = vpop.f32.mrf.mxu0
    %v1499 = vadd.f32 %v109, %v1498
    %1500 = vdwg.mxu0
    %1501 = vmatpush.msra.mxu0 0.0
    %1502 = vmatpush.msra.mxu0 0.0
    %1503 = vmatpush.msra.mxu0 0.0
    %1504 = vmatpush.msra.mxu0 0.0
    %1505 = vmatpush.msra.mxu0 0.0
    %1506 = vmatpush.msra.mxu0 0.0
    %1507 = vmatpush.msra.mxu0 0.0
    %1508 = vmatpush.msra.mxu0 0.0
    %1509 = vmatpush.msra.mxu0 0.0
    %1510 = vmatpush.msra.mxu0 0.0
    %1511 = vmatpush.msra.mxu0 0.0
    %1512 = vmatpush.msra.mxu0 0.0
    %1513 = vmatpush.msra.mxu0 0.0
    %1514 = vmatpush.msra.mxu0 0.0
    %1515 = vmatpush.msra.mxu0 0.0
    %1516 = vmatpush.msra.mxu0 %v1457
    %1517 = vmatmul.f32.gmra.mxu0 %v1451
    %v1518 = vpop.f32.mrf.mxu0
    %v1519 = vadd.f32 %v110, %v1518
    %1520 = vdwg.mxu0
    %1521 = vmatpush.msra.mxu0 0.0
    %1522 = vmatpush.msra.mxu0 0.0
    %1523 = vmatpush.msra.mxu0 0.0
    %1524 = vmatpush.msra.mxu0 0.0
    %1525 = vmatpush.msra.mxu0 0.0
    %1526 = vmatpush.msra.mxu0 0.0
    %1527 = vmatpush.msra.mxu0 0.0
    %1528 = vmatpush.msra.mxu0 0.0
    %1529 = vmatpush.msra.mxu0 0.0
    %1530 = vmatpush.msra.mxu0 0.0
    %1531 = vmatpush.msra.mxu0 0.0
    %1532 = vmatpush.msra.mxu0 0.0
    %1533 = vmatpush.msra.mxu0 0.0
    %1534 = vmatpush.msra.mxu0 0.0
    %1535 = vmatpush.msra.mxu0 0.0
    %1536 = vmatpush.msra.mxu0 %v1459
    %1537 = vmatmul.f32.gmra.mxu0 %v1451
    %v1538 = vpop.f32.mrf.mxu0
    %v1539 = vadd.f32 %v111, %v1538
    %1540 = vdwg.mxu0
    %v1541 = vadd.f32 %v1479, %v1381
    %v1542 = vadd.f32 %v1499, %v1401
    %v1543 = vadd.f32 %v1519, %v1421
    %v1544 = vadd.f32 %v1539, %v1441
    %v1545 = vsub.f32 0.0, %v1541
    %v1546 = vsub.f32 0.0, %v1542
    %v1547 = vsub.f32 0.0, %v1543
    %v1548 = vmul.f32 %v1545, 1.442695
    %v1549 = vpow.pop %v1548
    %v1550 = vmul.f32 %v1546, 1.442695
    %v1551 = vpow.pop %v1550
    %v1552 = vmul.f32 %v1547, 1.442695
    %v1553 = vpow.pop %v1552
    %v1554 = vadd.f32 %v1549, 1.0
    %v1555 = vadd.f32 %v1551, 1.0
    %v1556 = vadd.f32 %v1553, 1.0
    %v1557 = vrcp.pop %v1554
    %v1558 = vmul.f32 %v1554, %v1557
    %v1559 = vsub.f32 1.0, %v1558
    %v1560 = vmul.f32 %v1557, %v1559
    %v1561 = vadd.f32 %v1557, %v1560
    %vm1562 = vweird.f32 %v1554
    %vm1563 = vweird.f32 %v1557
    %vm1564 = vmor %vm1562, %vm1563
    %v1565 = vsel %vm1564, %v1557, %v1561
    %v1566 = vand.u32 2147483647, %v1554
    %vm1567 = vcmp.eq.f32.partialorder %v1566, 8.507059e+37
    %v1568 = vand.u32 %v1554, 2147483648
    %v1569 = vor.u32 1.1754944e-38, %v1568
    %v1570 = vsel %vm1567, %v1569, %v1565
    %v1571 = vmul.f32 1.0, %v1570
    %v1572 = vrcp.pop %v1555
    %v1573 = vmul.f32 %v1555, %v1572
    %v1574 = vsub.f32 1.0, %v1573
    %v1575 = vmul.f32 %v1572, %v1574
    %v1576 = vadd.f32 %v1572, %v1575
    %vm1577 = vweird.f32 %v1555
    %vm1578 = vweird.f32 %v1572
    %vm1579 = vmor %vm1577, %vm1578
    %v1580 = vsel %vm1579, %v1572, %v1576
    %v1581 = vand.u32 2147483647, %v1555
    %vm1582 = vcmp.eq.f32.partialorder %v1581, 8.507059e+37
    %v1583 = vand.u32 %v1555, 2147483648
    %v1584 = vor.u32 1.1754944e-38, %v1583
    %v1585 = vsel %vm1582, %v1584, %v1580
    %v1586 = vmul.f32 1.0, %v1585
    %v1587 = vrcp.pop %v1556
    %v1588 = vmul.f32 %v1556, %v1587
    %v1589 = vsub.f32 1.0, %v1588
    %v1590 = vmul.f32 %v1587, %v1589
    %v1591 = vadd.f32 %v1587, %v1590
    %vm1592 = vweird.f32 %v1556
    %vm1593 = vweird.f32 %v1587
    %vm1594 = vmor %vm1592, %vm1593
    %v1595 = vsel %vm1594, %v1587, %v1591
    %v1596 = vand.u32 2147483647, %v1556
    %vm1597 = vcmp.eq.f32.partialorder %v1596, 8.507059e+37
    %v1598 = vand.u32 %v1556, 2147483648
    %v1599 = vor.u32 1.1754944e-38, %v1598
    %v1600 = vsel %vm1597, %v1599, %v1595
    %v1601 = vmul.f32 1.0, %v1600
    %v1602 = vtanh.pop %v1544
    %v1603 = vmul.f32 %v1586, %v1357
    %v1604 = vmul.f32 %v1571, %v1602
    %v1605 = vadd.f32 %v1603, %v1604
    %v1606 = vtanh.pop %v1605
    %v1607 = vmul.f32 %v1601, %v1606
    %1608 = vst [vmem:[#allocation7 + $0x28] sm:$0xff] %v1607
    %s1609 = scalar_lea.vmem %s0, 48
    %v1610 = vld [vmem:[%s1609] sm:$0xff]
    %1611 = vmatpush.msra.mxu0 %v102
    %1612 = vmatpush.msra.mxu0 %v98
    %1613 = vmatpush.msra.mxu0 %v94
    %1614 = vmatpush.msra.mxu0 %v90
    %1615 = vmatpush.msra.mxu0 %v86
    %1616 = vmatpush.msra.mxu0 %v82
    %1617 = vmatpush.msra.mxu0 %v78
    %1618 = vmatpush.msra.mxu0 %v74
    %1619 = vmatpush.msra.mxu0 %v70
    %1620 = vmatpush.msra.mxu0 %v66
    %1621 = vmatpush.msra.mxu0 %v62
    %1622 = vmatpush.msra.mxu0 %v58
    %1623 = vmatpush.msra.mxu0 %v54
    %1624 = vmatpush.msra.mxu0 %v50
    %1625 = vmatpush.msra.mxu0 %v46
    %1626 = vmatpush.msra.mxu0 %v42
    %1627 = vmatmul.f32.gmra.mxu0 %v1607
    %v1628 = vpop.f32.mrf.mxu0
    %v1629 = vadd.f32 0.0, %v1628
    %1630 = vdwg.mxu0
    %1631 = vmatpush.msra.mxu0 %v103
    %1632 = vmatpush.msra.mxu0 %v99
    %1633 = vmatpush.msra.mxu0 %v95
    %1634 = vmatpush.msra.mxu0 %v91
    %1635 = vmatpush.msra.mxu0 %v87
    %1636 = vmatpush.msra.mxu0 %v83
    %1637 = vmatpush.msra.mxu0 %v79
    %1638 = vmatpush.msra.mxu0 %v75
    %1639 = vmatpush.msra.mxu0 %v71
    %1640 = vmatpush.msra.mxu0 %v67
    %1641 = vmatpush.msra.mxu0 %v63
    %1642 = vmatpush.msra.mxu0 %v59
    %1643 = vmatpush.msra.mxu0 %v55
    %1644 = vmatpush.msra.mxu0 %v51
    %1645 = vmatpush.msra.mxu0 %v47
    %1646 = vmatpush.msra.mxu0 %v43
    %1647 = vmatmul.f32.gmra.mxu0 %v1607
    %v1648 = vpop.f32.mrf.mxu0
    %v1649 = vadd.f32 0.0, %v1648
    %1650 = vdwg.mxu0
    %1651 = vmatpush.msra.mxu0 %v104
    %1652 = vmatpush.msra.mxu0 %v100
    %1653 = vmatpush.msra.mxu0 %v96
    %1654 = vmatpush.msra.mxu0 %v92
    %1655 = vmatpush.msra.mxu0 %v88
    %1656 = vmatpush.msra.mxu0 %v84
    %1657 = vmatpush.msra.mxu0 %v80
    %1658 = vmatpush.msra.mxu0 %v76
    %1659 = vmatpush.msra.mxu0 %v72
    %1660 = vmatpush.msra.mxu0 %v68
    %1661 = vmatpush.msra.mxu0 %v64
    %1662 = vmatpush.msra.mxu0 %v60
    %1663 = vmatpush.msra.mxu0 %v56
    %1664 = vmatpush.msra.mxu0 %v52
    %1665 = vmatpush.msra.mxu0 %v48
    %1666 = vmatpush.msra.mxu0 %v44
    %1667 = vmatmul.f32.gmra.mxu0 %v1607
    %v1668 = vpop.f32.mrf.mxu0
    %v1669 = vadd.f32 0.0, %v1668
    %1670 = vdwg.mxu0
    %1671 = vmatpush.msra.mxu0 %v105
    %1672 = vmatpush.msra.mxu0 %v101
    %1673 = vmatpush.msra.mxu0 %v97
    %1674 = vmatpush.msra.mxu0 %v93
    %1675 = vmatpush.msra.mxu0 %v89
    %1676 = vmatpush.msra.mxu0 %v85
    %1677 = vmatpush.msra.mxu0 %v81
    %1678 = vmatpush.msra.mxu0 %v77
    %1679 = vmatpush.msra.mxu0 %v73
    %1680 = vmatpush.msra.mxu0 %v69
    %1681 = vmatpush.msra.mxu0 %v65
    %1682 = vmatpush.msra.mxu0 %v61
    %1683 = vmatpush.msra.mxu0 %v57
    %1684 = vmatpush.msra.mxu0 %v53
    %1685 = vmatpush.msra.mxu0 %v49
    %1686 = vmatpush.msra.mxu0 %v45
    %1687 = vmatmul.f32.gmra.mxu0 %v1607
    %v1688 = vpop.f32.mrf.mxu0
    %v1689 = vadd.f32 0.0, %v1688
    %1690 = vdwg.mxu0
    %1691 = vst [vmem:[#allocation1] ss:$2 sm:$0xff] %v40
    %s1692 = scalar_lea.vmem [#allocation1], 16
    %1693 = vst [vmem:[%s1692] ss:$2 sm:$0xff] %v41
    %v1694 = vld.sshfl [vmem:[#allocation1] sm:$0xff pattern:$0x75316420]
    %v1695 = vld.sshfl [vmem:[#allocation1 + $0x8] sm:$0xff pattern:$0x75316420]
    %v1696 = vld.sshfl [vmem:[#allocation1 + $0x10] sm:$0xff pattern:$0x75316420]
    %v1697 = vld.sshfl [vmem:[#allocation1 + $0x18] sm:$0xff pattern:$0x75316420]
    %v1699 = vsel %vm208, %v1610, 0
    %v1701 = vsel %vm212, %v1694, 0
    %v1703 = vsel %vm212, %v1695, 0
    %v1705 = vsel %vm212, %v1696, 0
    %v1707 = vsel %vm212, %v1697, 0
    %1709 = vmatpush.msra.mxu0 0.0
    %1710 = vmatpush.msra.mxu0 0.0
    %1711 = vmatpush.msra.mxu0 0.0
    %1712 = vmatpush.msra.mxu0 0.0
    %1713 = vmatpush.msra.mxu0 0.0
    %1714 = vmatpush.msra.mxu0 0.0
    %1715 = vmatpush.msra.mxu0 0.0
    %1716 = vmatpush.msra.mxu0 0.0
    %1717 = vmatpush.msra.mxu0 0.0
    %1718 = vmatpush.msra.mxu0 0.0
    %1719 = vmatpush.msra.mxu0 0.0
    %1720 = vmatpush.msra.mxu0 0.0
    %1721 = vmatpush.msra.mxu0 0.0
    %1722 = vmatpush.msra.mxu0 0.0
    %1723 = vmatpush.msra.mxu0 0.0
    %1724 = vmatpush.msra.mxu0 %v1701
    %1725 = vmatmul.f32.gmra.mxu0 %v1699
    %v1726 = vpop.f32.mrf.mxu0
    %v1727 = vadd.f32 %v108, %v1726
    %1728 = vdwg.mxu0
    %1729 = vmatpush.msra.mxu0 0.0
    %1730 = vmatpush.msra.mxu0 0.0
    %1731 = vmatpush.msra.mxu0 0.0
    %1732 = vmatpush.msra.mxu0 0.0
    %1733 = vmatpush.msra.mxu0 0.0
    %1734 = vmatpush.msra.mxu0 0.0
    %1735 = vmatpush.msra.mxu0 0.0
    %1736 = vmatpush.msra.mxu0 0.0
    %1737 = vmatpush.msra.mxu0 0.0
    %1738 = vmatpush.msra.mxu0 0.0
    %1739 = vmatpush.msra.mxu0 0.0
    %1740 = vmatpush.msra.mxu0 0.0
    %1741 = vmatpush.msra.mxu0 0.0
    %1742 = vmatpush.msra.mxu0 0.0
    %1743 = vmatpush.msra.mxu0 0.0
    %1744 = vmatpush.msra.mxu0 %v1703
    %1745 = vmatmul.f32.gmra.mxu0 %v1699
    %v1746 = vpop.f32.mrf.mxu0
    %v1747 = vadd.f32 %v109, %v1746
    %1748 = vdwg.mxu0
    %1749 = vmatpush.msra.mxu0 0.0
    %1750 = vmatpush.msra.mxu0 0.0
    %1751 = vmatpush.msra.mxu0 0.0
    %1752 = vmatpush.msra.mxu0 0.0
    %1753 = vmatpush.msra.mxu0 0.0
    %1754 = vmatpush.msra.mxu0 0.0
    %1755 = vmatpush.msra.mxu0 0.0
    %1756 = vmatpush.msra.mxu0 0.0
    %1757 = vmatpush.msra.mxu0 0.0
    %1758 = vmatpush.msra.mxu0 0.0
    %1759 = vmatpush.msra.mxu0 0.0
    %1760 = vmatpush.msra.mxu0 0.0
    %1761 = vmatpush.msra.mxu0 0.0
    %1762 = vmatpush.msra.mxu0 0.0
    %1763 = vmatpush.msra.mxu0 0.0
    %1764 = vmatpush.msra.mxu0 %v1705
    %1765 = vmatmul.f32.gmra.mxu0 %v1699
    %v1766 = vpop.f32.mrf.mxu0
    %v1767 = vadd.f32 %v110, %v1766
    %1768 = vdwg.mxu0
    %1769 = vmatpush.msra.mxu0 0.0
    %1770 = vmatpush.msra.mxu0 0.0
    %1771 = vmatpush.msra.mxu0 0.0
    %1772 = vmatpush.msra.mxu0 0.0
    %1773 = vmatpush.msra.mxu0 0.0
    %1774 = vmatpush.msra.mxu0 0.0
    %1775 = vmatpush.msra.mxu0 0.0
    %1776 = vmatpush.msra.mxu0 0.0
    %1777 = vmatpush.msra.mxu0 0.0
    %1778 = vmatpush.msra.mxu0 0.0
    %1779 = vmatpush.msra.mxu0 0.0
    %1780 = vmatpush.msra.mxu0 0.0
    %1781 = vmatpush.msra.mxu0 0.0
    %1782 = vmatpush.msra.mxu0 0.0
    %1783 = vmatpush.msra.mxu0 0.0
    %1784 = vmatpush.msra.mxu0 %v1707
    %1785 = vmatmul.f32.gmra.mxu0 %v1699
    %v1786 = vpop.f32.mrf.mxu0
    %v1787 = vadd.f32 %v111, %v1786
    %1788 = vdwg.mxu0
    %v1789 = vadd.f32 %v1727, %v1629
    %v1790 = vadd.f32 %v1747, %v1649
    %v1791 = vadd.f32 %v1767, %v1669
    %v1792 = vadd.f32 %v1787, %v1689
    %v1793 = vsub.f32 0.0, %v1789
    %v1794 = vsub.f32 0.0, %v1790
    %v1795 = vsub.f32 0.0, %v1791
    %v1796 = vmul.f32 %v1793, 1.442695
    %v1797 = vpow.pop %v1796
    %v1798 = vmul.f32 %v1794, 1.442695
    %v1799 = vpow.pop %v1798
    %v1800 = vmul.f32 %v1795, 1.442695
    %v1801 = vpow.pop %v1800
    %v1802 = vadd.f32 %v1797, 1.0
    %v1803 = vadd.f32 %v1799, 1.0
    %v1804 = vadd.f32 %v1801, 1.0
    %v1805 = vrcp.pop %v1802
    %v1806 = vmul.f32 %v1802, %v1805
    %v1807 = vsub.f32 1.0, %v1806
    %v1808 = vmul.f32 %v1805, %v1807
    %v1809 = vadd.f32 %v1805, %v1808
    %vm1810 = vweird.f32 %v1802
    %vm1811 = vweird.f32 %v1805
    %vm1812 = vmor %vm1810, %vm1811
    %v1813 = vsel %vm1812, %v1805, %v1809
    %v1814 = vand.u32 2147483647, %v1802
    %vm1815 = vcmp.eq.f32.partialorder %v1814, 8.507059e+37
    %v1816 = vand.u32 %v1802, 2147483648
    %v1817 = vor.u32 1.1754944e-38, %v1816
    %v1818 = vsel %vm1815, %v1817, %v1813
    %v1819 = vmul.f32 1.0, %v1818
    %v1820 = vrcp.pop %v1803
    %v1821 = vmul.f32 %v1803, %v1820
    %v1822 = vsub.f32 1.0, %v1821
    %v1823 = vmul.f32 %v1820, %v1822
    %v1824 = vadd.f32 %v1820, %v1823
    %vm1825 = vweird.f32 %v1803
    %vm1826 = vweird.f32 %v1820
    %vm1827 = vmor %vm1825, %vm1826
    %v1828 = vsel %vm1827, %v1820, %v1824
    %v1829 = vand.u32 2147483647, %v1803
    %vm1830 = vcmp.eq.f32.partialorder %v1829, 8.507059e+37
    %v1831 = vand.u32 %v1803, 2147483648
    %v1832 = vor.u32 1.1754944e-38, %v1831
    %v1833 = vsel %vm1830, %v1832, %v1828
    %v1834 = vmul.f32 1.0, %v1833
    %v1835 = vrcp.pop %v1804
    %v1836 = vmul.f32 %v1804, %v1835
    %v1837 = vsub.f32 1.0, %v1836
    %v1838 = vmul.f32 %v1835, %v1837
    %v1839 = vadd.f32 %v1835, %v1838
    %vm1840 = vweird.f32 %v1804
    %vm1841 = vweird.f32 %v1835
    %vm1842 = vmor %vm1840, %vm1841
    %v1843 = vsel %vm1842, %v1835, %v1839
    %v1844 = vand.u32 2147483647, %v1804
    %vm1845 = vcmp.eq.f32.partialorder %v1844, 8.507059e+37
    %v1846 = vand.u32 %v1804, 2147483648
    %v1847 = vor.u32 1.1754944e-38, %v1846
    %v1848 = vsel %vm1845, %v1847, %v1843
    %v1849 = vmul.f32 1.0, %v1848
    %v1850 = vtanh.pop %v1792
    %v1851 = vmul.f32 %v1834, %v1605
    %v1852 = vmul.f32 %v1819, %v1850
    %v1853 = vadd.f32 %v1851, %v1852
    %v1854 = vtanh.pop %v1853
    %v1855 = vmul.f32 %v1849, %v1854
    %1856 = vst [vmem:[#allocation7 + $0x30] sm:$0xff] %v1855
    %s1857 = scalar_lea.vmem %s0, 56
    %v1858 = vld [vmem:[%s1857] sm:$0xff]
    %1859 = vmatpush.msra.mxu0 %v102
    %1860 = vmatpush.msra.mxu0 %v98
    %1861 = vmatpush.msra.mxu0 %v94
    %1862 = vmatpush.msra.mxu0 %v90
    %1863 = vmatpush.msra.mxu0 %v86
    %1864 = vmatpush.msra.mxu0 %v82
    %1865 = vmatpush.msra.mxu0 %v78
    %1866 = vmatpush.msra.mxu0 %v74
    %1867 = vmatpush.msra.mxu0 %v70
    %1868 = vmatpush.msra.mxu0 %v66
    %1869 = vmatpush.msra.mxu0 %v62
    %1870 = vmatpush.msra.mxu0 %v58
    %1871 = vmatpush.msra.mxu0 %v54
    %1872 = vmatpush.msra.mxu0 %v50
    %1873 = vmatpush.msra.mxu0 %v46
    %1874 = vmatpush.msra.mxu0 %v42
    %1875 = vmatmul.f32.gmra.mxu0 %v1855
    %v1876 = vpop.f32.mrf.mxu0
    %v1877 = vadd.f32 0.0, %v1876
    %1878 = vdwg.mxu0
    %1879 = vmatpush.msra.mxu0 %v103
    %1880 = vmatpush.msra.mxu0 %v99
    %1881 = vmatpush.msra.mxu0 %v95
    %1882 = vmatpush.msra.mxu0 %v91
    %1883 = vmatpush.msra.mxu0 %v87
    %1884 = vmatpush.msra.mxu0 %v83
    %1885 = vmatpush.msra.mxu0 %v79
    %1886 = vmatpush.msra.mxu0 %v75
    %1887 = vmatpush.msra.mxu0 %v71
    %1888 = vmatpush.msra.mxu0 %v67
    %1889 = vmatpush.msra.mxu0 %v63
    %1890 = vmatpush.msra.mxu0 %v59
    %1891 = vmatpush.msra.mxu0 %v55
    %1892 = vmatpush.msra.mxu0 %v51
    %1893 = vmatpush.msra.mxu0 %v47
    %1894 = vmatpush.msra.mxu0 %v43
    %1895 = vmatmul.f32.gmra.mxu0 %v1855
    %v1896 = vpop.f32.mrf.mxu0
    %v1897 = vadd.f32 0.0, %v1896
    %1898 = vdwg.mxu0
    %1899 = vmatpush.msra.mxu0 %v104
    %1900 = vmatpush.msra.mxu0 %v100
    %1901 = vmatpush.msra.mxu0 %v96
    %1902 = vmatpush.msra.mxu0 %v92
    %1903 = vmatpush.msra.mxu0 %v88
    %1904 = vmatpush.msra.mxu0 %v84
    %1905 = vmatpush.msra.mxu0 %v80
    %1906 = vmatpush.msra.mxu0 %v76
    %1907 = vmatpush.msra.mxu0 %v72
    %1908 = vmatpush.msra.mxu0 %v68
    %1909 = vmatpush.msra.mxu0 %v64
    %1910 = vmatpush.msra.mxu0 %v60
    %1911 = vmatpush.msra.mxu0 %v56
    %1912 = vmatpush.msra.mxu0 %v52
    %1913 = vmatpush.msra.mxu0 %v48
    %1914 = vmatpush.msra.mxu0 %v44
    %1915 = vmatmul.f32.gmra.mxu0 %v1855
    %v1916 = vpop.f32.mrf.mxu0
    %v1917 = vadd.f32 0.0, %v1916
    %1918 = vdwg.mxu0
    %1919 = vmatpush.msra.mxu0 %v105
    %1920 = vmatpush.msra.mxu0 %v101
    %1921 = vmatpush.msra.mxu0 %v97
    %1922 = vmatpush.msra.mxu0 %v93
    %1923 = vmatpush.msra.mxu0 %v89
    %1924 = vmatpush.msra.mxu0 %v85
    %1925 = vmatpush.msra.mxu0 %v81
    %1926 = vmatpush.msra.mxu0 %v77
    %1927 = vmatpush.msra.mxu0 %v73
    %1928 = vmatpush.msra.mxu0 %v69
    %1929 = vmatpush.msra.mxu0 %v65
    %1930 = vmatpush.msra.mxu0 %v61
    %1931 = vmatpush.msra.mxu0 %v57
    %1932 = vmatpush.msra.mxu0 %v53
    %1933 = vmatpush.msra.mxu0 %v49
    %1934 = vmatpush.msra.mxu0 %v45
    %1935 = vmatmul.f32.gmra.mxu0 %v1855
    %v1936 = vpop.f32.mrf.mxu0
    %v1937 = vadd.f32 0.0, %v1936
    %1938 = vdwg.mxu0
    %1939 = vst [vmem:[#allocation1] ss:$2 sm:$0xff] %v40
    %s1940 = scalar_lea.vmem [#allocation1], 16
    %1941 = vst [vmem:[%s1940] ss:$2 sm:$0xff] %v41
    %v1942 = vld.sshfl [vmem:[#allocation1] sm:$0xff pattern:$0x75316420]
    %v1943 = vld.sshfl [vmem:[#allocation1 + $0x8] sm:$0xff pattern:$0x75316420]
    %v1944 = vld.sshfl [vmem:[#allocation1 + $0x10] sm:$0xff pattern:$0x75316420]
    %v1945 = vld.sshfl [vmem:[#allocation1 + $0x18] sm:$0xff pattern:$0x75316420]
    %v1947 = vsel %vm208, %v1858, 0
    %v1949 = vsel %vm212, %v1942, 0
    %v1951 = vsel %vm212, %v1943, 0
    %v1953 = vsel %vm212, %v1944, 0
    %v1955 = vsel %vm212, %v1945, 0
    %1957 = vmatpush.msra.mxu0 0.0
    %1958 = vmatpush.msra.mxu0 0.0
    %1959 = vmatpush.msra.mxu0 0.0
    %1960 = vmatpush.msra.mxu0 0.0
    %1961 = vmatpush.msra.mxu0 0.0
    %1962 = vmatpush.msra.mxu0 0.0
    %1963 = vmatpush.msra.mxu0 0.0
    %1964 = vmatpush.msra.mxu0 0.0
    %1965 = vmatpush.msra.mxu0 0.0
    %1966 = vmatpush.msra.mxu0 0.0
    %1967 = vmatpush.msra.mxu0 0.0
    %1968 = vmatpush.msra.mxu0 0.0
    %1969 = vmatpush.msra.mxu0 0.0
    %1970 = vmatpush.msra.mxu0 0.0
    %1971 = vmatpush.msra.mxu0 0.0
    %1972 = vmatpush.msra.mxu0 %v1949
    %1973 = vmatmul.f32.gmra.mxu0 %v1947
    %v1974 = vpop.f32.mrf.mxu0
    %v1975 = vadd.f32 %v108, %v1974
    %1976 = vdwg.mxu0
    %1977 = vmatpush.msra.mxu0 0.0
    %1978 = vmatpush.msra.mxu0 0.0
    %1979 = vmatpush.msra.mxu0 0.0
    %1980 = vmatpush.msra.mxu0 0.0
    %1981 = vmatpush.msra.mxu0 0.0
    %1982 = vmatpush.msra.mxu0 0.0
    %1983 = vmatpush.msra.mxu0 0.0
    %1984 = vmatpush.msra.mxu0 0.0
    %1985 = vmatpush.msra.mxu0 0.0
    %1986 = vmatpush.msra.mxu0 0.0
    %1987 = vmatpush.msra.mxu0 0.0
    %1988 = vmatpush.msra.mxu0 0.0
    %1989 = vmatpush.msra.mxu0 0.0
    %1990 = vmatpush.msra.mxu0 0.0
    %1991 = vmatpush.msra.mxu0 0.0
    %1992 = vmatpush.msra.mxu0 %v1951
    %1993 = vmatmul.f32.gmra.mxu0 %v1947
    %v1994 = vpop.f32.mrf.mxu0
    %v1995 = vadd.f32 %v109, %v1994
    %1996 = vdwg.mxu0
    %1997 = vmatpush.msra.mxu0 0.0
    %1998 = vmatpush.msra.mxu0 0.0
    %1999 = vmatpush.msra.mxu0 0.0
    %2000 = vmatpush.msra.mxu0 0.0
    %2001 = vmatpush.msra.mxu0 0.0
    %2002 = vmatpush.msra.mxu0 0.0
    %2003 = vmatpush.msra.mxu0 0.0
    %2004 = vmatpush.msra.mxu0 0.0
    %2005 = vmatpush.msra.mxu0 0.0
    %2006 = vmatpush.msra.mxu0 0.0
    %2007 = vmatpush.msra.mxu0 0.0
    %2008 = vmatpush.msra.mxu0 0.0
    %2009 = vmatpush.msra.mxu0 0.0
    %2010 = vmatpush.msra.mxu0 0.0
    %2011 = vmatpush.msra.mxu0 0.0
    %2012 = vmatpush.msra.mxu0 %v1953
    %2013 = vmatmul.f32.gmra.mxu0 %v1947
    %v2014 = vpop.f32.mrf.mxu0
    %v2015 = vadd.f32 %v110, %v2014
    %2016 = vdwg.mxu0
    %2017 = vmatpush.msra.mxu0 0.0
    %2018 = vmatpush.msra.mxu0 0.0
    %2019 = vmatpush.msra.mxu0 0.0
    %2020 = vmatpush.msra.mxu0 0.0
    %2021 = vmatpush.msra.mxu0 0.0
    %2022 = vmatpush.msra.mxu0 0.0
    %2023 = vmatpush.msra.mxu0 0.0
    %2024 = vmatpush.msra.mxu0 0.0
    %2025 = vmatpush.msra.mxu0 0.0
    %2026 = vmatpush.msra.mxu0 0.0
    %2027 = vmatpush.msra.mxu0 0.0
    %2028 = vmatpush.msra.mxu0 0.0
    %2029 = vmatpush.msra.mxu0 0.0
    %2030 = vmatpush.msra.mxu0 0.0
    %2031 = vmatpush.msra.mxu0 0.0
    %2032 = vmatpush.msra.mxu0 %v1955
    %2033 = vmatmul.f32.gmra.mxu0 %v1947
    %v2034 = vpop.f32.mrf.mxu0
    %v2035 = vadd.f32 %v111, %v2034
    %2036 = vdwg.mxu0
    %v2037 = vadd.f32 %v1975, %v1877
    %v2038 = vadd.f32 %v1995, %v1897
    %v2039 = vadd.f32 %v2015, %v1917
    %v2040 = vadd.f32 %v2035, %v1937
    %v2041 = vsub.f32 0.0, %v2037
    %v2042 = vsub.f32 0.0, %v2038
    %v2043 = vsub.f32 0.0, %v2039
    %v2044 = vmul.f32 %v2041, 1.442695
    %v2045 = vpow.pop %v2044
    %v2046 = vmul.f32 %v2042, 1.442695
    %v2047 = vpow.pop %v2046
    %v2048 = vmul.f32 %v2043, 1.442695
    %v2049 = vpow.pop %v2048
    %v2050 = vadd.f32 %v2045, 1.0
    %v2051 = vadd.f32 %v2047, 1.0
    %v2052 = vadd.f32 %v2049, 1.0
    %v2053 = vrcp.pop %v2050
    %v2054 = vmul.f32 %v2050, %v2053
    %v2055 = vsub.f32 1.0, %v2054
    %v2056 = vmul.f32 %v2053, %v2055
    %v2057 = vadd.f32 %v2053, %v2056
    %vm2058 = vweird.f32 %v2050
    %vm2059 = vweird.f32 %v2053
    %vm2060 = vmor %vm2058, %vm2059
    %v2061 = vsel %vm2060, %v2053, %v2057
    %v2062 = vand.u32 2147483647, %v2050
    %vm2063 = vcmp.eq.f32.partialorder %v2062, 8.507059e+37
    %v2064 = vand.u32 %v2050, 2147483648
    %v2065 = vor.u32 1.1754944e-38, %v2064
    %v2066 = vsel %vm2063, %v2065, %v2061
    %v2067 = vmul.f32 1.0, %v2066
    %v2068 = vrcp.pop %v2051
    %v2069 = vmul.f32 %v2051, %v2068
    %v2070 = vsub.f32 1.0, %v2069
    %v2071 = vmul.f32 %v2068, %v2070
    %v2072 = vadd.f32 %v2068, %v2071
    %vm2073 = vweird.f32 %v2051
    %vm2074 = vweird.f32 %v2068
    %vm2075 = vmor %vm2073, %vm2074
    %v2076 = vsel %vm2075, %v2068, %v2072
    %v2077 = vand.u32 2147483647, %v2051
    %vm2078 = vcmp.eq.f32.partialorder %v2077, 8.507059e+37
    %v2079 = vand.u32 %v2051, 2147483648
    %v2080 = vor.u32 1.1754944e-38, %v2079
    %v2081 = vsel %vm2078, %v2080, %v2076
    %v2082 = vmul.f32 1.0, %v2081
    %v2083 = vrcp.pop %v2052
    %v2084 = vmul.f32 %v2052, %v2083
    %v2085 = vsub.f32 1.0, %v2084
    %v2086 = vmul.f32 %v2083, %v2085
    %v2087 = vadd.f32 %v2083, %v2086
    %vm2088 = vweird.f32 %v2052
    %vm2089 = vweird.f32 %v2083
    %vm2090 = vmor %vm2088, %vm2089
    %v2091 = vsel %vm2090, %v2083, %v2087
    %v2092 = vand.u32 2147483647, %v2052
    %vm2093 = vcmp.eq.f32.partialorder %v2092, 8.507059e+37
    %v2094 = vand.u32 %v2052, 2147483648
    %v2095 = vor.u32 1.1754944e-38, %v2094
    %v2096 = vsel %vm2093, %v2095, %v2091
    %v2097 = vmul.f32 1.0, %v2096
    %v2098 = vtanh.pop %v2040
    %v2099 = vmul.f32 %v2082, %v1853
    %v2100 = vmul.f32 %v2067, %v2098
    %v2101 = vadd.f32 %v2099, %v2100
    %v2102 = vtanh.pop %v2101
    %v2103 = vmul.f32 %v2097, %v2102
    %2104 = vst [vmem:[#allocation7 + $0x38] sm:$0xff] %v2103
    %s2105 = scalar_lea.vmem %s0, 64
    %v2106 = vld [vmem:[%s2105] sm:$0xff]
    %2107 = vmatpush.msra.mxu0 %v102
    %2108 = vmatpush.msra.mxu0 %v98
    %2109 = vmatpush.msra.mxu0 %v94
    %2110 = vmatpush.msra.mxu0 %v90
    %2111 = vmatpush.msra.mxu0 %v86
    %2112 = vmatpush.msra.mxu0 %v82
    %2113 = vmatpush.msra.mxu0 %v78
    %2114 = vmatpush.msra.mxu0 %v74
    %2115 = vmatpush.msra.mxu0 %v70
    %2116 = vmatpush.msra.mxu0 %v66
    %2117 = vmatpush.msra.mxu0 %v62
    %2118 = vmatpush.msra.mxu0 %v58
    %2119 = vmatpush.msra.mxu0 %v54
    %2120 = vmatpush.msra.mxu0 %v50
    %2121 = vmatpush.msra.mxu0 %v46
    %2122 = vmatpush.msra.mxu0 %v42
    %2123 = vmatmul.f32.gmra.mxu0 %v2103
    %v2124 = vpop.f32.mrf.mxu0
    %v2125 = vadd.f32 0.0, %v2124
    %2126 = vdwg.mxu0
    %2127 = vmatpush.msra.mxu0 %v103
    %2128 = vmatpush.msra.mxu0 %v99
    %2129 = vmatpush.msra.mxu0 %v95
    %2130 = vmatpush.msra.mxu0 %v91
    %2131 = vmatpush.msra.mxu0 %v87
    %2132 = vmatpush.msra.mxu0 %v83
    %2133 = vmatpush.msra.mxu0 %v79
    %2134 = vmatpush.msra.mxu0 %v75
    %2135 = vmatpush.msra.mxu0 %v71
    %2136 = vmatpush.msra.mxu0 %v67
    %2137 = vmatpush.msra.mxu0 %v63
    %2138 = vmatpush.msra.mxu0 %v59
    %2139 = vmatpush.msra.mxu0 %v55
    %2140 = vmatpush.msra.mxu0 %v51
    %2141 = vmatpush.msra.mxu0 %v47
    %2142 = vmatpush.msra.mxu0 %v43
    %2143 = vmatmul.f32.gmra.mxu0 %v2103
    %v2144 = vpop.f32.mrf.mxu0
    %v2145 = vadd.f32 0.0, %v2144
    %2146 = vdwg.mxu0
    %2147 = vmatpush.msra.mxu0 %v104
    %2148 = vmatpush.msra.mxu0 %v100
    %2149 = vmatpush.msra.mxu0 %v96
    %2150 = vmatpush.msra.mxu0 %v92
    %2151 = vmatpush.msra.mxu0 %v88
    %2152 = vmatpush.msra.mxu0 %v84
    %2153 = vmatpush.msra.mxu0 %v80
    %2154 = vmatpush.msra.mxu0 %v76
    %2155 = vmatpush.msra.mxu0 %v72
    %2156 = vmatpush.msra.mxu0 %v68
    %2157 = vmatpush.msra.mxu0 %v64
    %2158 = vmatpush.msra.mxu0 %v60
    %2159 = vmatpush.msra.mxu0 %v56
    %2160 = vmatpush.msra.mxu0 %v52
    %2161 = vmatpush.msra.mxu0 %v48
    %2162 = vmatpush.msra.mxu0 %v44
    %2163 = vmatmul.f32.gmra.mxu0 %v2103
    %v2164 = vpop.f32.mrf.mxu0
    %v2165 = vadd.f32 0.0, %v2164
    %2166 = vdwg.mxu0
    %2167 = vmatpush.msra.mxu0 %v105
    %2168 = vmatpush.msra.mxu0 %v101
    %2169 = vmatpush.msra.mxu0 %v97
    %2170 = vmatpush.msra.mxu0 %v93
    %2171 = vmatpush.msra.mxu0 %v89
    %2172 = vmatpush.msra.mxu0 %v85
    %2173 = vmatpush.msra.mxu0 %v81
    %2174 = vmatpush.msra.mxu0 %v77
    %2175 = vmatpush.msra.mxu0 %v73
    %2176 = vmatpush.msra.mxu0 %v69
    %2177 = vmatpush.msra.mxu0 %v65
    %2178 = vmatpush.msra.mxu0 %v61
    %2179 = vmatpush.msra.mxu0 %v57
    %2180 = vmatpush.msra.mxu0 %v53
    %2181 = vmatpush.msra.mxu0 %v49
    %2182 = vmatpush.msra.mxu0 %v45
    %2183 = vmatmul.f32.gmra.mxu0 %v2103
    %v2184 = vpop.f32.mrf.mxu0
    %v2185 = vadd.f32 0.0, %v2184
    %2186 = vdwg.mxu0
    %2187 = vst [vmem:[#allocation1] ss:$2 sm:$0xff] %v40
    %s2188 = scalar_lea.vmem [#allocation1], 16
    %2189 = vst [vmem:[%s2188] ss:$2 sm:$0xff] %v41
    %v2190 = vld.sshfl [vmem:[#allocation1] sm:$0xff pattern:$0x75316420]
    %v2191 = vld.sshfl [vmem:[#allocation1 + $0x8] sm:$0xff pattern:$0x75316420]
    %v2192 = vld.sshfl [vmem:[#allocation1 + $0x10] sm:$0xff pattern:$0x75316420]
    %v2193 = vld.sshfl [vmem:[#allocation1 + $0x18] sm:$0xff pattern:$0x75316420]
    %v2195 = vsel %vm208, %v2106, 0
    %v2197 = vsel %vm212, %v2190, 0
    %v2199 = vsel %vm212, %v2191, 0
    %v2201 = vsel %vm212, %v2192, 0
    %v2203 = vsel %vm212, %v2193, 0
    %2205 = vmatpush.msra.mxu0 0.0
    %2206 = vmatpush.msra.mxu0 0.0
    %2207 = vmatpush.msra.mxu0 0.0
    %2208 = vmatpush.msra.mxu0 0.0
    %2209 = vmatpush.msra.mxu0 0.0
    %2210 = vmatpush.msra.mxu0 0.0
    %2211 = vmatpush.msra.mxu0 0.0
    %2212 = vmatpush.msra.mxu0 0.0
    %2213 = vmatpush.msra.mxu0 0.0
    %2214 = vmatpush.msra.mxu0 0.0
    %2215 = vmatpush.msra.mxu0 0.0
    %2216 = vmatpush.msra.mxu0 0.0
    %2217 = vmatpush.msra.mxu0 0.0
    %2218 = vmatpush.msra.mxu0 0.0
    %2219 = vmatpush.msra.mxu0 0.0
    %2220 = vmatpush.msra.mxu0 %v2197
    %2221 = vmatmul.f32.gmra.mxu0 %v2195
    %v2222 = vpop.f32.mrf.mxu0
    %v2223 = vadd.f32 %v108, %v2222
    %2224 = vdwg.mxu0
    %2225 = vmatpush.msra.mxu0 0.0
    %2226 = vmatpush.msra.mxu0 0.0
    %2227 = vmatpush.msra.mxu0 0.0
    %2228 = vmatpush.msra.mxu0 0.0
    %2229 = vmatpush.msra.mxu0 0.0
    %2230 = vmatpush.msra.mxu0 0.0
    %2231 = vmatpush.msra.mxu0 0.0
    %2232 = vmatpush.msra.mxu0 0.0
    %2233 = vmatpush.msra.mxu0 0.0
    %2234 = vmatpush.msra.mxu0 0.0
    %2235 = vmatpush.msra.mxu0 0.0
    %2236 = vmatpush.msra.mxu0 0.0
    %2237 = vmatpush.msra.mxu0 0.0
    %2238 = vmatpush.msra.mxu0 0.0
    %2239 = vmatpush.msra.mxu0 0.0
    %2240 = vmatpush.msra.mxu0 %v2199
    %2241 = vmatmul.f32.gmra.mxu0 %v2195
    %v2242 = vpop.f32.mrf.mxu0
    %v2243 = vadd.f32 %v109, %v2242
    %2244 = vdwg.mxu0
    %2245 = vmatpush.msra.mxu0 0.0
    %2246 = vmatpush.msra.mxu0 0.0
    %2247 = vmatpush.msra.mxu0 0.0
    %2248 = vmatpush.msra.mxu0 0.0
    %2249 = vmatpush.msra.mxu0 0.0
    %2250 = vmatpush.msra.mxu0 0.0
    %2251 = vmatpush.msra.mxu0 0.0
    %2252 = vmatpush.msra.mxu0 0.0
    %2253 = vmatpush.msra.mxu0 0.0
    %2254 = vmatpush.msra.mxu0 0.0
    %2255 = vmatpush.msra.mxu0 0.0
    %2256 = vmatpush.msra.mxu0 0.0
    %2257 = vmatpush.msra.mxu0 0.0
    %2258 = vmatpush.msra.mxu0 0.0
    %2259 = vmatpush.msra.mxu0 0.0
    %2260 = vmatpush.msra.mxu0 %v2201
    %2261 = vmatmul.f32.gmra.mxu0 %v2195
    %v2262 = vpop.f32.mrf.mxu0
    %v2263 = vadd.f32 %v110, %v2262
    %2264 = vdwg.mxu0
    %2265 = vmatpush.msra.mxu0 0.0
    %2266 = vmatpush.msra.mxu0 0.0
    %2267 = vmatpush.msra.mxu0 0.0
    %2268 = vmatpush.msra.mxu0 0.0
    %2269 = vmatpush.msra.mxu0 0.0
    %2270 = vmatpush.msra.mxu0 0.0
    %2271 = vmatpush.msra.mxu0 0.0
    %2272 = vmatpush.msra.mxu0 0.0
    %2273 = vmatpush.msra.mxu0 0.0
    %2274 = vmatpush.msra.mxu0 0.0
    %2275 = vmatpush.msra.mxu0 0.0
    %2276 = vmatpush.msra.mxu0 0.0
    %2277 = vmatpush.msra.mxu0 0.0
    %2278 = vmatpush.msra.mxu0 0.0
    %2279 = vmatpush.msra.mxu0 0.0
    %2280 = vmatpush.msra.mxu0 %v2203
    %2281 = vmatmul.f32.gmra.mxu0 %v2195
    %v2282 = vpop.f32.mrf.mxu0
    %v2283 = vadd.f32 %v111, %v2282
    %2284 = vdwg.mxu0
    %v2285 = vadd.f32 %v2223, %v2125
    %v2286 = vadd.f32 %v2243, %v2145
    %v2287 = vadd.f32 %v2263, %v2165
    %v2288 = vadd.f32 %v2283, %v2185
    %v2289 = vsub.f32 0.0, %v2285
    %v2290 = vsub.f32 0.0, %v2286
    %v2291 = vsub.f32 0.0, %v2287
    %v2292 = vmul.f32 %v2289, 1.442695
    %v2293 = vpow.pop %v2292
    %v2294 = vmul.f32 %v2290, 1.442695
    %v2295 = vpow.pop %v2294
    %v2296 = vmul.f32 %v2291, 1.442695
    %v2297 = vpow.pop %v2296
    %v2298 = vadd.f32 %v2293, 1.0
    %v2299 = vadd.f32 %v2295, 1.0
    %v2300 = vadd.f32 %v2297, 1.0
    %v2301 = vrcp.pop %v2298
    %v2302 = vmul.f32 %v2298, %v2301
    %v2303 = vsub.f32 1.0, %v2302
    %v2304 = vmul.f32 %v2301, %v2303
    %v2305 = vadd.f32 %v2301, %v2304
    %vm2306 = vweird.f32 %v2298
    %vm2307 = vweird.f32 %v2301
    %vm2308 = vmor %vm2306, %vm2307
    %v2309 = vsel %vm2308, %v2301, %v2305
    %v2310 = vand.u32 2147483647, %v2298
    %vm2311 = vcmp.eq.f32.partialorder %v2310, 8.507059e+37
    %v2312 = vand.u32 %v2298, 2147483648
    %v2313 = vor.u32 1.1754944e-38, %v2312
    %v2314 = vsel %vm2311, %v2313, %v2309
    %v2315 = vmul.f32 1.0, %v2314
    %v2316 = vrcp.pop %v2299
    %v2317 = vmul.f32 %v2299, %v2316
    %v2318 = vsub.f32 1.0, %v2317
    %v2319 = vmul.f32 %v2316, %v2318
    %v2320 = vadd.f32 %v2316, %v2319
    %vm2321 = vweird.f32 %v2299
    %vm2322 = vweird.f32 %v2316
    %vm2323 = vmor %vm2321, %vm2322
    %v2324 = vsel %vm2323, %v2316, %v2320
    %v2325 = vand.u32 2147483647, %v2299
    %vm2326 = vcmp.eq.f32.partialorder %v2325, 8.507059e+37
    %v2327 = vand.u32 %v2299, 2147483648
    %v2328 = vor.u32 1.1754944e-38, %v2327
    %v2329 = vsel %vm2326, %v2328, %v2324
    %v2330 = vmul.f32 1.0, %v2329
    %v2331 = vrcp.pop %v2300
    %v2332 = vmul.f32 %v2300, %v2331
    %v2333 = vsub.f32 1.0, %v2332
    %v2334 = vmul.f32 %v2331, %v2333
    %v2335 = vadd.f32 %v2331, %v2334
    %vm2336 = vweird.f32 %v2300
    %vm2337 = vweird.f32 %v2331
    %vm2338 = vmor %vm2336, %vm2337
    %v2339 = vsel %vm2338, %v2331, %v2335
    %v2340 = vand.u32 2147483647, %v2300
    %vm2341 = vcmp.eq.f32.partialorder %v2340, 8.507059e+37
    %v2342 = vand.u32 %v2300, 2147483648
    %v2343 = vor.u32 1.1754944e-38, %v2342
    %v2344 = vsel %vm2341, %v2343, %v2339
    %v2345 = vmul.f32 1.0, %v2344
    %v2346 = vtanh.pop %v2288
    %v2347 = vmul.f32 %v2330, %v2101
    %v2348 = vmul.f32 %v2315, %v2346
    %v2349 = vadd.f32 %v2347, %v2348
    %v2350 = vtanh.pop %v2349
    %v2351 = vmul.f32 %v2345, %v2350
    %2352 = vst [vmem:[#allocation7 + $0x40] sm:$0xff] %v2351
    %s2353 = scalar_lea.vmem %s0, 72
    %v2354 = vld [vmem:[%s2353] sm:$0xff]
    %2355 = vmatpush.msra.mxu0 %v102
    %2356 = vmatpush.msra.mxu0 %v98
    %2357 = vmatpush.msra.mxu0 %v94
    %2358 = vmatpush.msra.mxu0 %v90
    %2359 = vmatpush.msra.mxu0 %v86
    %2360 = vmatpush.msra.mxu0 %v82
    %2361 = vmatpush.msra.mxu0 %v78
    %2362 = vmatpush.msra.mxu0 %v74
    %2363 = vmatpush.msra.mxu0 %v70
    %2364 = vmatpush.msra.mxu0 %v66
    %2365 = vmatpush.msra.mxu0 %v62
    %2366 = vmatpush.msra.mxu0 %v58
    %2367 = vmatpush.msra.mxu0 %v54
    %2368 = vmatpush.msra.mxu0 %v50
    %2369 = vmatpush.msra.mxu0 %v46
    %2370 = vmatpush.msra.mxu0 %v42
    %2371 = vmatmul.f32.gmra.mxu0 %v2351
    %v2372 = vpop.f32.mrf.mxu0
    %v2373 = vadd.f32 0.0, %v2372
    %2374 = vdwg.mxu0
    %2375 = vmatpush.msra.mxu0 %v103
    %2376 = vmatpush.msra.mxu0 %v99
    %2377 = vmatpush.msra.mxu0 %v95
    %2378 = vmatpush.msra.mxu0 %v91
    %2379 = vmatpush.msra.mxu0 %v87
    %2380 = vmatpush.msra.mxu0 %v83
    %2381 = vmatpush.msra.mxu0 %v79
    %2382 = vmatpush.msra.mxu0 %v75
    %2383 = vmatpush.msra.mxu0 %v71
    %2384 = vmatpush.msra.mxu0 %v67
    %2385 = vmatpush.msra.mxu0 %v63
    %2386 = vmatpush.msra.mxu0 %v59
    %2387 = vmatpush.msra.mxu0 %v55
    %2388 = vmatpush.msra.mxu0 %v51
    %2389 = vmatpush.msra.mxu0 %v47
    %2390 = vmatpush.msra.mxu0 %v43
    %2391 = vmatmul.f32.gmra.mxu0 %v2351
    %v2392 = vpop.f32.mrf.mxu0
    %v2393 = vadd.f32 0.0, %v2392
    %2394 = vdwg.mxu0
    %2395 = vmatpush.msra.mxu0 %v104
    %2396 = vmatpush.msra.mxu0 %v100
    %2397 = vmatpush.msra.mxu0 %v96
    %2398 = vmatpush.msra.mxu0 %v92
    %2399 = vmatpush.msra.mxu0 %v88
    %2400 = vmatpush.msra.mxu0 %v84
    %2401 = vmatpush.msra.mxu0 %v80
    %2402 = vmatpush.msra.mxu0 %v76
    %2403 = vmatpush.msra.mxu0 %v72
    %2404 = vmatpush.msra.mxu0 %v68
    %2405 = vmatpush.msra.mxu0 %v64
    %2406 = vmatpush.msra.mxu0 %v60
    %2407 = vmatpush.msra.mxu0 %v56
    %2408 = vmatpush.msra.mxu0 %v52
    %2409 = vmatpush.msra.mxu0 %v48
    %2410 = vmatpush.msra.mxu0 %v44
    %2411 = vmatmul.f32.gmra.mxu0 %v2351
    %v2412 = vpop.f32.mrf.mxu0
    %v2413 = vadd.f32 0.0, %v2412
    %2414 = vdwg.mxu0
    %2415 = vmatpush.msra.mxu0 %v105
    %2416 = vmatpush.msra.mxu0 %v101
    %2417 = vmatpush.msra.mxu0 %v97
    %2418 = vmatpush.msra.mxu0 %v93
    %2419 = vmatpush.msra.mxu0 %v89
    %2420 = vmatpush.msra.mxu0 %v85
    %2421 = vmatpush.msra.mxu0 %v81
    %2422 = vmatpush.msra.mxu0 %v77
    %2423 = vmatpush.msra.mxu0 %v73
    %2424 = vmatpush.msra.mxu0 %v69
    %2425 = vmatpush.msra.mxu0 %v65
    %2426 = vmatpush.msra.mxu0 %v61
    %2427 = vmatpush.msra.mxu0 %v57
    %2428 = vmatpush.msra.mxu0 %v53
    %2429 = vmatpush.msra.mxu0 %v49
    %2430 = vmatpush.msra.mxu0 %v45
    %2431 = vmatmul.f32.gmra.mxu0 %v2351
    %v2432 = vpop.f32.mrf.mxu0
    %v2433 = vadd.f32 0.0, %v2432
    %2434 = vdwg.mxu0
    %2435 = vst [vmem:[#allocation1] ss:$2 sm:$0xff] %v40
    %s2436 = scalar_lea.vmem [#allocation1], 16
    %2437 = vst [vmem:[%s2436] ss:$2 sm:$0xff] %v41
    %v2438 = vld.sshfl [vmem:[#allocation1] sm:$0xff pattern:$0x75316420]
    %v2439 = vld.sshfl [vmem:[#allocation1 + $0x8] sm:$0xff pattern:$0x75316420]
    %v2440 = vld.sshfl [vmem:[#allocation1 + $0x10] sm:$0xff pattern:$0x75316420]
    %v2441 = vld.sshfl [vmem:[#allocation1 + $0x18] sm:$0xff pattern:$0x75316420]
    %v2443 = vsel %vm208, %v2354, 0
    %v2445 = vsel %vm212, %v2438, 0
    %v2447 = vsel %vm212, %v2439, 0
    %v2449 = vsel %vm212, %v2440, 0
    %v2451 = vsel %vm212, %v2441, 0
    %2453 = vmatpush.msra.mxu0 0.0
    %2454 = vmatpush.msra.mxu0 0.0
    %2455 = vmatpush.msra.mxu0 0.0
    %2456 = vmatpush.msra.mxu0 0.0
    %2457 = vmatpush.msra.mxu0 0.0
    %2458 = vmatpush.msra.mxu0 0.0
    %2459 = vmatpush.msra.mxu0 0.0
    %2460 = vmatpush.msra.mxu0 0.0
    %2461 = vmatpush.msra.mxu0 0.0
    %2462 = vmatpush.msra.mxu0 0.0
    %2463 = vmatpush.msra.mxu0 0.0
    %2464 = vmatpush.msra.mxu0 0.0
    %2465 = vmatpush.msra.mxu0 0.0
    %2466 = vmatpush.msra.mxu0 0.0
    %2467 = vmatpush.msra.mxu0 0.0
    %2468 = vmatpush.msra.mxu0 %v2445
    %2469 = vmatmul.f32.gmra.mxu0 %v2443
    %v2470 = vpop.f32.mrf.mxu0
    %v2471 = vadd.f32 %v108, %v2470
    %2472 = vdwg.mxu0
    %2473 = vmatpush.msra.mxu0 0.0
    %2474 = vmatpush.msra.mxu0 0.0
    %2475 = vmatpush.msra.mxu0 0.0
    %2476 = vmatpush.msra.mxu0 0.0
    %2477 = vmatpush.msra.mxu0 0.0
    %2478 = vmatpush.msra.mxu0 0.0
    %2479 = vmatpush.msra.mxu0 0.0
    %2480 = vmatpush.msra.mxu0 0.0
    %2481 = vmatpush.msra.mxu0 0.0
    %2482 = vmatpush.msra.mxu0 0.0
    %2483 = vmatpush.msra.mxu0 0.0
    %2484 = vmatpush.msra.mxu0 0.0
    %2485 = vmatpush.msra.mxu0 0.0
    %2486 = vmatpush.msra.mxu0 0.0
    %2487 = vmatpush.msra.mxu0 0.0
    %2488 = vmatpush.msra.mxu0 %v2447
    %2489 = vmatmul.f32.gmra.mxu0 %v2443
    %v2490 = vpop.f32.mrf.mxu0
    %v2491 = vadd.f32 %v109, %v2490
    %2492 = vdwg.mxu0
    %2493 = vmatpush.msra.mxu0 0.0
    %2494 = vmatpush.msra.mxu0 0.0
    %2495 = vmatpush.msra.mxu0 0.0
    %2496 = vmatpush.msra.mxu0 0.0
    %2497 = vmatpush.msra.mxu0 0.0
    %2498 = vmatpush.msra.mxu0 0.0
    %2499 = vmatpush.msra.mxu0 0.0
    %2500 = vmatpush.msra.mxu0 0.0
    %2501 = vmatpush.msra.mxu0 0.0
    %2502 = vmatpush.msra.mxu0 0.0
    %2503 = vmatpush.msra.mxu0 0.0
    %2504 = vmatpush.msra.mxu0 0.0
    %2505 = vmatpush.msra.mxu0 0.0
    %2506 = vmatpush.msra.mxu0 0.0
    %2507 = vmatpush.msra.mxu0 0.0
    %2508 = vmatpush.msra.mxu0 %v2449
    %2509 = vmatmul.f32.gmra.mxu0 %v2443
    %v2510 = vpop.f32.mrf.mxu0
    %v2511 = vadd.f32 %v110, %v2510
    %2512 = vdwg.mxu0
    %2513 = vmatpush.msra.mxu0 0.0
    %2514 = vmatpush.msra.mxu0 0.0
    %2515 = vmatpush.msra.mxu0 0.0
    %2516 = vmatpush.msra.mxu0 0.0
    %2517 = vmatpush.msra.mxu0 0.0
    %2518 = vmatpush.msra.mxu0 0.0
    %2519 = vmatpush.msra.mxu0 0.0
    %2520 = vmatpush.msra.mxu0 0.0
    %2521 = vmatpush.msra.mxu0 0.0
    %2522 = vmatpush.msra.mxu0 0.0
    %2523 = vmatpush.msra.mxu0 0.0
    %2524 = vmatpush.msra.mxu0 0.0
    %2525 = vmatpush.msra.mxu0 0.0
    %2526 = vmatpush.msra.mxu0 0.0
    %2527 = vmatpush.msra.mxu0 0.0
    %2528 = vmatpush.msra.mxu0 %v2451
    %2529 = vmatmul.f32.gmra.mxu0 %v2443
    %v2530 = vpop.f32.mrf.mxu0
    %v2531 = vadd.f32 %v111, %v2530
    %2532 = vdwg.mxu0
    %v2533 = vadd.f32 %v2471, %v2373
    %v2534 = vadd.f32 %v2491, %v2393
    %v2535 = vadd.f32 %v2511, %v2413
    %v2536 = vadd.f32 %v2531, %v2433
    %v2537 = vsub.f32 0.0, %v2533
    %v2538 = vsub.f32 0.0, %v2534
    %v2539 = vsub.f32 0.0, %v2535
    %v2540 = vmul.f32 %v2537, 1.442695
    %v2541 = vpow.pop %v2540
    %v2542 = vmul.f32 %v2538, 1.442695
    %v2543 = vpow.pop %v2542
    %v2544 = vmul.f32 %v2539, 1.442695
    %v2545 = vpow.pop %v2544
    %v2546 = vadd.f32 %v2541, 1.0
    %v2547 = vadd.f32 %v2543, 1.0
    %v2548 = vadd.f32 %v2545, 1.0
    %v2549 = vrcp.pop %v2546
    %v2550 = vmul.f32 %v2546, %v2549
    %v2551 = vsub.f32 1.0, %v2550
    %v2552 = vmul.f32 %v2549, %v2551
    %v2553 = vadd.f32 %v2549, %v2552
    %vm2554 = vweird.f32 %v2546
    %vm2555 = vweird.f32 %v2549
    %vm2556 = vmor %vm2554, %vm2555
    %v2557 = vsel %vm2556, %v2549, %v2553
    %v2558 = vand.u32 2147483647, %v2546
    %vm2559 = vcmp.eq.f32.partialorder %v2558, 8.507059e+37
    %v2560 = vand.u32 %v2546, 2147483648
    %v2561 = vor.u32 1.1754944e-38, %v2560
    %v2562 = vsel %vm2559, %v2561, %v2557
    %v2563 = vmul.f32 1.0, %v2562
    %v2564 = vrcp.pop %v2547
    %v2565 = vmul.f32 %v2547, %v2564
    %v2566 = vsub.f32 1.0, %v2565
    %v2567 = vmul.f32 %v2564, %v2566
    %v2568 = vadd.f32 %v2564, %v2567
    %vm2569 = vweird.f32 %v2547
    %vm2570 = vweird.f32 %v2564
    %vm2571 = vmor %vm2569, %vm2570
    %v2572 = vsel %vm2571, %v2564, %v2568
    %v2573 = vand.u32 2147483647, %v2547
    %vm2574 = vcmp.eq.f32.partialorder %v2573, 8.507059e+37
    %v2575 = vand.u32 %v2547, 2147483648
    %v2576 = vor.u32 1.1754944e-38, %v2575
    %v2577 = vsel %vm2574, %v2576, %v2572
    %v2578 = vmul.f32 1.0, %v2577
    %v2579 = vrcp.pop %v2548
    %v2580 = vmul.f32 %v2548, %v2579
    %v2581 = vsub.f32 1.0, %v2580
    %v2582 = vmul.f32 %v2579, %v2581
    %v2583 = vadd.f32 %v2579, %v2582
    %vm2584 = vweird.f32 %v2548
    %vm2585 = vweird.f32 %v2579
    %vm2586 = vmor %vm2584, %vm2585
    %v2587 = vsel %vm2586, %v2579, %v2583
    %v2588 = vand.u32 2147483647, %v2548
    %vm2589 = vcmp.eq.f32.partialorder %v2588, 8.507059e+37
    %v2590 = vand.u32 %v2548, 2147483648
    %v2591 = vor.u32 1.1754944e-38, %v2590
    %v2592 = vsel %vm2589, %v2591, %v2587
    %v2593 = vmul.f32 1.0, %v2592
    %v2594 = vtanh.pop %v2536
    %v2595 = vmul.f32 %v2578, %v2349
    %v2596 = vmul.f32 %v2563, %v2594
    %v2597 = vadd.f32 %v2595, %v2596
    %v2598 = vtanh.pop %v2597
    %v2599 = vmul.f32 %v2593, %v2598
    %2600 = vst [vmem:[#allocation7 + $0x48] sm:$0xff] %v2599
    %s2601 = scalar_lea.vmem %s0, 80
    %v2602 = vld [vmem:[%s2601] sm:$0xff]
    %2603 = vmatpush.msra.mxu0 %v102
    %2604 = vmatpush.msra.mxu0 %v98
    %2605 = vmatpush.msra.mxu0 %v94
    %2606 = vmatpush.msra.mxu0 %v90
    %2607 = vmatpush.msra.mxu0 %v86
    %2608 = vmatpush.msra.mxu0 %v82
    %2609 = vmatpush.msra.mxu0 %v78
    %2610 = vmatpush.msra.mxu0 %v74
    %2611 = vmatpush.msra.mxu0 %v70
    %2612 = vmatpush.msra.mxu0 %v66
    %2613 = vmatpush.msra.mxu0 %v62
    %2614 = vmatpush.msra.mxu0 %v58
    %2615 = vmatpush.msra.mxu0 %v54
    %2616 = vmatpush.msra.mxu0 %v50
    %2617 = vmatpush.msra.mxu0 %v46
    %2618 = vmatpush.msra.mxu0 %v42
    %2619 = vmatmul.f32.gmra.mxu0 %v2599
    %v2620 = vpop.f32.mrf.mxu0
    %v2621 = vadd.f32 0.0, %v2620
    %2622 = vdwg.mxu0
    %2623 = vmatpush.msra.mxu0 %v103
    %2624 = vmatpush.msra.mxu0 %v99
    %2625 = vmatpush.msra.mxu0 %v95
    %2626 = vmatpush.msra.mxu0 %v91
    %2627 = vmatpush.msra.mxu0 %v87
    %2628 = vmatpush.msra.mxu0 %v83
    %2629 = vmatpush.msra.mxu0 %v79
    %2630 = vmatpush.msra.mxu0 %v75
    %2631 = vmatpush.msra.mxu0 %v71
    %2632 = vmatpush.msra.mxu0 %v67
    %2633 = vmatpush.msra.mxu0 %v63
    %2634 = vmatpush.msra.mxu0 %v59
    %2635 = vmatpush.msra.mxu0 %v55
    %2636 = vmatpush.msra.mxu0 %v51
    %2637 = vmatpush.msra.mxu0 %v47
    %2638 = vmatpush.msra.mxu0 %v43
    %2639 = vmatmul.f32.gmra.mxu0 %v2599
    %v2640 = vpop.f32.mrf.mxu0
    %v2641 = vadd.f32 0.0, %v2640
    %2642 = vdwg.mxu0
    %2643 = vmatpush.msra.mxu0 %v104
    %2644 = vmatpush.msra.mxu0 %v100
    %2645 = vmatpush.msra.mxu0 %v96
    %2646 = vmatpush.msra.mxu0 %v92
    %2647 = vmatpush.msra.mxu0 %v88
    %2648 = vmatpush.msra.mxu0 %v84
    %2649 = vmatpush.msra.mxu0 %v80
    %2650 = vmatpush.msra.mxu0 %v76
    %2651 = vmatpush.msra.mxu0 %v72
    %2652 = vmatpush.msra.mxu0 %v68
    %2653 = vmatpush.msra.mxu0 %v64
    %2654 = vmatpush.msra.mxu0 %v60
    %2655 = vmatpush.msra.mxu0 %v56
    %2656 = vmatpush.msra.mxu0 %v52
    %2657 = vmatpush.msra.mxu0 %v48
    %2658 = vmatpush.msra.mxu0 %v44
    %2659 = vmatmul.f32.gmra.mxu0 %v2599
    %v2660 = vpop.f32.mrf.mxu0
    %v2661 = vadd.f32 0.0, %v2660
    %2662 = vdwg.mxu0
    %2663 = vmatpush.msra.mxu0 %v105
    %2664 = vmatpush.msra.mxu0 %v101
    %2665 = vmatpush.msra.mxu0 %v97
    %2666 = vmatpush.msra.mxu0 %v93
    %2667 = vmatpush.msra.mxu0 %v89
    %2668 = vmatpush.msra.mxu0 %v85
    %2669 = vmatpush.msra.mxu0 %v81
    %2670 = vmatpush.msra.mxu0 %v77
    %2671 = vmatpush.msra.mxu0 %v73
    %2672 = vmatpush.msra.mxu0 %v69
    %2673 = vmatpush.msra.mxu0 %v65
    %2674 = vmatpush.msra.mxu0 %v61
    %2675 = vmatpush.msra.mxu0 %v57
    %2676 = vmatpush.msra.mxu0 %v53
    %2677 = vmatpush.msra.mxu0 %v49
    %2678 = vmatpush.msra.mxu0 %v45
    %2679 = vmatmul.f32.gmra.mxu0 %v2599
    %v2680 = vpop.f32.mrf.mxu0
    %v2681 = vadd.f32 0.0, %v2680
    %2682 = vdwg.mxu0
    %2683 = vst [vmem:[#allocation1] ss:$2 sm:$0xff] %v40
    %s2684 = scalar_lea.vmem [#allocation1], 16
    %2685 = vst [vmem:[%s2684] ss:$2 sm:$0xff] %v41
    %v2686 = vld.sshfl [vmem:[#allocation1] sm:$0xff pattern:$0x75316420]
    %v2687 = vld.sshfl [vmem:[#allocation1 + $0x8] sm:$0xff pattern:$0x75316420]
    %v2688 = vld.sshfl [vmem:[#allocation1 + $0x10] sm:$0xff pattern:$0x75316420]
    %v2689 = vld.sshfl [vmem:[#allocation1 + $0x18] sm:$0xff pattern:$0x75316420]
    %v2691 = vsel %vm208, %v2602, 0
    %v2693 = vsel %vm212, %v2686, 0
    %v2695 = vsel %vm212, %v2687, 0
    %v2697 = vsel %vm212, %v2688, 0
    %v2699 = vsel %vm212, %v2689, 0
    %2701 = vmatpush.msra.mxu0 0.0
    %2702 = vmatpush.msra.mxu0 0.0
    %2703 = vmatpush.msra.mxu0 0.0
    %2704 = vmatpush.msra.mxu0 0.0
    %2705 = vmatpush.msra.mxu0 0.0
    %2706 = vmatpush.msra.mxu0 0.0
    %2707 = vmatpush.msra.mxu0 0.0
    %2708 = vmatpush.msra.mxu0 0.0
    %2709 = vmatpush.msra.mxu0 0.0
    %2710 = vmatpush.msra.mxu0 0.0
    %2711 = vmatpush.msra.mxu0 0.0
    %2712 = vmatpush.msra.mxu0 0.0
    %2713 = vmatpush.msra.mxu0 0.0
    %2714 = vmatpush.msra.mxu0 0.0
    %2715 = vmatpush.msra.mxu0 0.0
    %2716 = vmatpush.msra.mxu0 %v2693
    %2717 = vmatmul.f32.gmra.mxu0 %v2691
    %v2718 = vpop.f32.mrf.mxu0
    %v2719 = vadd.f32 %v108, %v2718
    %2720 = vdwg.mxu0
    %2721 = vmatpush.msra.mxu0 0.0
    %2722 = vmatpush.msra.mxu0 0.0
    %2723 = vmatpush.msra.mxu0 0.0
    %2724 = vmatpush.msra.mxu0 0.0
    %2725 = vmatpush.msra.mxu0 0.0
    %2726 = vmatpush.msra.mxu0 0.0
    %2727 = vmatpush.msra.mxu0 0.0
    %2728 = vmatpush.msra.mxu0 0.0
    %2729 = vmatpush.msra.mxu0 0.0
    %2730 = vmatpush.msra.mxu0 0.0
    %2731 = vmatpush.msra.mxu0 0.0
    %2732 = vmatpush.msra.mxu0 0.0
    %2733 = vmatpush.msra.mxu0 0.0
    %2734 = vmatpush.msra.mxu0 0.0
    %2735 = vmatpush.msra.mxu0 0.0
    %2736 = vmatpush.msra.mxu0 %v2695
    %2737 = vmatmul.f32.gmra.mxu0 %v2691
    %v2738 = vpop.f32.mrf.mxu0
    %v2739 = vadd.f32 %v109, %v2738
    %2740 = vdwg.mxu0
    %2741 = vmatpush.msra.mxu0 0.0
    %2742 = vmatpush.msra.mxu0 0.0
    %2743 = vmatpush.msra.mxu0 0.0
    %2744 = vmatpush.msra.mxu0 0.0
    %2745 = vmatpush.msra.mxu0 0.0
    %2746 = vmatpush.msra.mxu0 0.0
    %2747 = vmatpush.msra.mxu0 0.0
    %2748 = vmatpush.msra.mxu0 0.0
    %2749 = vmatpush.msra.mxu0 0.0
    %2750 = vmatpush.msra.mxu0 0.0
    %2751 = vmatpush.msra.mxu0 0.0
    %2752 = vmatpush.msra.mxu0 0.0
    %2753 = vmatpush.msra.mxu0 0.0
    %2754 = vmatpush.msra.mxu0 0.0
    %2755 = vmatpush.msra.mxu0 0.0
    %2756 = vmatpush.msra.mxu0 %v2697
    %2757 = vmatmul.f32.gmra.mxu0 %v2691
    %v2758 = vpop.f32.mrf.mxu0
    %v2759 = vadd.f32 %v110, %v2758
    %2760 = vdwg.mxu0
    %2761 = vmatpush.msra.mxu0 0.0
    %2762 = vmatpush.msra.mxu0 0.0
    %2763 = vmatpush.msra.mxu0 0.0
    %2764 = vmatpush.msra.mxu0 0.0
    %2765 = vmatpush.msra.mxu0 0.0
    %2766 = vmatpush.msra.mxu0 0.0
    %2767 = vmatpush.msra.mxu0 0.0
    %2768 = vmatpush.msra.mxu0 0.0
    %2769 = vmatpush.msra.mxu0 0.0
    %2770 = vmatpush.msra.mxu0 0.0
    %2771 = vmatpush.msra.mxu0 0.0
    %2772 = vmatpush.msra.mxu0 0.0
    %2773 = vmatpush.msra.mxu0 0.0
    %2774 = vmatpush.msra.mxu0 0.0
    %2775 = vmatpush.msra.mxu0 0.0
    %2776 = vmatpush.msra.mxu0 %v2699
    %2777 = vmatmul.f32.gmra.mxu0 %v2691
    %v2778 = vpop.f32.mrf.mxu0
    %v2779 = vadd.f32 %v111, %v2778
    %2780 = vdwg.mxu0
    %v2781 = vadd.f32 %v2719, %v2621
    %v2782 = vadd.f32 %v2739, %v2641
    %v2783 = vadd.f32 %v2759, %v2661
    %v2784 = vadd.f32 %v2779, %v2681
    %v2785 = vsub.f32 0.0, %v2781
    %v2786 = vsub.f32 0.0, %v2782
    %v2787 = vsub.f32 0.0, %v2783
    %v2788 = vmul.f32 %v2785, 1.442695
    %v2789 = vpow.pop %v2788
    %v2790 = vmul.f32 %v2786, 1.442695
    %v2791 = vpow.pop %v2790
    %v2792 = vmul.f32 %v2787, 1.442695
    %v2793 = vpow.pop %v2792
    %v2794 = vadd.f32 %v2789, 1.0
    %v2795 = vadd.f32 %v2791, 1.0
    %v2796 = vadd.f32 %v2793, 1.0
    %v2797 = vrcp.pop %v2794
    %v2798 = vmul.f32 %v2794, %v2797
    %v2799 = vsub.f32 1.0, %v2798
    %v2800 = vmul.f32 %v2797, %v2799
    %v2801 = vadd.f32 %v2797, %v2800
    %vm2802 = vweird.f32 %v2794
    %vm2803 = vweird.f32 %v2797
    %vm2804 = vmor %vm2802, %vm2803
    %v2805 = vsel %vm2804, %v2797, %v2801
    %v2806 = vand.u32 2147483647, %v2794
    %vm2807 = vcmp.eq.f32.partialorder %v2806, 8.507059e+37
    %v2808 = vand.u32 %v2794, 2147483648
    %v2809 = vor.u32 1.1754944e-38, %v2808
    %v2810 = vsel %vm2807, %v2809, %v2805
    %v2811 = vmul.f32 1.0, %v2810
    %v2812 = vrcp.pop %v2795
    %v2813 = vmul.f32 %v2795, %v2812
    %v2814 = vsub.f32 1.0, %v2813
    %v2815 = vmul.f32 %v2812, %v2814
    %v2816 = vadd.f32 %v2812, %v2815
    %vm2817 = vweird.f32 %v2795
    %vm2818 = vweird.f32 %v2812
    %vm2819 = vmor %vm2817, %vm2818
    %v2820 = vsel %vm2819, %v2812, %v2816
    %v2821 = vand.u32 2147483647, %v2795
    %vm2822 = vcmp.eq.f32.partialorder %v2821, 8.507059e+37
    %v2823 = vand.u32 %v2795, 2147483648
    %v2824 = vor.u32 1.1754944e-38, %v2823
    %v2825 = vsel %vm2822, %v2824, %v2820
    %v2826 = vmul.f32 1.0, %v2825
    %v2827 = vrcp.pop %v2796
    %v2828 = vmul.f32 %v2796, %v2827
    %v2829 = vsub.f32 1.0, %v2828
    %v2830 = vmul.f32 %v2827, %v2829
    %v2831 = vadd.f32 %v2827, %v2830
    %vm2832 = vweird.f32 %v2796
    %vm2833 = vweird.f32 %v2827
    %vm2834 = vmor %vm2832, %vm2833
    %v2835 = vsel %vm2834, %v2827, %v2831
    %v2836 = vand.u32 2147483647, %v2796
    %vm2837 = vcmp.eq.f32.partialorder %v2836, 8.507059e+37
    %v2838 = vand.u32 %v2796, 2147483648
    %v2839 = vor.u32 1.1754944e-38, %v2838
    %v2840 = vsel %vm2837, %v2839, %v2835
    %v2841 = vmul.f32 1.0, %v2840
    %v2842 = vtanh.pop %v2784
    %v2843 = vmul.f32 %v2826, %v2597
    %v2844 = vmul.f32 %v2811, %v2842
    %v2845 = vadd.f32 %v2843, %v2844
    %v2846 = vtanh.pop %v2845
    %v2847 = vmul.f32 %v2841, %v2846
    %2848 = vst [vmem:[#allocation7 + $0x50] sm:$0xff] %v2847
    %s2849 = scalar_lea.vmem %s0, 88
    %v2850 = vld [vmem:[%s2849] sm:$0xff]
    %2851 = vmatpush.msra.mxu0 %v102
    %2852 = vmatpush.msra.mxu0 %v98
    %2853 = vmatpush.msra.mxu0 %v94
    %2854 = vmatpush.msra.mxu0 %v90
    %2855 = vmatpush.msra.mxu0 %v86
    %2856 = vmatpush.msra.mxu0 %v82
    %2857 = vmatpush.msra.mxu0 %v78
    %2858 = vmatpush.msra.mxu0 %v74
    %2859 = vmatpush.msra.mxu0 %v70
    %2860 = vmatpush.msra.mxu0 %v66
    %2861 = vmatpush.msra.mxu0 %v62
    %2862 = vmatpush.msra.mxu0 %v58
    %2863 = vmatpush.msra.mxu0 %v54
    %2864 = vmatpush.msra.mxu0 %v50
    %2865 = vmatpush.msra.mxu0 %v46
    %2866 = vmatpush.msra.mxu0 %v42
    %2867 = vmatmul.f32.gmra.mxu0 %v2847
    %v2868 = vpop.f32.mrf.mxu0
    %v2869 = vadd.f32 0.0, %v2868
    %2870 = vdwg.mxu0
    %2871 = vmatpush.msra.mxu0 %v103
    %2872 = vmatpush.msra.mxu0 %v99
    %2873 = vmatpush.msra.mxu0 %v95
    %2874 = vmatpush.msra.mxu0 %v91
    %2875 = vmatpush.msra.mxu0 %v87
    %2876 = vmatpush.msra.mxu0 %v83
    %2877 = vmatpush.msra.mxu0 %v79
    %2878 = vmatpush.msra.mxu0 %v75
    %2879 = vmatpush.msra.mxu0 %v71
    %2880 = vmatpush.msra.mxu0 %v67
    %2881 = vmatpush.msra.mxu0 %v63
    %2882 = vmatpush.msra.mxu0 %v59
    %2883 = vmatpush.msra.mxu0 %v55
    %2884 = vmatpush.msra.mxu0 %v51
    %2885 = vmatpush.msra.mxu0 %v47
    %2886 = vmatpush.msra.mxu0 %v43
    %2887 = vmatmul.f32.gmra.mxu0 %v2847
    %v2888 = vpop.f32.mrf.mxu0
    %v2889 = vadd.f32 0.0, %v2888
    %2890 = vdwg.mxu0
    %2891 = vmatpush.msra.mxu0 %v104
    %2892 = vmatpush.msra.mxu0 %v100
    %2893 = vmatpush.msra.mxu0 %v96
    %2894 = vmatpush.msra.mxu0 %v92
    %2895 = vmatpush.msra.mxu0 %v88
    %2896 = vmatpush.msra.mxu0 %v84
    %2897 = vmatpush.msra.mxu0 %v80
    %2898 = vmatpush.msra.mxu0 %v76
    %2899 = vmatpush.msra.mxu0 %v72
    %2900 = vmatpush.msra.mxu0 %v68
    %2901 = vmatpush.msra.mxu0 %v64
    %2902 = vmatpush.msra.mxu0 %v60
    %2903 = vmatpush.msra.mxu0 %v56
    %2904 = vmatpush.msra.mxu0 %v52
    %2905 = vmatpush.msra.mxu0 %v48
    %2906 = vmatpush.msra.mxu0 %v44
    %2907 = vmatmul.f32.gmra.mxu0 %v2847
    %v2908 = vpop.f32.mrf.mxu0
    %v2909 = vadd.f32 0.0, %v2908
    %2910 = vdwg.mxu0
    %2911 = vmatpush.msra.mxu0 %v105
    %2912 = vmatpush.msra.mxu0 %v101
    %2913 = vmatpush.msra.mxu0 %v97
    %2914 = vmatpush.msra.mxu0 %v93
    %2915 = vmatpush.msra.mxu0 %v89
    %2916 = vmatpush.msra.mxu0 %v85
    %2917 = vmatpush.msra.mxu0 %v81
    %2918 = vmatpush.msra.mxu0 %v77
    %2919 = vmatpush.msra.mxu0 %v73
    %2920 = vmatpush.msra.mxu0 %v69
    %2921 = vmatpush.msra.mxu0 %v65
    %2922 = vmatpush.msra.mxu0 %v61
    %2923 = vmatpush.msra.mxu0 %v57
    %2924 = vmatpush.msra.mxu0 %v53
    %2925 = vmatpush.msra.mxu0 %v49
    %2926 = vmatpush.msra.mxu0 %v45
    %2927 = vmatmul.f32.gmra.mxu0 %v2847
    %v2928 = vpop.f32.mrf.mxu0
    %v2929 = vadd.f32 0.0, %v2928
    %2930 = vdwg.mxu0
    %2931 = vst [vmem:[#allocation1] ss:$2 sm:$0xff] %v40
    %s2932 = scalar_lea.vmem [#allocation1], 16
    %2933 = vst [vmem:[%s2932] ss:$2 sm:$0xff] %v41
    %v2934 = vld.sshfl [vmem:[#allocation1] sm:$0xff pattern:$0x75316420]
    %v2935 = vld.sshfl [vmem:[#allocation1 + $0x8] sm:$0xff pattern:$0x75316420]
    %v2936 = vld.sshfl [vmem:[#allocation1 + $0x10] sm:$0xff pattern:$0x75316420]
    %v2937 = vld.sshfl [vmem:[#allocation1 + $0x18] sm:$0xff pattern:$0x75316420]
    %v2939 = vsel %vm208, %v2850, 0
    %v2941 = vsel %vm212, %v2934, 0
    %v2943 = vsel %vm212, %v2935, 0
    %v2945 = vsel %vm212, %v2936, 0
    %v2947 = vsel %vm212, %v2937, 0
    %2949 = vmatpush.msra.mxu0 0.0
    %2950 = vmatpush.msra.mxu0 0.0
    %2951 = vmatpush.msra.mxu0 0.0
    %2952 = vmatpush.msra.mxu0 0.0
    %2953 = vmatpush.msra.mxu0 0.0
    %2954 = vmatpush.msra.mxu0 0.0
    %2955 = vmatpush.msra.mxu0 0.0
    %2956 = vmatpush.msra.mxu0 0.0
    %2957 = vmatpush.msra.mxu0 0.0
    %2958 = vmatpush.msra.mxu0 0.0
    %2959 = vmatpush.msra.mxu0 0.0
    %2960 = vmatpush.msra.mxu0 0.0
    %2961 = vmatpush.msra.mxu0 0.0
    %2962 = vmatpush.msra.mxu0 0.0
    %2963 = vmatpush.msra.mxu0 0.0
    %2964 = vmatpush.msra.mxu0 %v2941
    %2965 = vmatmul.f32.gmra.mxu0 %v2939
    %v2966 = vpop.f32.mrf.mxu0
    %v2967 = vadd.f32 %v108, %v2966
    %2968 = vdwg.mxu0
    %2969 = vmatpush.msra.mxu0 0.0
    %2970 = vmatpush.msra.mxu0 0.0
    %2971 = vmatpush.msra.mxu0 0.0
    %2972 = vmatpush.msra.mxu0 0.0
    %2973 = vmatpush.msra.mxu0 0.0
    %2974 = vmatpush.msra.mxu0 0.0
    %2975 = vmatpush.msra.mxu0 0.0
    %2976 = vmatpush.msra.mxu0 0.0
    %2977 = vmatpush.msra.mxu0 0.0
    %2978 = vmatpush.msra.mxu0 0.0
    %2979 = vmatpush.msra.mxu0 0.0
    %2980 = vmatpush.msra.mxu0 0.0
    %2981 = vmatpush.msra.mxu0 0.0
    %2982 = vmatpush.msra.mxu0 0.0
    %2983 = vmatpush.msra.mxu0 0.0
    %2984 = vmatpush.msra.mxu0 %v2943
    %2985 = vmatmul.f32.gmra.mxu0 %v2939
    %v2986 = vpop.f32.mrf.mxu0
    %v2987 = vadd.f32 %v109, %v2986
    %2988 = vdwg.mxu0
    %2989 = vmatpush.msra.mxu0 0.0
    %2990 = vmatpush.msra.mxu0 0.0
    %2991 = vmatpush.msra.mxu0 0.0
    %2992 = vmatpush.msra.mxu0 0.0
    %2993 = vmatpush.msra.mxu0 0.0
    %2994 = vmatpush.msra.mxu0 0.0
    %2995 = vmatpush.msra.mxu0 0.0
    %2996 = vmatpush.msra.mxu0 0.0
    %2997 = vmatpush.msra.mxu0 0.0
    %2998 = vmatpush.msra.mxu0 0.0
    %2999 = vmatpush.msra.mxu0 0.0
    %3000 = vmatpush.msra.mxu0 0.0
    %3001 = vmatpush.msra.mxu0 0.0
    %3002 = vmatpush.msra.mxu0 0.0
    %3003 = vmatpush.msra.mxu0 0.0
    %3004 = vmatpush.msra.mxu0 %v2945
    %3005 = vmatmul.f32.gmra.mxu0 %v2939
    %v3006 = vpop.f32.mrf.mxu0
    %v3007 = vadd.f32 %v110, %v3006
    %3008 = vdwg.mxu0
    %3009 = vmatpush.msra.mxu0 0.0
    %3010 = vmatpush.msra.mxu0 0.0
    %3011 = vmatpush.msra.mxu0 0.0
    %3012 = vmatpush.msra.mxu0 0.0
    %3013 = vmatpush.msra.mxu0 0.0
    %3014 = vmatpush.msra.mxu0 0.0
    %3015 = vmatpush.msra.mxu0 0.0
    %3016 = vmatpush.msra.mxu0 0.0
    %3017 = vmatpush.msra.mxu0 0.0
    %3018 = vmatpush.msra.mxu0 0.0
    %3019 = vmatpush.msra.mxu0 0.0
    %3020 = vmatpush.msra.mxu0 0.0
    %3021 = vmatpush.msra.mxu0 0.0
    %3022 = vmatpush.msra.mxu0 0.0
    %3023 = vmatpush.msra.mxu0 0.0
    %3024 = vmatpush.msra.mxu0 %v2947
    %3025 = vmatmul.f32.gmra.mxu0 %v2939
    %v3026 = vpop.f32.mrf.mxu0
    %v3027 = vadd.f32 %v111, %v3026
    %3028 = vdwg.mxu0
    %v3029 = vadd.f32 %v2967, %v2869
    %v3030 = vadd.f32 %v2987, %v2889
    %v3031 = vadd.f32 %v3007, %v2909
    %v3032 = vadd.f32 %v3027, %v2929
    %v3033 = vsub.f32 0.0, %v3029
    %v3034 = vsub.f32 0.0, %v3030
    %v3035 = vsub.f32 0.0, %v3031
    %v3036 = vmul.f32 %v3033, 1.442695
    %v3037 = vpow.pop %v3036
    %v3038 = vmul.f32 %v3034, 1.442695
    %v3039 = vpow.pop %v3038
    %v3040 = vmul.f32 %v3035, 1.442695
    %v3041 = vpow.pop %v3040
    %v3042 = vadd.f32 %v3037, 1.0
    %v3043 = vadd.f32 %v3039, 1.0
    %v3044 = vadd.f32 %v3041, 1.0
    %v3045 = vrcp.pop %v3042
    %v3046 = vmul.f32 %v3042, %v3045
    %v3047 = vsub.f32 1.0, %v3046
    %v3048 = vmul.f32 %v3045, %v3047
    %v3049 = vadd.f32 %v3045, %v3048
    %vm3050 = vweird.f32 %v3042
    %vm3051 = vweird.f32 %v3045
    %vm3052 = vmor %vm3050, %vm3051
    %v3053 = vsel %vm3052, %v3045, %v3049
    %v3054 = vand.u32 2147483647, %v3042
    %vm3055 = vcmp.eq.f32.partialorder %v3054, 8.507059e+37
    %v3056 = vand.u32 %v3042, 2147483648
    %v3057 = vor.u32 1.1754944e-38, %v3056
    %v3058 = vsel %vm3055, %v3057, %v3053
    %v3059 = vmul.f32 1.0, %v3058
    %v3060 = vrcp.pop %v3043
    %v3061 = vmul.f32 %v3043, %v3060
    %v3062 = vsub.f32 1.0, %v3061
    %v3063 = vmul.f32 %v3060, %v3062
    %v3064 = vadd.f32 %v3060, %v3063
    %vm3065 = vweird.f32 %v3043
    %vm3066 = vweird.f32 %v3060
    %vm3067 = vmor %vm3065, %vm3066
    %v3068 = vsel %vm3067, %v3060, %v3064
    %v3069 = vand.u32 2147483647, %v3043
    %vm3070 = vcmp.eq.f32.partialorder %v3069, 8.507059e+37
    %v3071 = vand.u32 %v3043, 2147483648
    %v3072 = vor.u32 1.1754944e-38, %v3071
    %v3073 = vsel %vm3070, %v3072, %v3068
    %v3074 = vmul.f32 1.0, %v3073
    %v3075 = vrcp.pop %v3044
    %v3076 = vmul.f32 %v3044, %v3075
    %v3077 = vsub.f32 1.0, %v3076
    %v3078 = vmul.f32 %v3075, %v3077
    %v3079 = vadd.f32 %v3075, %v3078
    %vm3080 = vweird.f32 %v3044
    %vm3081 = vweird.f32 %v3075
    %vm3082 = vmor %vm3080, %vm3081
    %v3083 = vsel %vm3082, %v3075, %v3079
    %v3084 = vand.u32 2147483647, %v3044
    %vm3085 = vcmp.eq.f32.partialorder %v3084, 8.507059e+37
    %v3086 = vand.u32 %v3044, 2147483648
    %v3087 = vor.u32 1.1754944e-38, %v3086
    %v3088 = vsel %vm3085, %v3087, %v3083
    %v3089 = vmul.f32 1.0, %v3088
    %v3090 = vtanh.pop %v3032
    %v3091 = vmul.f32 %v3074, %v2845
    %v3092 = vmul.f32 %v3059, %v3090
    %v3093 = vadd.f32 %v3091, %v3092
    %v3094 = vtanh.pop %v3093
    %v3095 = vmul.f32 %v3089, %v3094
    %3096 = vst [vmem:[#allocation7 + $0x58] sm:$0xff] %v3095
    %s3097 = scalar_lea.vmem %s0, 96
    %v3098 = vld [vmem:[%s3097] sm:$0xff]
    %3099 = vmatpush.msra.mxu0 %v102
    %3100 = vmatpush.msra.mxu0 %v98
    %3101 = vmatpush.msra.mxu0 %v94
    %3102 = vmatpush.msra.mxu0 %v90
    %3103 = vmatpush.msra.mxu0 %v86
    %3104 = vmatpush.msra.mxu0 %v82
    %3105 = vmatpush.msra.mxu0 %v78
    %3106 = vmatpush.msra.mxu0 %v74
    %3107 = vmatpush.msra.mxu0 %v70
    %3108 = vmatpush.msra.mxu0 %v66
    %3109 = vmatpush.msra.mxu0 %v62
    %3110 = vmatpush.msra.mxu0 %v58
    %3111 = vmatpush.msra.mxu0 %v54
    %3112 = vmatpush.msra.mxu0 %v50
    %3113 = vmatpush.msra.mxu0 %v46
    %3114 = vmatpush.msra.mxu0 %v42
    %3115 = vmatmul.f32.gmra.mxu0 %v3095
    %v3116 = vpop.f32.mrf.mxu0
    %v3117 = vadd.f32 0.0, %v3116
    %3118 = vdwg.mxu0
    %3119 = vmatpush.msra.mxu0 %v103
    %3120 = vmatpush.msra.mxu0 %v99
    %3121 = vmatpush.msra.mxu0 %v95
    %3122 = vmatpush.msra.mxu0 %v91
    %3123 = vmatpush.msra.mxu0 %v87
    %3124 = vmatpush.msra.mxu0 %v83
    %3125 = vmatpush.msra.mxu0 %v79
    %3126 = vmatpush.msra.mxu0 %v75
    %3127 = vmatpush.msra.mxu0 %v71
    %3128 = vmatpush.msra.mxu0 %v67
    %3129 = vmatpush.msra.mxu0 %v63
    %3130 = vmatpush.msra.mxu0 %v59
    %3131 = vmatpush.msra.mxu0 %v55
    %3132 = vmatpush.msra.mxu0 %v51
    %3133 = vmatpush.msra.mxu0 %v47
    %3134 = vmatpush.msra.mxu0 %v43
    %3135 = vmatmul.f32.gmra.mxu0 %v3095
    %v3136 = vpop.f32.mrf.mxu0
    %v3137 = vadd.f32 0.0, %v3136
    %3138 = vdwg.mxu0
    %3139 = vmatpush.msra.mxu0 %v104
    %3140 = vmatpush.msra.mxu0 %v100
    %3141 = vmatpush.msra.mxu0 %v96
    %3142 = vmatpush.msra.mxu0 %v92
    %3143 = vmatpush.msra.mxu0 %v88
    %3144 = vmatpush.msra.mxu0 %v84
    %3145 = vmatpush.msra.mxu0 %v80
    %3146 = vmatpush.msra.mxu0 %v76
    %3147 = vmatpush.msra.mxu0 %v72
    %3148 = vmatpush.msra.mxu0 %v68
    %3149 = vmatpush.msra.mxu0 %v64
    %3150 = vmatpush.msra.mxu0 %v60
    %3151 = vmatpush.msra.mxu0 %v56
    %3152 = vmatpush.msra.mxu0 %v52
    %3153 = vmatpush.msra.mxu0 %v48
    %3154 = vmatpush.msra.mxu0 %v44
    %3155 = vmatmul.f32.gmra.mxu0 %v3095
    %v3156 = vpop.f32.mrf.mxu0
    %v3157 = vadd.f32 0.0, %v3156
    %3158 = vdwg.mxu0
    %3159 = vmatpush.msra.mxu0 %v105
    %3160 = vmatpush.msra.mxu0 %v101
    %3161 = vmatpush.msra.mxu0 %v97
    %3162 = vmatpush.msra.mxu0 %v93
    %3163 = vmatpush.msra.mxu0 %v89
    %3164 = vmatpush.msra.mxu0 %v85
    %3165 = vmatpush.msra.mxu0 %v81
    %3166 = vmatpush.msra.mxu0 %v77
    %3167 = vmatpush.msra.mxu0 %v73
    %3168 = vmatpush.msra.mxu0 %v69
    %3169 = vmatpush.msra.mxu0 %v65
    %3170 = vmatpush.msra.mxu0 %v61
    %3171 = vmatpush.msra.mxu0 %v57
    %3172 = vmatpush.msra.mxu0 %v53
    %3173 = vmatpush.msra.mxu0 %v49
    %3174 = vmatpush.msra.mxu0 %v45
    %3175 = vmatmul.f32.gmra.mxu0 %v3095
    %v3176 = vpop.f32.mrf.mxu0
    %v3177 = vadd.f32 0.0, %v3176
    %3178 = vdwg.mxu0
    %3179 = vst [vmem:[#allocation1] ss:$2 sm:$0xff] %v40
    %s3180 = scalar_lea.vmem [#allocation1], 16
    %3181 = vst [vmem:[%s3180] ss:$2 sm:$0xff] %v41
    %v3182 = vld.sshfl [vmem:[#allocation1] sm:$0xff pattern:$0x75316420]
    %v3183 = vld.sshfl [vmem:[#allocation1 + $0x8] sm:$0xff pattern:$0x75316420]
    %v3184 = vld.sshfl [vmem:[#allocation1 + $0x10] sm:$0xff pattern:$0x75316420]
    %v3185 = vld.sshfl [vmem:[#allocation1 + $0x18] sm:$0xff pattern:$0x75316420]
    %v3187 = vsel %vm208, %v3098, 0
    %v3189 = vsel %vm212, %v3182, 0
    %v3191 = vsel %vm212, %v3183, 0
    %v3193 = vsel %vm212, %v3184, 0
    %v3195 = vsel %vm212, %v3185, 0
    %3197 = vmatpush.msra.mxu0 0.0
    %3198 = vmatpush.msra.mxu0 0.0
    %3199 = vmatpush.msra.mxu0 0.0
    %3200 = vmatpush.msra.mxu0 0.0
    %3201 = vmatpush.msra.mxu0 0.0
    %3202 = vmatpush.msra.mxu0 0.0
    %3203 = vmatpush.msra.mxu0 0.0
    %3204 = vmatpush.msra.mxu0 0.0
    %3205 = vmatpush.msra.mxu0 0.0
    %3206 = vmatpush.msra.mxu0 0.0
    %3207 = vmatpush.msra.mxu0 0.0
    %3208 = vmatpush.msra.mxu0 0.0
    %3209 = vmatpush.msra.mxu0 0.0
    %3210 = vmatpush.msra.mxu0 0.0
    %3211 = vmatpush.msra.mxu0 0.0
    %3212 = vmatpush.msra.mxu0 %v3189
    %3213 = vmatmul.f32.gmra.mxu0 %v3187
    %v3214 = vpop.f32.mrf.mxu0
    %v3215 = vadd.f32 %v108, %v3214
    %3216 = vdwg.mxu0
    %3217 = vmatpush.msra.mxu0 0.0
    %3218 = vmatpush.msra.mxu0 0.0
    %3219 = vmatpush.msra.mxu0 0.0
    %3220 = vmatpush.msra.mxu0 0.0
    %3221 = vmatpush.msra.mxu0 0.0
    %3222 = vmatpush.msra.mxu0 0.0
    %3223 = vmatpush.msra.mxu0 0.0
    %3224 = vmatpush.msra.mxu0 0.0
    %3225 = vmatpush.msra.mxu0 0.0
    %3226 = vmatpush.msra.mxu0 0.0
    %3227 = vmatpush.msra.mxu0 0.0
    %3228 = vmatpush.msra.mxu0 0.0
    %3229 = vmatpush.msra.mxu0 0.0
    %3230 = vmatpush.msra.mxu0 0.0
    %3231 = vmatpush.msra.mxu0 0.0
    %3232 = vmatpush.msra.mxu0 %v3191
    %3233 = vmatmul.f32.gmra.mxu0 %v3187
    %v3234 = vpop.f32.mrf.mxu0
    %v3235 = vadd.f32 %v109, %v3234
    %3236 = vdwg.mxu0
    %3237 = vmatpush.msra.mxu0 0.0
    %3238 = vmatpush.msra.mxu0 0.0
    %3239 = vmatpush.msra.mxu0 0.0
    %3240 = vmatpush.msra.mxu0 0.0
    %3241 = vmatpush.msra.mxu0 0.0
    %3242 = vmatpush.msra.mxu0 0.0
    %3243 = vmatpush.msra.mxu0 0.0
    %3244 = vmatpush.msra.mxu0 0.0
    %3245 = vmatpush.msra.mxu0 0.0
    %3246 = vmatpush.msra.mxu0 0.0
    %3247 = vmatpush.msra.mxu0 0.0
    %3248 = vmatpush.msra.mxu0 0.0
    %3249 = vmatpush.msra.mxu0 0.0
    %3250 = vmatpush.msra.mxu0 0.0
    %3251 = vmatpush.msra.mxu0 0.0
    %3252 = vmatpush.msra.mxu0 %v3193
    %3253 = vmatmul.f32.gmra.mxu0 %v3187
    %v3254 = vpop.f32.mrf.mxu0
    %v3255 = vadd.f32 %v110, %v3254
    %3256 = vdwg.mxu0
    %3257 = vmatpush.msra.mxu0 0.0
    %3258 = vmatpush.msra.mxu0 0.0
    %3259 = vmatpush.msra.mxu0 0.0
    %3260 = vmatpush.msra.mxu0 0.0
    %3261 = vmatpush.msra.mxu0 0.0
    %3262 = vmatpush.msra.mxu0 0.0
    %3263 = vmatpush.msra.mxu0 0.0
    %3264 = vmatpush.msra.mxu0 0.0
    %3265 = vmatpush.msra.mxu0 0.0
    %3266 = vmatpush.msra.mxu0 0.0
    %3267 = vmatpush.msra.mxu0 0.0
    %3268 = vmatpush.msra.mxu0 0.0
    %3269 = vmatpush.msra.mxu0 0.0
    %3270 = vmatpush.msra.mxu0 0.0
    %3271 = vmatpush.msra.mxu0 0.0
    %3272 = vmatpush.msra.mxu0 %v3195
    %3273 = vmatmul.f32.gmra.mxu0 %v3187
    %v3274 = vpop.f32.mrf.mxu0
    %v3275 = vadd.f32 %v111, %v3274
    %3276 = vdwg.mxu0
    %v3277 = vadd.f32 %v3215, %v3117
    %v3278 = vadd.f32 %v3235, %v3137
    %v3279 = vadd.f32 %v3255, %v3157
    %v3280 = vadd.f32 %v3275, %v3177
    %v3281 = vsub.f32 0.0, %v3277
    %v3282 = vsub.f32 0.0, %v3278
    %v3283 = vsub.f32 0.0, %v3279
    %v3284 = vmul.f32 %v3281, 1.442695
    %v3285 = vpow.pop %v3284
    %v3286 = vmul.f32 %v3282, 1.442695
    %v3287 = vpow.pop %v3286
    %v3288 = vmul.f32 %v3283, 1.442695
    %v3289 = vpow.pop %v3288
    %v3290 = vadd.f32 %v3285, 1.0
    %v3291 = vadd.f32 %v3287, 1.0
    %v3292 = vadd.f32 %v3289, 1.0
    %v3293 = vrcp.pop %v3290
    %v3294 = vmul.f32 %v3290, %v3293
    %v3295 = vsub.f32 1.0, %v3294
    %v3296 = vmul.f32 %v3293, %v3295
    %v3297 = vadd.f32 %v3293, %v3296
    %vm3298 = vweird.f32 %v3290
    %vm3299 = vweird.f32 %v3293
    %vm3300 = vmor %vm3298, %vm3299
    %v3301 = vsel %vm3300, %v3293, %v3297
    %v3302 = vand.u32 2147483647, %v3290
    %vm3303 = vcmp.eq.f32.partialorder %v3302, 8.507059e+37
    %v3304 = vand.u32 %v3290, 2147483648
    %v3305 = vor.u32 1.1754944e-38, %v3304
    %v3306 = vsel %vm3303, %v3305, %v3301
    %v3307 = vmul.f32 1.0, %v3306
    %v3308 = vrcp.pop %v3291
    %v3309 = vmul.f32 %v3291, %v3308
    %v3310 = vsub.f32 1.0, %v3309
    %v3311 = vmul.f32 %v3308, %v3310
    %v3312 = vadd.f32 %v3308, %v3311
    %vm3313 = vweird.f32 %v3291
    %vm3314 = vweird.f32 %v3308
    %vm3315 = vmor %vm3313, %vm3314
    %v3316 = vsel %vm3315, %v3308, %v3312
    %v3317 = vand.u32 2147483647, %v3291
    %vm3318 = vcmp.eq.f32.partialorder %v3317, 8.507059e+37
    %v3319 = vand.u32 %v3291, 2147483648
    %v3320 = vor.u32 1.1754944e-38, %v3319
    %v3321 = vsel %vm3318, %v3320, %v3316
    %v3322 = vmul.f32 1.0, %v3321
    %v3323 = vrcp.pop %v3292
    %v3324 = vmul.f32 %v3292, %v3323
    %v3325 = vsub.f32 1.0, %v3324
    %v3326 = vmul.f32 %v3323, %v3325
    %v3327 = vadd.f32 %v3323, %v3326
    %vm3328 = vweird.f32 %v3292
    %vm3329 = vweird.f32 %v3323
    %vm3330 = vmor %vm3328, %vm3329
    %v3331 = vsel %vm3330, %v3323, %v3327
    %v3332 = vand.u32 2147483647, %v3292
    %vm3333 = vcmp.eq.f32.partialorder %v3332, 8.507059e+37
    %v3334 = vand.u32 %v3292, 2147483648
    %v3335 = vor.u32 1.1754944e-38, %v3334
    %v3336 = vsel %vm3333, %v3335, %v3331
    %v3337 = vmul.f32 1.0, %v3336
    %v3338 = vtanh.pop %v3280
    %v3339 = vmul.f32 %v3322, %v3093
    %v3340 = vmul.f32 %v3307, %v3338
    %v3341 = vadd.f32 %v3339, %v3340
    %v3342 = vtanh.pop %v3341
    %v3343 = vmul.f32 %v3337, %v3342
    %3344 = vst [vmem:[#allocation7 + $0x60] sm:$0xff] %v3343
    %s3345 = scalar_lea.vmem %s0, 104
    %v3346 = vld [vmem:[%s3345] sm:$0xff]
    %3347 = vmatpush.msra.mxu0 %v102
    %3348 = vmatpush.msra.mxu0 %v98
    %3349 = vmatpush.msra.mxu0 %v94
    %3350 = vmatpush.msra.mxu0 %v90
    %3351 = vmatpush.msra.mxu0 %v86
    %3352 = vmatpush.msra.mxu0 %v82
    %3353 = vmatpush.msra.mxu0 %v78
    %3354 = vmatpush.msra.mxu0 %v74
    %3355 = vmatpush.msra.mxu0 %v70
    %3356 = vmatpush.msra.mxu0 %v66
    %3357 = vmatpush.msra.mxu0 %v62
    %3358 = vmatpush.msra.mxu0 %v58
    %3359 = vmatpush.msra.mxu0 %v54
    %3360 = vmatpush.msra.mxu0 %v50
    %3361 = vmatpush.msra.mxu0 %v46
    %3362 = vmatpush.msra.mxu0 %v42
    %3363 = vmatmul.f32.gmra.mxu0 %v3343
    %v3364 = vpop.f32.mrf.mxu0
    %v3365 = vadd.f32 0.0, %v3364
    %3366 = vdwg.mxu0
    %3367 = vmatpush.msra.mxu0 %v103
    %3368 = vmatpush.msra.mxu0 %v99
    %3369 = vmatpush.msra.mxu0 %v95
    %3370 = vmatpush.msra.mxu0 %v91
    %3371 = vmatpush.msra.mxu0 %v87
    %3372 = vmatpush.msra.mxu0 %v83
    %3373 = vmatpush.msra.mxu0 %v79
    %3374 = vmatpush.msra.mxu0 %v75
    %3375 = vmatpush.msra.mxu0 %v71
    %3376 = vmatpush.msra.mxu0 %v67
    %3377 = vmatpush.msra.mxu0 %v63
    %3378 = vmatpush.msra.mxu0 %v59
    %3379 = vmatpush.msra.mxu0 %v55
    %3380 = vmatpush.msra.mxu0 %v51
    %3381 = vmatpush.msra.mxu0 %v47
    %3382 = vmatpush.msra.mxu0 %v43
    %3383 = vmatmul.f32.gmra.mxu0 %v3343
    %v3384 = vpop.f32.mrf.mxu0
    %v3385 = vadd.f32 0.0, %v3384
    %3386 = vdwg.mxu0
    %3387 = vmatpush.msra.mxu0 %v104
    %3388 = vmatpush.msra.mxu0 %v100
    %3389 = vmatpush.msra.mxu0 %v96
    %3390 = vmatpush.msra.mxu0 %v92
    %3391 = vmatpush.msra.mxu0 %v88
    %3392 = vmatpush.msra.mxu0 %v84
    %3393 = vmatpush.msra.mxu0 %v80
    %3394 = vmatpush.msra.mxu0 %v76
    %3395 = vmatpush.msra.mxu0 %v72
    %3396 = vmatpush.msra.mxu0 %v68
    %3397 = vmatpush.msra.mxu0 %v64
    %3398 = vmatpush.msra.mxu0 %v60
    %3399 = vmatpush.msra.mxu0 %v56
    %3400 = vmatpush.msra.mxu0 %v52
    %3401 = vmatpush.msra.mxu0 %v48
    %3402 = vmatpush.msra.mxu0 %v44
    %3403 = vmatmul.f32.gmra.mxu0 %v3343
    %v3404 = vpop.f32.mrf.mxu0
    %v3405 = vadd.f32 0.0, %v3404
    %3406 = vdwg.mxu0
    %3407 = vmatpush.msra.mxu0 %v105
    %3408 = vmatpush.msra.mxu0 %v101
    %3409 = vmatpush.msra.mxu0 %v97
    %3410 = vmatpush.msra.mxu0 %v93
    %3411 = vmatpush.msra.mxu0 %v89
    %3412 = vmatpush.msra.mxu0 %v85
    %3413 = vmatpush.msra.mxu0 %v81
    %3414 = vmatpush.msra.mxu0 %v77
    %3415 = vmatpush.msra.mxu0 %v73
    %3416 = vmatpush.msra.mxu0 %v69
    %3417 = vmatpush.msra.mxu0 %v65
    %3418 = vmatpush.msra.mxu0 %v61
    %3419 = vmatpush.msra.mxu0 %v57
    %3420 = vmatpush.msra.mxu0 %v53
    %3421 = vmatpush.msra.mxu0 %v49
    %3422 = vmatpush.msra.mxu0 %v45
    %3423 = vmatmul.f32.gmra.mxu0 %v3343
    %v3424 = vpop.f32.mrf.mxu0
    %v3425 = vadd.f32 0.0, %v3424
    %3426 = vdwg.mxu0
    %3427 = vst [vmem:[#allocation1] ss:$2 sm:$0xff] %v40
    %s3428 = scalar_lea.vmem [#allocation1], 16
    %3429 = vst [vmem:[%s3428] ss:$2 sm:$0xff] %v41
    %v3430 = vld.sshfl [vmem:[#allocation1] sm:$0xff pattern:$0x75316420]
    %v3431 = vld.sshfl [vmem:[#allocation1 + $0x8] sm:$0xff pattern:$0x75316420]
    %v3432 = vld.sshfl [vmem:[#allocation1 + $0x10] sm:$0xff pattern:$0x75316420]
    %v3433 = vld.sshfl [vmem:[#allocation1 + $0x18] sm:$0xff pattern:$0x75316420]
    %v3435 = vsel %vm208, %v3346, 0
    %v3437 = vsel %vm212, %v3430, 0
    %v3439 = vsel %vm212, %v3431, 0
    %v3441 = vsel %vm212, %v3432, 0
    %v3443 = vsel %vm212, %v3433, 0
    %3445 = vmatpush.msra.mxu0 0.0
    %3446 = vmatpush.msra.mxu0 0.0
    %3447 = vmatpush.msra.mxu0 0.0
    %3448 = vmatpush.msra.mxu0 0.0
    %3449 = vmatpush.msra.mxu0 0.0
    %3450 = vmatpush.msra.mxu0 0.0
    %3451 = vmatpush.msra.mxu0 0.0
    %3452 = vmatpush.msra.mxu0 0.0
    %3453 = vmatpush.msra.mxu0 0.0
    %3454 = vmatpush.msra.mxu0 0.0
    %3455 = vmatpush.msra.mxu0 0.0
    %3456 = vmatpush.msra.mxu0 0.0
    %3457 = vmatpush.msra.mxu0 0.0
    %3458 = vmatpush.msra.mxu0 0.0
    %3459 = vmatpush.msra.mxu0 0.0
    %3460 = vmatpush.msra.mxu0 %v3437
    %3461 = vmatmul.f32.gmra.mxu0 %v3435
    %v3462 = vpop.f32.mrf.mxu0
    %v3463 = vadd.f32 %v108, %v3462
    %3464 = vdwg.mxu0
    %3465 = vmatpush.msra.mxu0 0.0
    %3466 = vmatpush.msra.mxu0 0.0
    %3467 = vmatpush.msra.mxu0 0.0
    %3468 = vmatpush.msra.mxu0 0.0
    %3469 = vmatpush.msra.mxu0 0.0
    %3470 = vmatpush.msra.mxu0 0.0
    %3471 = vmatpush.msra.mxu0 0.0
    %3472 = vmatpush.msra.mxu0 0.0
    %3473 = vmatpush.msra.mxu0 0.0
    %3474 = vmatpush.msra.mxu0 0.0
    %3475 = vmatpush.msra.mxu0 0.0
    %3476 = vmatpush.msra.mxu0 0.0
    %3477 = vmatpush.msra.mxu0 0.0
    %3478 = vmatpush.msra.mxu0 0.0
    %3479 = vmatpush.msra.mxu0 0.0
    %3480 = vmatpush.msra.mxu0 %v3439
    %3481 = vmatmul.f32.gmra.mxu0 %v3435
    %v3482 = vpop.f32.mrf.mxu0
    %v3483 = vadd.f32 %v109, %v3482
    %3484 = vdwg.mxu0
    %3485 = vmatpush.msra.mxu0 0.0
    %3486 = vmatpush.msra.mxu0 0.0
    %3487 = vmatpush.msra.mxu0 0.0
    %3488 = vmatpush.msra.mxu0 0.0
    %3489 = vmatpush.msra.mxu0 0.0
    %3490 = vmatpush.msra.mxu0 0.0
    %3491 = vmatpush.msra.mxu0 0.0
    %3492 = vmatpush.msra.mxu0 0.0
    %3493 = vmatpush.msra.mxu0 0.0
    %3494 = vmatpush.msra.mxu0 0.0
    %3495 = vmatpush.msra.mxu0 0.0
    %3496 = vmatpush.msra.mxu0 0.0
    %3497 = vmatpush.msra.mxu0 0.0
    %3498 = vmatpush.msra.mxu0 0.0
    %3499 = vmatpush.msra.mxu0 0.0
    %3500 = vmatpush.msra.mxu0 %v3441
    %3501 = vmatmul.f32.gmra.mxu0 %v3435
    %v3502 = vpop.f32.mrf.mxu0
    %v3503 = vadd.f32 %v110, %v3502
    %3504 = vdwg.mxu0
    %3505 = vmatpush.msra.mxu0 0.0
    %3506 = vmatpush.msra.mxu0 0.0
    %3507 = vmatpush.msra.mxu0 0.0
    %3508 = vmatpush.msra.mxu0 0.0
    %3509 = vmatpush.msra.mxu0 0.0
    %3510 = vmatpush.msra.mxu0 0.0
    %3511 = vmatpush.msra.mxu0 0.0
    %3512 = vmatpush.msra.mxu0 0.0
    %3513 = vmatpush.msra.mxu0 0.0
    %3514 = vmatpush.msra.mxu0 0.0
    %3515 = vmatpush.msra.mxu0 0.0
    %3516 = vmatpush.msra.mxu0 0.0
    %3517 = vmatpush.msra.mxu0 0.0
    %3518 = vmatpush.msra.mxu0 0.0
    %3519 = vmatpush.msra.mxu0 0.0
    %3520 = vmatpush.msra.mxu0 %v3443
    %3521 = vmatmul.f32.gmra.mxu0 %v3435
    %v3522 = vpop.f32.mrf.mxu0
    %v3523 = vadd.f32 %v111, %v3522
    %3524 = vdwg.mxu0
    %v3525 = vadd.f32 %v3463, %v3365
    %v3526 = vadd.f32 %v3483, %v3385
    %v3527 = vadd.f32 %v3503, %v3405
    %v3528 = vadd.f32 %v3523, %v3425
    %v3529 = vsub.f32 0.0, %v3525
    %v3530 = vsub.f32 0.0, %v3526
    %v3531 = vsub.f32 0.0, %v3527
    %v3532 = vmul.f32 %v3529, 1.442695
    %v3533 = vpow.pop %v3532
    %v3534 = vmul.f32 %v3530, 1.442695
    %v3535 = vpow.pop %v3534
    %v3536 = vmul.f32 %v3531, 1.442695
    %v3537 = vpow.pop %v3536
    %v3538 = vadd.f32 %v3533, 1.0
    %v3539 = vadd.f32 %v3535, 1.0
    %v3540 = vadd.f32 %v3537, 1.0
    %v3541 = vrcp.pop %v3538
    %v3542 = vmul.f32 %v3538, %v3541
    %v3543 = vsub.f32 1.0, %v3542
    %v3544 = vmul.f32 %v3541, %v3543
    %v3545 = vadd.f32 %v3541, %v3544
    %vm3546 = vweird.f32 %v3538
    %vm3547 = vweird.f32 %v3541
    %vm3548 = vmor %vm3546, %vm3547
    %v3549 = vsel %vm3548, %v3541, %v3545
    %v3550 = vand.u32 2147483647, %v3538
    %vm3551 = vcmp.eq.f32.partialorder %v3550, 8.507059e+37
    %v3552 = vand.u32 %v3538, 2147483648
    %v3553 = vor.u32 1.1754944e-38, %v3552
    %v3554 = vsel %vm3551, %v3553, %v3549
    %v3555 = vmul.f32 1.0, %v3554
    %v3556 = vrcp.pop %v3539
    %v3557 = vmul.f32 %v3539, %v3556
    %v3558 = vsub.f32 1.0, %v3557
    %v3559 = vmul.f32 %v3556, %v3558
    %v3560 = vadd.f32 %v3556, %v3559
    %vm3561 = vweird.f32 %v3539
    %vm3562 = vweird.f32 %v3556
    %vm3563 = vmor %vm3561, %vm3562
    %v3564 = vsel %vm3563, %v3556, %v3560
    %v3565 = vand.u32 2147483647, %v3539
    %vm3566 = vcmp.eq.f32.partialorder %v3565, 8.507059e+37
    %v3567 = vand.u32 %v3539, 2147483648
    %v3568 = vor.u32 1.1754944e-38, %v3567
    %v3569 = vsel %vm3566, %v3568, %v3564
    %v3570 = vmul.f32 1.0, %v3569
    %v3571 = vrcp.pop %v3540
    %v3572 = vmul.f32 %v3540, %v3571
    %v3573 = vsub.f32 1.0, %v3572
    %v3574 = vmul.f32 %v3571, %v3573
    %v3575 = vadd.f32 %v3571, %v3574
    %vm3576 = vweird.f32 %v3540
    %vm3577 = vweird.f32 %v3571
    %vm3578 = vmor %vm3576, %vm3577
    %v3579 = vsel %vm3578, %v3571, %v3575
    %v3580 = vand.u32 2147483647, %v3540
    %vm3581 = vcmp.eq.f32.partialorder %v3580, 8.507059e+37
    %v3582 = vand.u32 %v3540, 2147483648
    %v3583 = vor.u32 1.1754944e-38, %v3582
    %v3584 = vsel %vm3581, %v3583, %v3579
    %v3585 = vmul.f32 1.0, %v3584
    %v3586 = vtanh.pop %v3528
    %v3587 = vmul.f32 %v3570, %v3341
    %v3588 = vmul.f32 %v3555, %v3586
    %v3589 = vadd.f32 %v3587, %v3588
    %v3590 = vtanh.pop %v3589
    %v3591 = vmul.f32 %v3585, %v3590
    %3592 = vst [vmem:[#allocation7 + $0x68] sm:$0xff] %v3591
    %s3593 = scalar_lea.vmem %s0, 112
    %v3594 = vld [vmem:[%s3593] sm:$0xff]
    %3595 = vmatpush.msra.mxu0 %v102
    %3596 = vmatpush.msra.mxu0 %v98
    %3597 = vmatpush.msra.mxu0 %v94
    %3598 = vmatpush.msra.mxu0 %v90
    %3599 = vmatpush.msra.mxu0 %v86
    %3600 = vmatpush.msra.mxu0 %v82
    %3601 = vmatpush.msra.mxu0 %v78
    %3602 = vmatpush.msra.mxu0 %v74
    %3603 = vmatpush.msra.mxu0 %v70
    %3604 = vmatpush.msra.mxu0 %v66
    %3605 = vmatpush.msra.mxu0 %v62
    %3606 = vmatpush.msra.mxu0 %v58
    %3607 = vmatpush.msra.mxu0 %v54
    %3608 = vmatpush.msra.mxu0 %v50
    %3609 = vmatpush.msra.mxu0 %v46
    %3610 = vmatpush.msra.mxu0 %v42
    %3611 = vmatmul.f32.gmra.mxu0 %v3591
    %v3612 = vpop.f32.mrf.mxu0
    %v3613 = vadd.f32 0.0, %v3612
    %3614 = vdwg.mxu0
    %3615 = vmatpush.msra.mxu0 %v103
    %3616 = vmatpush.msra.mxu0 %v99
    %3617 = vmatpush.msra.mxu0 %v95
    %3618 = vmatpush.msra.mxu0 %v91
    %3619 = vmatpush.msra.mxu0 %v87
    %3620 = vmatpush.msra.mxu0 %v83
    %3621 = vmatpush.msra.mxu0 %v79
    %3622 = vmatpush.msra.mxu0 %v75
    %3623 = vmatpush.msra.mxu0 %v71
    %3624 = vmatpush.msra.mxu0 %v67
    %3625 = vmatpush.msra.mxu0 %v63
    %3626 = vmatpush.msra.mxu0 %v59
    %3627 = vmatpush.msra.mxu0 %v55
    %3628 = vmatpush.msra.mxu0 %v51
    %3629 = vmatpush.msra.mxu0 %v47
    %3630 = vmatpush.msra.mxu0 %v43
    %3631 = vmatmul.f32.gmra.mxu0 %v3591
    %v3632 = vpop.f32.mrf.mxu0
    %v3633 = vadd.f32 0.0, %v3632
    %3634 = vdwg.mxu0
    %3635 = vmatpush.msra.mxu0 %v104
    %3636 = vmatpush.msra.mxu0 %v100
    %3637 = vmatpush.msra.mxu0 %v96
    %3638 = vmatpush.msra.mxu0 %v92
    %3639 = vmatpush.msra.mxu0 %v88
    %3640 = vmatpush.msra.mxu0 %v84
    %3641 = vmatpush.msra.mxu0 %v80
    %3642 = vmatpush.msra.mxu0 %v76
    %3643 = vmatpush.msra.mxu0 %v72
    %3644 = vmatpush.msra.mxu0 %v68
    %3645 = vmatpush.msra.mxu0 %v64
    %3646 = vmatpush.msra.mxu0 %v60
    %3647 = vmatpush.msra.mxu0 %v56
    %3648 = vmatpush.msra.mxu0 %v52
    %3649 = vmatpush.msra.mxu0 %v48
    %3650 = vmatpush.msra.mxu0 %v44
    %3651 = vmatmul.f32.gmra.mxu0 %v3591
    %v3652 = vpop.f32.mrf.mxu0
    %v3653 = vadd.f32 0.0, %v3652
    %3654 = vdwg.mxu0
    %3655 = vmatpush.msra.mxu0 %v105
    %3656 = vmatpush.msra.mxu0 %v101
    %3657 = vmatpush.msra.mxu0 %v97
    %3658 = vmatpush.msra.mxu0 %v93
    %3659 = vmatpush.msra.mxu0 %v89
    %3660 = vmatpush.msra.mxu0 %v85
    %3661 = vmatpush.msra.mxu0 %v81
    %3662 = vmatpush.msra.mxu0 %v77
    %3663 = vmatpush.msra.mxu0 %v73
    %3664 = vmatpush.msra.mxu0 %v69
    %3665 = vmatpush.msra.mxu0 %v65
    %3666 = vmatpush.msra.mxu0 %v61
    %3667 = vmatpush.msra.mxu0 %v57
    %3668 = vmatpush.msra.mxu0 %v53
    %3669 = vmatpush.msra.mxu0 %v49
    %3670 = vmatpush.msra.mxu0 %v45
    %3671 = vmatmul.f32.gmra.mxu0 %v3591
    %v3672 = vpop.f32.mrf.mxu0
    %v3673 = vadd.f32 0.0, %v3672
    %3674 = vdwg.mxu0
    %3675 = vst [vmem:[#allocation1] ss:$2 sm:$0xff] %v40
    %s3676 = scalar_lea.vmem [#allocation1], 16
    %3677 = vst [vmem:[%s3676] ss:$2 sm:$0xff] %v41
    %v3678 = vld.sshfl [vmem:[#allocation1] sm:$0xff pattern:$0x75316420]
    %v3679 = vld.sshfl [vmem:[#allocation1 + $0x8] sm:$0xff pattern:$0x75316420]
    %v3680 = vld.sshfl [vmem:[#allocation1 + $0x10] sm:$0xff pattern:$0x75316420]
    %v3681 = vld.sshfl [vmem:[#allocation1 + $0x18] sm:$0xff pattern:$0x75316420]
    %v3683 = vsel %vm208, %v3594, 0
    %v3685 = vsel %vm212, %v3678, 0
    %v3687 = vsel %vm212, %v3679, 0
    %v3689 = vsel %vm212, %v3680, 0
    %v3691 = vsel %vm212, %v3681, 0
    %3693 = vmatpush.msra.mxu0 0.0
    %3694 = vmatpush.msra.mxu0 0.0
    %3695 = vmatpush.msra.mxu0 0.0
    %3696 = vmatpush.msra.mxu0 0.0
    %3697 = vmatpush.msra.mxu0 0.0
    %3698 = vmatpush.msra.mxu0 0.0
    %3699 = vmatpush.msra.mxu0 0.0
    %3700 = vmatpush.msra.mxu0 0.0
    %3701 = vmatpush.msra.mxu0 0.0
    %3702 = vmatpush.msra.mxu0 0.0
    %3703 = vmatpush.msra.mxu0 0.0
    %3704 = vmatpush.msra.mxu0 0.0
    %3705 = vmatpush.msra.mxu0 0.0
    %3706 = vmatpush.msra.mxu0 0.0
    %3707 = vmatpush.msra.mxu0 0.0
    %3708 = vmatpush.msra.mxu0 %v3685
    %3709 = vmatmul.f32.gmra.mxu0 %v3683
    %v3710 = vpop.f32.mrf.mxu0
    %v3711 = vadd.f32 %v108, %v3710
    %3712 = vdwg.mxu0
    %3713 = vmatpush.msra.mxu0 0.0
    %3714 = vmatpush.msra.mxu0 0.0
    %3715 = vmatpush.msra.mxu0 0.0
    %3716 = vmatpush.msra.mxu0 0.0
    %3717 = vmatpush.msra.mxu0 0.0
    %3718 = vmatpush.msra.mxu0 0.0
    %3719 = vmatpush.msra.mxu0 0.0
    %3720 = vmatpush.msra.mxu0 0.0
    %3721 = vmatpush.msra.mxu0 0.0
    %3722 = vmatpush.msra.mxu0 0.0
    %3723 = vmatpush.msra.mxu0 0.0
    %3724 = vmatpush.msra.mxu0 0.0
    %3725 = vmatpush.msra.mxu0 0.0
    %3726 = vmatpush.msra.mxu0 0.0
    %3727 = vmatpush.msra.mxu0 0.0
    %3728 = vmatpush.msra.mxu0 %v3687
    %3729 = vmatmul.f32.gmra.mxu0 %v3683
    %v3730 = vpop.f32.mrf.mxu0
    %v3731 = vadd.f32 %v109, %v3730
    %3732 = vdwg.mxu0
    %3733 = vmatpush.msra.mxu0 0.0
    %3734 = vmatpush.msra.mxu0 0.0
    %3735 = vmatpush.msra.mxu0 0.0
    %3736 = vmatpush.msra.mxu0 0.0
    %3737 = vmatpush.msra.mxu0 0.0
    %3738 = vmatpush.msra.mxu0 0.0
    %3739 = vmatpush.msra.mxu0 0.0
    %3740 = vmatpush.msra.mxu0 0.0
    %3741 = vmatpush.msra.mxu0 0.0
    %3742 = vmatpush.msra.mxu0 0.0
    %3743 = vmatpush.msra.mxu0 0.0
    %3744 = vmatpush.msra.mxu0 0.0
    %3745 = vmatpush.msra.mxu0 0.0
    %3746 = vmatpush.msra.mxu0 0.0
    %3747 = vmatpush.msra.mxu0 0.0
    %3748 = vmatpush.msra.mxu0 %v3689
    %3749 = vmatmul.f32.gmra.mxu0 %v3683
    %v3750 = vpop.f32.mrf.mxu0
    %v3751 = vadd.f32 %v110, %v3750
    %3752 = vdwg.mxu0
    %3753 = vmatpush.msra.mxu0 0.0
    %3754 = vmatpush.msra.mxu0 0.0
    %3755 = vmatpush.msra.mxu0 0.0
    %3756 = vmatpush.msra.mxu0 0.0
    %3757 = vmatpush.msra.mxu0 0.0
    %3758 = vmatpush.msra.mxu0 0.0
    %3759 = vmatpush.msra.mxu0 0.0
    %3760 = vmatpush.msra.mxu0 0.0
    %3761 = vmatpush.msra.mxu0 0.0
    %3762 = vmatpush.msra.mxu0 0.0
    %3763 = vmatpush.msra.mxu0 0.0
    %3764 = vmatpush.msra.mxu0 0.0
    %3765 = vmatpush.msra.mxu0 0.0
    %3766 = vmatpush.msra.mxu0 0.0
    %3767 = vmatpush.msra.mxu0 0.0
    %3768 = vmatpush.msra.mxu0 %v3691
    %3769 = vmatmul.f32.gmra.mxu0 %v3683
    %v3770 = vpop.f32.mrf.mxu0
    %v3771 = vadd.f32 %v111, %v3770
    %3772 = vdwg.mxu0
    %v3773 = vadd.f32 %v3711, %v3613
    %v3774 = vadd.f32 %v3731, %v3633
    %v3775 = vadd.f32 %v3751, %v3653
    %v3776 = vadd.f32 %v3771, %v3673
    %v3777 = vsub.f32 0.0, %v3773
    %v3778 = vsub.f32 0.0, %v3774
    %v3779 = vsub.f32 0.0, %v3775
    %v3780 = vmul.f32 %v3777, 1.442695
    %v3781 = vpow.pop %v3780
    %v3782 = vmul.f32 %v3778, 1.442695
    %v3783 = vpow.pop %v3782
    %v3784 = vmul.f32 %v3779, 1.442695
    %v3785 = vpow.pop %v3784
    %v3786 = vadd.f32 %v3781, 1.0
    %v3787 = vadd.f32 %v3783, 1.0
    %v3788 = vadd.f32 %v3785, 1.0
    %v3789 = vrcp.pop %v3786
    %v3790 = vmul.f32 %v3786, %v3789
    %v3791 = vsub.f32 1.0, %v3790
    %v3792 = vmul.f32 %v3789, %v3791
    %v3793 = vadd.f32 %v3789, %v3792
    %vm3794 = vweird.f32 %v3786
    %vm3795 = vweird.f32 %v3789
    %vm3796 = vmor %vm3794, %vm3795
    %v3797 = vsel %vm3796, %v3789, %v3793
    %v3798 = vand.u32 2147483647, %v3786
    %vm3799 = vcmp.eq.f32.partialorder %v3798, 8.507059e+37
    %v3800 = vand.u32 %v3786, 2147483648
    %v3801 = vor.u32 1.1754944e-38, %v3800
    %v3802 = vsel %vm3799, %v3801, %v3797
    %v3803 = vmul.f32 1.0, %v3802
    %v3804 = vrcp.pop %v3787
    %v3805 = vmul.f32 %v3787, %v3804
    %v3806 = vsub.f32 1.0, %v3805
    %v3807 = vmul.f32 %v3804, %v3806
    %v3808 = vadd.f32 %v3804, %v3807
    %vm3809 = vweird.f32 %v3787
    %vm3810 = vweird.f32 %v3804
    %vm3811 = vmor %vm3809, %vm3810
    %v3812 = vsel %vm3811, %v3804, %v3808
    %v3813 = vand.u32 2147483647, %v3787
    %vm3814 = vcmp.eq.f32.partialorder %v3813, 8.507059e+37
    %v3815 = vand.u32 %v3787, 2147483648
    %v3816 = vor.u32 1.1754944e-38, %v3815
    %v3817 = vsel %vm3814, %v3816, %v3812
    %v3818 = vmul.f32 1.0, %v3817
    %v3819 = vrcp.pop %v3788
    %v3820 = vmul.f32 %v3788, %v3819
    %v3821 = vsub.f32 1.0, %v3820
    %v3822 = vmul.f32 %v3819, %v3821
    %v3823 = vadd.f32 %v3819, %v3822
    %vm3824 = vweird.f32 %v3788
    %vm3825 = vweird.f32 %v3819
    %vm3826 = vmor %vm3824, %vm3825
    %v3827 = vsel %vm3826, %v3819, %v3823
    %v3828 = vand.u32 2147483647, %v3788
    %vm3829 = vcmp.eq.f32.partialorder %v3828, 8.507059e+37
    %v3830 = vand.u32 %v3788, 2147483648
    %v3831 = vor.u32 1.1754944e-38, %v3830
    %v3832 = vsel %vm3829, %v3831, %v3827
    %v3833 = vmul.f32 1.0, %v3832
    %v3834 = vtanh.pop %v3776
    %v3835 = vmul.f32 %v3818, %v3589
    %v3836 = vmul.f32 %v3803, %v3834
    %v3837 = vadd.f32 %v3835, %v3836
    %v3838 = vtanh.pop %v3837
    %v3839 = vmul.f32 %v3833, %v3838
    %3840 = vst [vmem:[#allocation7 + $0x70] sm:$0xff] %v3839
    %s3841 = scalar_lea.vmem %s0, 120
    %v3842 = vld [vmem:[%s3841] sm:$0xff]
    %3843 = vmatpush.msra.mxu0 %v102
    %3844 = vmatpush.msra.mxu0 %v98
    %3845 = vmatpush.msra.mxu0 %v94
    %3846 = vmatpush.msra.mxu0 %v90
    %3847 = vmatpush.msra.mxu0 %v86
    %3848 = vmatpush.msra.mxu0 %v82
    %3849 = vmatpush.msra.mxu0 %v78
    %3850 = vmatpush.msra.mxu0 %v74
    %3851 = vmatpush.msra.mxu0 %v70
    %3852 = vmatpush.msra.mxu0 %v66
    %3853 = vmatpush.msra.mxu0 %v62
    %3854 = vmatpush.msra.mxu0 %v58
    %3855 = vmatpush.msra.mxu0 %v54
    %3856 = vmatpush.msra.mxu0 %v50
    %3857 = vmatpush.msra.mxu0 %v46
    %3858 = vmatpush.msra.mxu0 %v42
    %3859 = vmatmul.f32.gmra.mxu0 %v3839
    %v3860 = vpop.f32.mrf.mxu0
    %v3861 = vadd.f32 0.0, %v3860
    %3862 = vdwg.mxu0
    %3863 = vmatpush.msra.mxu0 %v103
    %3864 = vmatpush.msra.mxu0 %v99
    %3865 = vmatpush.msra.mxu0 %v95
    %3866 = vmatpush.msra.mxu0 %v91
    %3867 = vmatpush.msra.mxu0 %v87
    %3868 = vmatpush.msra.mxu0 %v83
    %3869 = vmatpush.msra.mxu0 %v79
    %3870 = vmatpush.msra.mxu0 %v75
    %3871 = vmatpush.msra.mxu0 %v71
    %3872 = vmatpush.msra.mxu0 %v67
    %3873 = vmatpush.msra.mxu0 %v63
    %3874 = vmatpush.msra.mxu0 %v59
    %3875 = vmatpush.msra.mxu0 %v55
    %3876 = vmatpush.msra.mxu0 %v51
    %3877 = vmatpush.msra.mxu0 %v47
    %3878 = vmatpush.msra.mxu0 %v43
    %3879 = vmatmul.f32.gmra.mxu0 %v3839
    %v3880 = vpop.f32.mrf.mxu0
    %v3881 = vadd.f32 0.0, %v3880
    %3882 = vdwg.mxu0
    %3883 = vmatpush.msra.mxu0 %v104
    %3884 = vmatpush.msra.mxu0 %v100
    %3885 = vmatpush.msra.mxu0 %v96
    %3886 = vmatpush.msra.mxu0 %v92
    %3887 = vmatpush.msra.mxu0 %v88
    %3888 = vmatpush.msra.mxu0 %v84
    %3889 = vmatpush.msra.mxu0 %v80
    %3890 = vmatpush.msra.mxu0 %v76
    %3891 = vmatpush.msra.mxu0 %v72
    %3892 = vmatpush.msra.mxu0 %v68
    %3893 = vmatpush.msra.mxu0 %v64
    %3894 = vmatpush.msra.mxu0 %v60
    %3895 = vmatpush.msra.mxu0 %v56
    %3896 = vmatpush.msra.mxu0 %v52
    %3897 = vmatpush.msra.mxu0 %v48
    %3898 = vmatpush.msra.mxu0 %v44
    %3899 = vmatmul.f32.gmra.mxu0 %v3839
    %v3900 = vpop.f32.mrf.mxu0
    %v3901 = vadd.f32 0.0, %v3900
    %3902 = vdwg.mxu0
    %3903 = vmatpush.msra.mxu0 %v105
    %3904 = vmatpush.msra.mxu0 %v101
    %3905 = vmatpush.msra.mxu0 %v97
    %3906 = vmatpush.msra.mxu0 %v93
    %3907 = vmatpush.msra.mxu0 %v89
    %3908 = vmatpush.msra.mxu0 %v85
    %3909 = vmatpush.msra.mxu0 %v81
    %3910 = vmatpush.msra.mxu0 %v77
    %3911 = vmatpush.msra.mxu0 %v73
    %3912 = vmatpush.msra.mxu0 %v69
    %3913 = vmatpush.msra.mxu0 %v65
    %3914 = vmatpush.msra.mxu0 %v61
    %3915 = vmatpush.msra.mxu0 %v57
    %3916 = vmatpush.msra.mxu0 %v53
    %3917 = vmatpush.msra.mxu0 %v49
    %3918 = vmatpush.msra.mxu0 %v45
    %3919 = vmatmul.f32.gmra.mxu0 %v3839
    %v3920 = vpop.f32.mrf.mxu0
    %v3921 = vadd.f32 0.0, %v3920
    %3922 = vdwg.mxu0
    %3923 = vst [vmem:[#allocation1] ss:$2 sm:$0xff] %v40
    %s3924 = scalar_lea.vmem [#allocation1], 16
    %3925 = vst [vmem:[%s3924] ss:$2 sm:$0xff] %v41
    %v3926 = vld.sshfl [vmem:[#allocation1] sm:$0xff pattern:$0x75316420]
    %v3927 = vld.sshfl [vmem:[#allocation1 + $0x8] sm:$0xff pattern:$0x75316420]
    %v3928 = vld.sshfl [vmem:[#allocation1 + $0x10] sm:$0xff pattern:$0x75316420]
    %v3929 = vld.sshfl [vmem:[#allocation1 + $0x18] sm:$0xff pattern:$0x75316420]
    %v3931 = vsel %vm208, %v3842, 0
    %v3933 = vsel %vm212, %v3926, 0
    %v3935 = vsel %vm212, %v3927, 0
    %v3937 = vsel %vm212, %v3928, 0
    %v3939 = vsel %vm212, %v3929, 0
    %3941 = vmatpush.msra.mxu0 0.0
    %3942 = vmatpush.msra.mxu0 0.0
    %3943 = vmatpush.msra.mxu0 0.0
    %3944 = vmatpush.msra.mxu0 0.0
    %3945 = vmatpush.msra.mxu0 0.0
    %3946 = vmatpush.msra.mxu0 0.0
    %3947 = vmatpush.msra.mxu0 0.0
    %3948 = vmatpush.msra.mxu0 0.0
    %3949 = vmatpush.msra.mxu0 0.0
    %3950 = vmatpush.msra.mxu0 0.0
    %3951 = vmatpush.msra.mxu0 0.0
    %3952 = vmatpush.msra.mxu0 0.0
    %3953 = vmatpush.msra.mxu0 0.0
    %3954 = vmatpush.msra.mxu0 0.0
    %3955 = vmatpush.msra.mxu0 0.0
    %3956 = vmatpush.msra.mxu0 %v3933
    %3957 = vmatmul.f32.gmra.mxu0 %v3931
    %v3958 = vpop.f32.mrf.mxu0
    %v3959 = vadd.f32 %v108, %v3958
    %3960 = vdwg.mxu0
    %3961 = vmatpush.msra.mxu0 0.0
    %3962 = vmatpush.msra.mxu0 0.0
    %3963 = vmatpush.msra.mxu0 0.0
    %3964 = vmatpush.msra.mxu0 0.0
    %3965 = vmatpush.msra.mxu0 0.0
    %3966 = vmatpush.msra.mxu0 0.0
    %3967 = vmatpush.msra.mxu0 0.0
    %3968 = vmatpush.msra.mxu0 0.0
    %3969 = vmatpush.msra.mxu0 0.0
    %3970 = vmatpush.msra.mxu0 0.0
    %3971 = vmatpush.msra.mxu0 0.0
    %3972 = vmatpush.msra.mxu0 0.0
    %3973 = vmatpush.msra.mxu0 0.0
    %3974 = vmatpush.msra.mxu0 0.0
    %3975 = vmatpush.msra.mxu0 0.0
    %3976 = vmatpush.msra.mxu0 %v3935
    %3977 = vmatmul.f32.gmra.mxu0 %v3931
    %v3978 = vpop.f32.mrf.mxu0
    %v3979 = vadd.f32 %v109, %v3978
    %3980 = vdwg.mxu0
    %3981 = vmatpush.msra.mxu0 0.0
    %3982 = vmatpush.msra.mxu0 0.0
    %3983 = vmatpush.msra.mxu0 0.0
    %3984 = vmatpush.msra.mxu0 0.0
    %3985 = vmatpush.msra.mxu0 0.0
    %3986 = vmatpush.msra.mxu0 0.0
    %3987 = vmatpush.msra.mxu0 0.0
    %3988 = vmatpush.msra.mxu0 0.0
    %3989 = vmatpush.msra.mxu0 0.0
    %3990 = vmatpush.msra.mxu0 0.0
    %3991 = vmatpush.msra.mxu0 0.0
    %3992 = vmatpush.msra.mxu0 0.0
    %3993 = vmatpush.msra.mxu0 0.0
    %3994 = vmatpush.msra.mxu0 0.0
    %3995 = vmatpush.msra.mxu0 0.0
    %3996 = vmatpush.msra.mxu0 %v3937
    %3997 = vmatmul.f32.gmra.mxu0 %v3931
    %v3998 = vpop.f32.mrf.mxu0
    %v3999 = vadd.f32 %v110, %v3998
    %4000 = vdwg.mxu0
    %4001 = vmatpush.msra.mxu0 0.0
    %4002 = vmatpush.msra.mxu0 0.0
    %4003 = vmatpush.msra.mxu0 0.0
    %4004 = vmatpush.msra.mxu0 0.0
    %4005 = vmatpush.msra.mxu0 0.0
    %4006 = vmatpush.msra.mxu0 0.0
    %4007 = vmatpush.msra.mxu0 0.0
    %4008 = vmatpush.msra.mxu0 0.0
    %4009 = vmatpush.msra.mxu0 0.0
    %4010 = vmatpush.msra.mxu0 0.0
    %4011 = vmatpush.msra.mxu0 0.0
    %4012 = vmatpush.msra.mxu0 0.0
    %4013 = vmatpush.msra.mxu0 0.0
    %4014 = vmatpush.msra.mxu0 0.0
    %4015 = vmatpush.msra.mxu0 0.0
    %4016 = vmatpush.msra.mxu0 %v3939
    %4017 = vmatmul.f32.gmra.mxu0 %v3931
    %v4018 = vpop.f32.mrf.mxu0
    %v4019 = vadd.f32 %v111, %v4018
    %4020 = vdwg.mxu0
    %v4021 = vadd.f32 %v3959, %v3861
    %v4022 = vadd.f32 %v3979, %v3881
    %v4023 = vadd.f32 %v3999, %v3901
    %v4024 = vadd.f32 %v4019, %v3921
    %v4025 = vsub.f32 0.0, %v4021
    %v4026 = vsub.f32 0.0, %v4022
    %v4027 = vsub.f32 0.0, %v4023
    %v4028 = vmul.f32 %v4025, 1.442695
    %v4029 = vpow.pop %v4028
    %v4030 = vmul.f32 %v4026, 1.442695
    %v4031 = vpow.pop %v4030
    %v4032 = vmul.f32 %v4027, 1.442695
    %v4033 = vpow.pop %v4032
    %v4034 = vadd.f32 %v4029, 1.0
    %v4035 = vadd.f32 %v4031, 1.0
    %v4036 = vadd.f32 %v4033, 1.0
    %v4037 = vrcp.pop %v4034
    %v4038 = vmul.f32 %v4034, %v4037
    %v4039 = vsub.f32 1.0, %v4038
    %v4040 = vmul.f32 %v4037, %v4039
    %v4041 = vadd.f32 %v4037, %v4040
    %vm4042 = vweird.f32 %v4034
    %vm4043 = vweird.f32 %v4037
    %vm4044 = vmor %vm4042, %vm4043
    %v4045 = vsel %vm4044, %v4037, %v4041
    %v4046 = vand.u32 2147483647, %v4034
    %vm4047 = vcmp.eq.f32.partialorder %v4046, 8.507059e+37
    %v4048 = vand.u32 %v4034, 2147483648
    %v4049 = vor.u32 1.1754944e-38, %v4048
    %v4050 = vsel %vm4047, %v4049, %v4045
    %v4051 = vmul.f32 1.0, %v4050
    %v4052 = vrcp.pop %v4035
    %v4053 = vmul.f32 %v4035, %v4052
    %v4054 = vsub.f32 1.0, %v4053
    %v4055 = vmul.f32 %v4052, %v4054
    %v4056 = vadd.f32 %v4052, %v4055
    %vm4057 = vweird.f32 %v4035
    %vm4058 = vweird.f32 %v4052
    %vm4059 = vmor %vm4057, %vm4058
    %v4060 = vsel %vm4059, %v4052, %v4056
    %v4061 = vand.u32 2147483647, %v4035
    %vm4062 = vcmp.eq.f32.partialorder %v4061, 8.507059e+37
    %v4063 = vand.u32 %v4035, 2147483648
    %v4064 = vor.u32 1.1754944e-38, %v4063
    %v4065 = vsel %vm4062, %v4064, %v4060
    %v4066 = vmul.f32 1.0, %v4065
    %v4067 = vrcp.pop %v4036
    %v4068 = vmul.f32 %v4036, %v4067
    %v4069 = vsub.f32 1.0, %v4068
    %v4070 = vmul.f32 %v4067, %v4069
    %v4071 = vadd.f32 %v4067, %v4070
    %vm4072 = vweird.f32 %v4036
    %vm4073 = vweird.f32 %v4067
    %vm4074 = vmor %vm4072, %vm4073
    %v4075 = vsel %vm4074, %v4067, %v4071
    %v4076 = vand.u32 2147483647, %v4036
    %vm4077 = vcmp.eq.f32.partialorder %v4076, 8.507059e+37
    %v4078 = vand.u32 %v4036, 2147483648
    %v4079 = vor.u32 1.1754944e-38, %v4078
    %v4080 = vsel %vm4077, %v4079, %v4075
    %v4081 = vmul.f32 1.0, %v4080
    %v4082 = vtanh.pop %v4024
    %v4083 = vmul.f32 %v4066, %v3837
    %v4084 = vmul.f32 %v4051, %v4082
    %v4085 = vadd.f32 %v4083, %v4084
    %v4086 = vtanh.pop %v4085
    %v4087 = vmul.f32 %v4081, %v4086
    %4088 = vst [vmem:[#allocation7 + $0x78] sm:$0xff] %v4087
    %4089 = vst [vmem:[#allocation2] sm:$0xff] %v4087
    %4090 = vst [vmem:[#allocation3] sm:$0xff] %v4085
    // Predicated region
    $region26: #{tpu_custom_call.1} parent=1 // pred_check
      _
    $region27: #{tpu_custom_call.1} parent=1 // pred_check_branch
      %4092 = sbr.rel (0) target = $region29
    $region28: #{tpu_custom_call.1} parent=1 // pred_region
      %4094 = vsyncadd [#allocation6], 0
      %s4096 = sshll.u32 [#allocation7], 4
      %s4097 = int_to_ptr.vmem [resolvable:$true] %s4096
      %s4098 = sshll.u32 %s4, 4
      %s4099 = int_to_ptr.hbm [resolvable:$true] %s4098
      %4101 = dma.vmem_to_hbm [thread:$0]  %s4097, 2048, %s4099, [#allocation6]
    $region29: #{tpu_custom_call.1} parent=1 // pred_fallthru
      _
    // Predicated region
    $region30: #{tpu_custom_call.1} parent=1 // pred_check
      _
    $region31: #{tpu_custom_call.1} parent=1 // pred_check_branch
      %4103 = sbr.rel (0) target = $region33
    $region32: #{tpu_custom_call.1} parent=1 // pred_region
      %4105 = dma.done [#allocation6], 2048
    $region33: #{tpu_custom_call.1} parent=1 // pred_fallthru
      _
    %4106 = vsyncpa [#allocation5], 1
    %4107 = vsyncpa [#allocation6], 1

</llo_original>
